<compile_context>
chip_gen: v6e
topology: v6e:2x2x1
jax: 0.10.0
libtpu: 0.0.40
codegen_flags: <defaults>
</compile_context>

<pallas_src>
import jax
import jax.numpy as jnp
from jax.experimental import pallas as pl
from jax.experimental.pallas import tpu as pltpu

EPS = 1e-5
_NEG_BIG = -1e30            # additive mask for non-member / padded nodes (h is ReLU'd >= 0)
_VMEM_LIMIT_BYTES = 48 * 1024 * 1024   # above the 16/32 MiB defaults, below v7x's 64 MiB


def _round_up(v, m):
    return ((v + m - 1) // m) * m


def _pad2(a, shape):
    return jnp.pad(a, [(0, s - d) for d, s in zip(a.shape, shape)])


def _dense_normalized_adjacency(edge_index, n):
    a = jnp.zeros((n, n), jnp.float32).at[edge_index[1], edge_index[0]].set(1.0)
    a = a + jnp.eye(n, dtype=jnp.float32)
    deg = a.sum(axis=1)
    dinv = jax.lax.rsqrt(deg)
    return dinv[:, None] * a * dinv[None, :]


# ------------------------------- kernels ------------------------------------

def instance_norm_kernel(x_ref, bm_ref, cnt_ref, gamma_ref, beta_ref, o_ref):
    """Per-graph InstanceNorm(1, affine); gamma/beta are SMEM scalars."""
    f32 = jnp.float32
    x = x_ref[...]                          # [N, F]
    bm = bm_ref[...]                        # [Gp, N] one-hot membership
    inv_cnt = 1.0 / cnt_ref[...]            # [Gp, 1]
    mean_g = jnp.dot(bm, x, preferred_element_type=f32) * inv_cnt          # [Gp, F]
    # Scatter back to nodes: contract bm's graph axis (== bm.T @ mean_g, no bm^T operand).
    mean_n = jax.lax.dot_general(bm, mean_g, (((0,), (0,)), ((), ())),
                                 preferred_element_type=f32)               # [N, F]
    xc = x - mean_n
    var_g = jnp.dot(bm, xc * xc, preferred_element_type=f32) * inv_cnt     # [Gp, F]
    var_n = jax.lax.dot_general(bm, var_g, (((0,), (0,)), ((), ())),
                                preferred_element_type=f32)                # [N, F]
    xn = xc * jax.lax.rsqrt(var_n + EPS)
    o_ref[...] = xn * gamma_ref[0, 0] + beta_ref[0, 0]


def feature_matmul_kernel(h_ref, w_ref, o_ref):
    """Z = H @ W on a row tile of nodes (feature dims are lane-padded to 128)."""
    o_ref[...] = jnp.dot(h_ref[...], w_ref[...],
                         preferred_element_type=jnp.float32).astype(o_ref.dtype)


def gcn_aggregate_kernel(a_ref, z_ref, b_ref, o_ref, acc_ref):
    """relu(A_norm @ Z + b), tiled (node-row, node-col), f32 VMEM accumulator."""
    @pl.when(pl.program_id(1) == 0)
    def _init():
        acc_ref[...] = jnp.zeros_like(acc_ref)

    acc_ref[...] += jnp.dot(a_ref[...], z_ref[...],
                            preferred_element_type=jnp.float32)

    @pl.when(pl.program_id(1) == pl.num_programs(1) - 1)
    def _finalize():
        o_ref[...] = jnp.maximum(acc_ref[...] + b_ref[...], 0.0)


def pool_mlp_kernel(mask_ref, h_ref, wl1_ref, bl1_ref, wl2_ref, bl2_ref, o_ref):
    """Per-graph max pool (2-D additive -BIG node mask) + Linear -> ReLU -> Linear."""
    f32 = jnp.float32
    neg = mask_ref[...].reshape(h_ref.shape[0], 1)            # [N, 1]: 0 member, -BIG else
    pooled = jnp.max(h_ref[...] + neg, axis=0, keepdims=True)                # [1, C3]
    z = jnp.maximum(
        jnp.dot(pooled, wl1_ref[...], preferred_element_type=f32) + bl1_ref[...], 0.0)
    row = jnp.dot(z, wl2_ref[...], preferred_element_type=f32) + bl2_ref[...]  # [1, Tp]
    o_ref[...] = row[None]                                                     # [1, 1, Tp]


# --------------------------- pallas_call wrappers ----------------------------

def _instance_norm(x, bm, cnt, gamma, beta):
    # Gridless: the norm is O(N*F) and tiny next to the [N,N] aggregation matmuls.
    return pl.pallas_call(
        instance_norm_kernel,
        out_shape=jax.ShapeDtypeStruct(x.shape, jnp.float32),
        in_specs=[
            pl.BlockSpec(memory_space=pltpu.MemorySpace.VMEM),
            pl.BlockSpec(memory_space=pltpu.MemorySpace.VMEM),
            pl.BlockSpec(memory_space=pltpu.MemorySpace.VMEM),
            pl.BlockSpec(memory_space=pltpu.MemorySpace.SMEM),
            pl.BlockSpec(memory_space=pltpu.MemorySpace.SMEM),
        ],
        out_specs=pl.BlockSpec(memory_space=pltpu.MemorySpace.VMEM),
        compiler_params=pltpu.CompilerParams(vmem_limit_bytes=_VMEM_LIMIT_BYTES),
    )(x, bm, cnt, gamma, beta)


def _feature_matmul(h, w, out_dtype, *, tm):
    n, cin = h.shape
    cout = w.shape[1]
    return pl.pallas_call(
        feature_matmul_kernel,
        out_shape=jax.ShapeDtypeStruct((n, cout), out_dtype),
        grid_spec=pltpu.PrefetchScalarGridSpec(
            num_scalar_prefetch=0,
            grid=(n // tm,),
            in_specs=[pl.BlockSpec((tm, cin), lambda i: (i, 0)),
                      pl.BlockSpec((cin, cout), lambda i: (0, 0))],
            out_specs=pl.BlockSpec((tm, cout), lambda i: (i, 0)),
        ),
        compiler_params=pltpu.CompilerParams(
            dimension_semantics=("parallel",),
            vmem_limit_bytes=_VMEM_LIMIT_BYTES),
    )(h, w)


def _gcn_aggregate(a, z, b, *, tm, tk):
    n = a.shape[0]
    c = z.shape[1]
    flops = 2 * n * n * c
    bytes_accessed = (a.size * a.dtype.itemsize + z.size * z.dtype.itemsize
                      + n * c * 4 + b.size * 4)
    return pl.pallas_call(
        gcn_aggregate_kernel,
        out_shape=jax.ShapeDtypeStruct((n, c), jnp.float32),
        grid_spec=pltpu.PrefetchScalarGridSpec(
            num_scalar_prefetch=0,
            grid=(n // tm, n // tk),
            in_specs=[pl.BlockSpec((tm, tk), lambda i, k: (i, k)),
                      pl.BlockSpec((tk, c), lambda i, k: (k, 0)),
                      pl.BlockSpec((1, c), lambda i, k: (0, 0))],
            out_specs=pl.BlockSpec((tm, c), lambda i, k: (i, 0)),
            scratch_shapes=[pltpu.VMEM((tm, c), jnp.float32)],
        ),
        compiler_params=pltpu.CompilerParams(
            dimension_semantics=("parallel", "arbitrary"),
            vmem_limit_bytes=_VMEM_LIMIT_BYTES),
        cost_estimate=pl.CostEstimate(flops=flops, transcendentals=0,
                                      bytes_accessed=bytes_accessed),
    )(a, z, b)


def _pool_mlp(negmask, h, wl1, bl1, wl2, bl2):
    g = negmask.shape[0]
    n, c3 = h.shape
    c_mid = wl1.shape[1]
    t_pad = wl2.shape[1]
    return pl.pallas_call(
        pool_mlp_kernel,
        out_shape=jax.ShapeDtypeStruct((g, 1, t_pad), jnp.float32),
        grid_spec=pltpu.PrefetchScalarGridSpec(
            num_scalar_prefetch=0,
            grid=(g,),
            in_specs=[pl.BlockSpec((1, n, 1), lambda i: (i, 0, 0)),
                      pl.BlockSpec((n, c3), lambda i: (0, 0)),
                      pl.BlockSpec((c3, c_mid), lambda i: (0, 0)),
                      pl.BlockSpec((1, c_mid), lambda i: (0, 0)),
                      pl.BlockSpec((c_mid, t_pad), lambda i: (0, 0)),
                      pl.BlockSpec((1, t_pad), lambda i: (0, 0))],
            out_specs=pl.BlockSpec((1, 1, t_pad), lambda i: (i, 0, 0)),
        ),
        compiler_params=pltpu.CompilerParams(
            dimension_semantics=("parallel",),
            vmem_limit_bytes=_VMEM_LIMIT_BYTES),
    )(negmask, h, wl1, bl1, wl2, bl2)


# ------------------------------- forward ------------------------------------

def fingerprints_forward(x, edge_index, batch, params, num_graphs, *,
                         use_bf16=True, node_tile=128):
    (gamma, beta, w1, b1, w2, b2, w3, b3, wl1, bl1, wl2, bl2) = params
    f32 = jnp.float32
    agg_dtype = jnp.bfloat16 if use_bf16 else f32

    n, f = x.shape
    g = num_graphs
    t = wl2.shape[1]
    n_pad = _round_up(max(n, node_tile), node_tile)
    f_pad = _round_up(f, 128)
    g_pad = _round_up(g, 8)
    t_pad = _round_up(t, 128)

    # ---- plain-JAX glue: adjacency, membership, padding ---------------------
    a_norm = _dense_normalized_adjacency(edge_index, n)
    a_norm = _pad2(a_norm, (n_pad, n_pad)).astype(agg_dtype)

    x_pad = _pad2(x.astype(f32), (n_pad, f_pad))

    batch_pad = jnp.concatenate(
        [batch, jnp.full((n_pad - n,), -1, batch.dtype)])
    bm = (batch_pad[None, :] == jnp.arange(g_pad)[:, None]).astype(f32)   # [Gp, Np]
    cnt = jnp.maximum(bm.sum(axis=1, keepdims=True), 1.0)                 # [Gp, 1]

    # Additive pool mask [G, Np, 1]: 0 for member nodes, -BIG otherwise (incl. pad nodes).
    member = batch_pad[None, :] == jnp.arange(g)[:, None]
    negmask = jnp.where(member, 0.0, _NEG_BIG).astype(f32)[:, :, None]

    # Lane-pad all feature dims to multiples of 128 (zero rows/cols are exact no-ops).
    w1p = _pad2(w1, (f_pad, _round_up(w1.shape[1], 128)))
    b1p = _pad2(b1, (1, w1p.shape[1]))
    w2p = _pad2(w2, (w1p.shape[1], _round_up(w2.shape[1], 128)))
    b2p = _pad2(b2, (1, w2p.shape[1]))
    w3p = _pad2(w3, (w2p.shape[1], _round_up(w3.shape[1], 128)))
    b3p = _pad2(b3, (1, w3p.shape[1]))
    wl1p = _pad2(wl1, (w3p.shape[1], _round_up(wl1.shape[1], 128)))
    bl1p = _pad2(bl1, (1, wl1p.shape[1]))
    wl2p = _pad2(wl2, (wl1p.shape[1], t_pad))
    bl2p = _pad2(bl2, (1, t_pad))

    # ---- Pallas kernels ------------------------------------------------------
    xn = _instance_norm(x_pad, bm, cnt, gamma.astype(f32), beta.astype(f32))

    h = xn
    for w, b in ((w1p, b1p), (w2p, b2p), (w3p, b3p)):
        z = _feature_matmul(h, w.astype(f32), agg_dtype, tm=node_tile)     # H @ W
        h = _gcn_aggregate(a_norm, z, b.astype(f32), tm=node_tile, tk=node_tile)

    out = _pool_mlp(negmask, h, wl1p, bl1p, wl2p, bl2p)                    # [G, 1, Tp]
    return out[:, 0, :t]


# ------------------------------ reference -----------------------------------

def reference_forward(x, edge_index, batch, params, num_graphs):
    """Pure-JAX reference mirroring the PyTorch/PyG semantics (f32, exact matmuls)."""
    (gamma, beta, w1, b1, w2, b2, w3, b3, wl1, bl1, wl2, bl2) = params
    hi = jax.lax.Precision.HIGHEST
    n, f = x.shape
    g = num_graphs
    a_norm = _dense_normalized_adjacency(edge_index, n)

    cnt = jnp.maximum(jnp.zeros((g,), jnp.float32).at[batch].add(1.0), 1.0)
    mean = jnp.zeros((g, f), jnp.float32).at[batch].add(x) / cnt[:, None]
    xc = x - mean[batch]
    var = jnp.zeros((g, f), jnp.float32).at[batch].add(xc * xc) / cnt[:, None]
    xn = xc / jnp.sqrt(var[batch] + EPS) * gamma[0, 0] + beta[0, 0]

    h = xn
    for w, b in ((w1, b1), (w2, b2), (w3, b3)):
        h = jax.nn.relu(jnp.dot(a_norm, jnp.dot(h, w, precision=hi), precision=hi) + b)
    pooled = jax.ops.segment_max(h, batch, num_segments=g)
    z = jax.nn.relu(jnp.dot(pooled, wl1, precision=hi) + bl1)
    return jnp.dot(z, wl2, precision=hi) + bl2


# --------------------------------- main --------------------------------------

if __name__ == "__main__":
    # 2 chain graphs of 96 nodes each -> N=192, padded to 256 -> 2x2 aggregation grid.
    N_PER_GRAPH, G = 96, 2
    N = N_PER_GRAPH * G
    F_IN, H, T = 16, 32, 10

    key = jax.random.PRNGKey(0)
    keys = jax.random.split(key, 12)

    x = jax.random.normal(keys[0], (N, F_IN), jnp.float32)

    srcs, dsts, bvec = [], [], []
    for gi in range(G):
        base = gi * N_PER_GRAPH
        s = jnp.arange(base, base + N_PER_GRAPH - 1)
        srcs += [s, s + 1]
        dsts += [s + 1, s]
        bvec.append(jnp.full((N_PER_GRAPH,), gi, jnp.int32))
    edge_index = jnp.stack([jnp.concatenate(srcs),
                            jnp.concatenate(dsts)]).astype(jnp.int32)   # [2, E]
    batch = jnp.concatenate(bvec)

    def winit(k, shape, scale=0.1):
        return scale * jax.random.normal(k, shape, jnp.float32)

    params = (
        jnp.ones((1, 1), jnp.float32),           # InstanceNorm weight (affine)
        jnp.zeros((1, 1), jnp.float32),          # InstanceNorm bias
        winit(keys[1], (F_IN, H)), winit(keys[2], (1, H)),              # conv1
        winit(keys[3], (H, 2 * H)), winit(keys[4], (1, 2 * H)),         # conv2
        winit(keys[5], (2 * H, 4 * H)), winit(keys[6], (1, 4 * H)),     # conv3
        winit(keys[7], (4 * H, 256)), winit(keys[8], (1, 256)),         # lin[0]
        winit(keys[9], (256, T)), winit(keys[10], (1, T)),              # lin[2]
    )

    ref = reference_forward(x, edge_index, batch, params, G)

    fwd_f32 = jax.jit(lambda xx: fingerprints_forward(
        xx, edge_index, batch, params, G, use_bf16=False))
    fwd_bf16 = jax.jit(lambda xx: fingerprints_forward(
        xx, edge_index, batch, params, G, use_bf16=True))

    out_f32 = jax.block_until_ready(fwd_f32(x))
    assert out_f32.shape == (G, T)
    err_f32 = float(jnp.max(jnp.abs(out_f32 - ref)))
    assert jnp.allclose(out_f32, ref, atol=5e-3, rtol=5e-3), (
        f"f32 mismatch: max abs err {err_f32}")

    # bf16 operands for A_norm / Z (f32 accumulation) -> looser tolerance vs f32 ref.
    out_bf16 = jax.block_until_ready(fwd_bf16(x))
    err_bf16 = float(jnp.max(jnp.abs(out_bf16 - ref)))
    assert jnp.allclose(out_bf16, ref, atol=8e-2, rtol=8e-2), (
        f"bf16 mismatch: max abs err {err_bf16}")

    print("KERNEL_OK")
</pallas_src>

<mosaic_0001>
module attributes {stable_mosaic.version = 11 : i64} {
  func.func @instance_norm_kernel(%arg0: memref<256x128xf32, #tpu.memory_space<vmem>>, %arg1: memref<8x256xf32, #tpu.memory_space<vmem>>, %arg2: memref<8x1xf32, #tpu.memory_space<vmem>>, %arg3: memref<1x1xf32, #tpu.memory_space<smem>>, %arg4: memref<1x1xf32, #tpu.memory_space<smem>>, %arg5: memref<256x128xf32, #tpu.memory_space<vmem>>) attributes {dimension_semantics = [], scalar_prefetch = 0 : i64, scratch_operands = 0 : i64, tpu.core_type = #tpu.core_type<tc>} {
    %c0 = arith.constant 0 : index
    %c0_0 = arith.constant 0 : index
    %0 = vector.load %arg0[%c0, %c0_0] : memref<256x128xf32, #tpu.memory_space<vmem>>, vector<256x128xf32>
    %c0_1 = arith.constant 0 : index
    %c0_2 = arith.constant 0 : index
    %1 = vector.load %arg1[%c0_1, %c0_2] : memref<8x256xf32, #tpu.memory_space<vmem>>, vector<8x256xf32>
    %c0_3 = arith.constant 0 : index
    %c0_4 = arith.constant 0 : index
    %2 = vector.load %arg2[%c0_3, %c0_4] : memref<8x1xf32, #tpu.memory_space<vmem>>, vector<8x1xf32>
    %cst = arith.constant 1.000000e+00 : f32
    %3 = vector.broadcast %cst : f32 to vector<8x1xf32>
    %4 = arith.divf %3, %2 : vector<8x1xf32>
    %cst_5 = arith.constant dense<0.000000e+00> : vector<8x128xf32>
    %5 = tpu.matmul %1, %0, %cst_5 {dimension_numbers = #tpu.dot_dimension_numbers<[1], [0], [0], [1], [0, 0, 1, 1], [], []>} : vector<8x256xf32>, vector<256x128xf32>, vector<8x128xf32> -> vector<8x128xf32>
    %6 = vector.broadcast %4 : vector<8x1xf32> to vector<8x128xf32>
    %7 = arith.mulf %5, %6 : vector<8x128xf32>
    %cst_6 = arith.constant dense<0.000000e+00> : vector<256x128xf32>
    %8 = tpu.matmul %1, %7, %cst_6 {dimension_numbers = #tpu.dot_dimension_numbers<[0], [0], [1], [1], [0, 1, 1, 1], [], []>} : vector<8x256xf32>, vector<8x128xf32>, vector<256x128xf32> -> vector<256x128xf32>
    %9 = arith.subf %0, %8 : vector<256x128xf32>
    %10 = arith.mulf %9, %9 : vector<256x128xf32>
    %cst_7 = arith.constant dense<0.000000e+00> : vector<8x128xf32>
    %11 = tpu.matmul %1, %10, %cst_7 {dimension_numbers = #tpu.dot_dimension_numbers<[1], [0], [0], [1], [0, 0, 1, 1], [], []>} : vector<8x256xf32>, vector<256x128xf32>, vector<8x128xf32> -> vector<8x128xf32>
    %12 = vector.broadcast %4 : vector<8x1xf32> to vector<8x128xf32>
    %13 = arith.mulf %11, %12 : vector<8x128xf32>
    %cst_8 = arith.constant dense<0.000000e+00> : vector<256x128xf32>
    %14 = tpu.matmul %1, %13, %cst_8 {dimension_numbers = #tpu.dot_dimension_numbers<[0], [0], [1], [1], [0, 1, 1, 1], [], []>} : vector<8x256xf32>, vector<8x128xf32>, vector<256x128xf32> -> vector<256x128xf32>
    %cst_9 = arith.constant 9.99999974E-6 : f32
    %15 = vector.broadcast %cst_9 : f32 to vector<256x128xf32>
    %16 = arith.addf %14, %15 : vector<256x128xf32>
    %17 = math.rsqrt %16 : vector<256x128xf32>
    %18 = arith.mulf %9, %17 : vector<256x128xf32>
    %c0_10 = arith.constant 0 : index
    %c0_11 = arith.constant 0 : index
    %19 = memref.load %arg3[%c0_10, %c0_11] : memref<1x1xf32, #tpu.memory_space<smem>>
    %20 = vector.broadcast %19 : f32 to vector<256x128xf32>
    %21 = arith.mulf %18, %20 : vector<256x128xf32>
    %c0_12 = arith.constant 0 : index
    %c0_13 = arith.constant 0 : index
    %22 = memref.load %arg4[%c0_12, %c0_13] : memref<1x1xf32, #tpu.memory_space<smem>>
    %23 = vector.broadcast %22 : f32 to vector<256x128xf32>
    %24 = arith.addf %21, %23 : vector<256x128xf32>
    %c0_14 = arith.constant 0 : index
    %c0_15 = arith.constant 0 : index
    %25 = vector.load %arg5[%c0_14, %c0_15] : memref<256x128xf32, #tpu.memory_space<vmem>>, vector<256x128xf32>
    tpu.vector_store %arg5[%c0_14, %c0_15], %24 {strides = array<i32>} : memref<256x128xf32, #tpu.memory_space<vmem>>, vector<256x128xf32>,
    return
  }
}

module attributes {stable_mosaic.version = 11 : i64} {
  func.func @feature_matmul_kernel(%arg0: i32, %arg1: memref<128x128xf32, #tpu.memory_space<vmem>>, %arg2: memref<128x128xf32, #tpu.memory_space<vmem>>, %arg3: memref<128x128xf32, #tpu.memory_space<vmem>>) attributes {dimension_semantics = [#tpu.dimension_semantics<parallel>], iteration_bounds = array<i64: 2>, scalar_prefetch = 0 : i64, scratch_operands = 0 : i64, tpu.core_type = #tpu.core_type<tc>, window_params = [{transform_indices = @transform_0, window_bounds = array<i64: 128, 128>}, {pipeline_mode = #tpu.pipeline_mode<synchronous>, transform_indices = @transform_1, window_bounds = array<i64: 128, 128>}, {transform_indices = @transform_2, window_bounds = array<i64: 128, 128>}]} {
    %c0 = arith.constant 0 : index
    %c0_0 = arith.constant 0 : index
    %0 = vector.load %arg1[%c0, %c0_0] : memref<128x128xf32, #tpu.memory_space<vmem>>, vector<128x128xf32>
    %c0_1 = arith.constant 0 : index
    %c0_2 = arith.constant 0 : index
    %1 = vector.load %arg2[%c0_1, %c0_2] : memref<128x128xf32, #tpu.memory_space<vmem>>, vector<128x128xf32>
    %cst = arith.constant dense<0.000000e+00> : vector<128x128xf32>
    %2 = tpu.matmul %0, %1, %cst {dimension_numbers = #tpu.dot_dimension_numbers<[1], [0], [0], [1], [0, 0, 1, 1], [], []>} : vector<128x128xf32>, vector<128x128xf32>, vector<128x128xf32> -> vector<128x128xf32>
    %c0_3 = arith.constant 0 : index
    %c0_4 = arith.constant 0 : index
    %3 = vector.load %arg3[%c0_3, %c0_4] : memref<128x128xf32, #tpu.memory_space<vmem>>, vector<128x128xf32>
    tpu.vector_store %arg3[%c0_3, %c0_4], %2 {strides = array<i32>} : memref<128x128xf32, #tpu.memory_space<vmem>>, vector<128x128xf32>,
    return
  }
  func.func @transform_0(%arg0: i32) -> (i32, i32) {
    %c0_i32 = arith.constant 0 : i32
    %c0_i32_0 = arith.constant 0 : i32
    return %arg0, %c0_i32 : i32, i32
  }
  func.func @transform_1(%arg0: i32) -> (i32, i32) {
    %c0_i32 = arith.constant 0 : i32
    %c0_i32_0 = arith.constant 0 : i32
    %c0_i32_1 = arith.constant 0 : i32
    return %c0_i32, %c0_i32_0 : i32, i32
  }
  func.func @transform_2(%arg0: i32) -> (i32, i32) {
    %c0_i32 = arith.constant 0 : i32
    %c0_i32_0 = arith.constant 0 : i32
    return %arg0, %c0_i32 : i32, i32
  }
}

module attributes {stable_mosaic.version = 11 : i64} {
  func.func @gcn_aggregate_kernel(%arg0: i32, %arg1: i32, %arg2: memref<128x128xf32, #tpu.memory_space<vmem>>, %arg3: memref<128x128xf32, #tpu.memory_space<vmem>>, %arg4: memref<1x128xf32, #tpu.memory_space<vmem>>, %arg5: memref<128x128xf32, #tpu.memory_space<vmem>>, %arg6: memref<128x128xf32, #tpu.memory_space<vmem>>) attributes {dimension_semantics = [#tpu.dimension_semantics<parallel>, #tpu.dimension_semantics<arbitrary>], iteration_bounds = array<i64: 2, 2>, scalar_prefetch = 0 : i64, scratch_operands = 1 : i64, tpu.core_type = #tpu.core_type<tc>, window_params = [{transform_indices = @transform_0, window_bounds = array<i64: 128, 128>}, {transform_indices = @transform_1, window_bounds = array<i64: 128, 128>}, {pipeline_mode = #tpu.pipeline_mode<synchronous>, transform_indices = @transform_2, window_bounds = array<i64: 1, 128>}, {transform_indices = @transform_3, window_bounds = array<i64: 128, 128>}]} {
    %c0_i32 = arith.constant 0 : i32
    %0 = arith.cmpi eq, %arg1, %c0_i32 : i32
    %1 = arith.extui %0 : i1 to i32
    %c0_i32_0 = arith.constant 0 : i32
    %2 = arith.cmpi ne, %1, %c0_i32_0 : i32
    scf.if %2 {
      %cst_9 = arith.constant 0.000000e+00 : f32
      %12 = vector.broadcast %cst_9 : f32 to vector<128x128xf32>
      %c0_10 = arith.constant 0 : index
      %c0_11 = arith.constant 0 : index
      %13 = vector.load %arg6[%c0_10, %c0_11] : memref<128x128xf32, #tpu.memory_space<vmem>>, vector<128x128xf32>
      tpu.vector_store %arg6[%c0_10, %c0_11], %12 {strides = array<i32>} : memref<128x128xf32, #tpu.memory_space<vmem>>, vector<128x128xf32>,
    } else {
    }
    %c0 = arith.constant 0 : index
    %c0_1 = arith.constant 0 : index
    %3 = vector.load %arg6[%c0, %c0_1] : memref<128x128xf32, #tpu.memory_space<vmem>>, vector<128x128xf32>
    %c0_2 = arith.constant 0 : index
    %c0_3 = arith.constant 0 : index
    %4 = vector.load %arg2[%c0_2, %c0_3] : memref<128x128xf32, #tpu.memory_space<vmem>>, vector<128x128xf32>
    %c0_4 = arith.constant 0 : index
    %c0_5 = arith.constant 0 : index
    %5 = vector.load %arg3[%c0_4, %c0_5] : memref<128x128xf32, #tpu.memory_space<vmem>>, vector<128x128xf32>
    %cst = arith.constant dense<0.000000e+00> : vector<128x128xf32>
    %6 = tpu.matmul %4, %5, %cst {dimension_numbers = #tpu.dot_dimension_numbers<[1], [0], [0], [1], [0, 0, 1, 1], [], []>} : vector<128x128xf32>, vector<128x128xf32>, vector<128x128xf32> -> vector<128x128xf32>
    %7 = arith.addf %3, %6 : vector<128x128xf32>
    %c0_6 = arith.constant 0 : index
    %c0_7 = arith.constant 0 : index
    %8 = vector.load %arg6[%c0_6, %c0_7] : memref<128x128xf32, #tpu.memory_space<vmem>>, vector<128x128xf32>
    tpu.vector_store %arg6[%c0_6, %c0_7], %7 {strides = array<i32>} : memref<128x128xf32, #tpu.memory_space<vmem>>, vector<128x128xf32>,
    %c1_i32 = arith.constant 1 : i32
    %9 = arith.cmpi eq, %arg1, %c1_i32 : i32
    %10 = arith.extui %9 : i1 to i32
    %c0_i32_8 = arith.constant 0 : i32
    %11 = arith.cmpi ne, %10, %c0_i32_8 : i32
    scf.if %11 {
      %c0_9 = arith.constant 0 : index
      %c0_10 = arith.constant 0 : index
      %12 = vector.load %arg6[%c0_9, %c0_10] : memref<128x128xf32, #tpu.memory_space<vmem>>, vector<128x128xf32>
      %c0_11 = arith.constant 0 : index
      %c0_12 = arith.constant 0 : index
      %13 = vector.load %arg4[%c0_11, %c0_12] : memref<1x128xf32, #tpu.memory_space<vmem>>, vector<1x128xf32>
      %14 = vector.broadcast %13 : vector<1x128xf32> to vector<128x128xf32>
      %15 = arith.addf %12, %14 : vector<128x128xf32>
      %cst_13 = arith.constant 0.000000e+00 : f32
      %16 = vector.broadcast %cst_13 : f32 to vector<128x128xf32>
      %17 = arith.maximumf %15, %16 : vector<128x128xf32>
      %c0_14 = arith.constant 0 : index
      %c0_15 = arith.constant 0 : index
      %18 = vector.load %arg5[%c0_14, %c0_15] : memref<128x128xf32, #tpu.memory_space<vmem>>, vector<128x128xf32>
      tpu.vector_store %arg5[%c0_14, %c0_15], %17 {strides = array<i32>} : memref<128x128xf32, #tpu.memory_space<vmem>>, vector<128x128xf32>,
    } else {
    }
    return
  }
  func.func @transform_0(%arg0: i32, %arg1: i32) -> (i32, i32) {
    %c0_i32 = arith.constant 0 : i32
    return %arg0, %arg1 : i32, i32
  }
  func.func @transform_1(%arg0: i32, %arg1: i32) -> (i32, i32) {
    %c0_i32 = arith.constant 0 : i32
    %c0_i32_0 = arith.constant 0 : i32
    return %arg1, %c0_i32 : i32, i32
  }
  func.func @transform_2(%arg0: i32, %arg1: i32) -> (i32, i32) {
    %c0_i32 = arith.constant 0 : i32
    %c0_i32_0 = arith.constant 0 : i32
    %c0_i32_1 = arith.constant 0 : i32
    return %c0_i32, %c0_i32_0 : i32, i32
  }
  func.func @transform_3(%arg0: i32, %arg1: i32) -> (i32, i32) {
    %c0_i32 = arith.constant 0 : i32
    %c0_i32_0 = arith.constant 0 : i32
    return %arg0, %c0_i32 : i32, i32
  }
}

module attributes {stable_mosaic.version = 11 : i64} {
  func.func @pool_mlp_kernel(%arg0: i32, %arg1: memref<1x256x1xf32, #tpu.memory_space<vmem>>, %arg2: memref<256x128xf32, #tpu.memory_space<vmem>>, %arg3: memref<128x256xf32, #tpu.memory_space<vmem>>, %arg4: memref<1x256xf32, #tpu.memory_space<vmem>>, %arg5: memref<256x128xf32, #tpu.memory_space<vmem>>, %arg6: memref<1x128xf32, #tpu.memory_space<vmem>>, %arg7: memref<1x1x128xf32, #tpu.memory_space<vmem>>) attributes {dimension_semantics = [#tpu.dimension_semantics<parallel>], iteration_bounds = array<i64: 2>, scalar_prefetch = 0 : i64, scratch_operands = 0 : i64, tpu.core_type = #tpu.core_type<tc>, window_params = [{transform_indices = @transform_0, window_bounds = array<i64: 1, 256, 1>}, {pipeline_mode = #tpu.pipeline_mode<synchronous>, transform_indices = @transform_1, window_bounds = array<i64: 256, 128>}, {pipeline_mode = #tpu.pipeline_mode<synchronous>, transform_indices = @transform_2, window_bounds = array<i64: 128, 256>}, {pipeline_mode = #tpu.pipeline_mode<synchronous>, transform_indices = @transform_3, window_bounds = array<i64: 1, 256>}, {pipeline_mode = #tpu.pipeline_mode<synchronous>, transform_indices = @transform_4, window_bounds = array<i64: 256, 128>}, {pipeline_mode = #tpu.pipeline_mode<synchronous>, transform_indices = @transform_5, window_bounds = array<i64: 1, 128>}, {transform_indices = @transform_6, window_bounds = array<i64: 1, 1, 128>}]} {
    %c0 = arith.constant 0 : index
    %c0_0 = arith.constant 0 : index
    %c0_1 = arith.constant 0 : index
    %0 = vector.load %arg1[%c0, %c0_0, %c0_1] : memref<1x256x1xf32, #tpu.memory_space<vmem>>, vector<1x256x1xf32>
    %1 = vector.shape_cast %0 : vector<1x256x1xf32> to vector<256x1xf32>
    %c0_2 = arith.constant 0 : index
    %c0_3 = arith.constant 0 : index
    %2 = vector.load %arg2[%c0_2, %c0_3] : memref<256x128xf32, #tpu.memory_space<vmem>>, vector<256x128xf32>
    %3 = vector.broadcast %1 : vector<256x1xf32> to vector<256x128xf32>
    %4 = arith.addf %2, %3 : vector<256x128xf32>
    %cst = arith.constant dense<0xFF800000> : vector<128xf32>
    %5 = vector.multi_reduction <maximumf>, %4, %cst [0] : vector<256x128xf32> to vector<128xf32>
    %6 = vector.shape_cast %5 : vector<128xf32> to vector<1x128xf32>
    %c0_4 = arith.constant 0 : index
    %c0_5 = arith.constant 0 : index
    %7 = vector.load %arg3[%c0_4, %c0_5] : memref<128x256xf32, #tpu.memory_space<vmem>>, vector<128x256xf32>
    %cst_6 = arith.constant dense<0.000000e+00> : vector<1x256xf32>
    %8 = tpu.matmul %6, %7, %cst_6 {dimension_numbers = #tpu.dot_dimension_numbers<[1], [0], [0], [1], [0, 0, 1, 1], [], []>} : vector<1x128xf32>, vector<128x256xf32>, vector<1x256xf32> -> vector<1x256xf32>
    %c0_7 = arith.constant 0 : index
    %c0_8 = arith.constant 0 : index
    %9 = vector.load %arg4[%c0_7, %c0_8] : memref<1x256xf32, #tpu.memory_space<vmem>>, vector<1x256xf32>
    %10 = arith.addf %8, %9 : vector<1x256xf32>
    %cst_9 = arith.constant 0.000000e+00 : f32
    %11 = vector.broadcast %cst_9 : f32 to vector<1x256xf32>
    %12 = arith.maximumf %10, %11 : vector<1x256xf32>
    %c0_10 = arith.constant 0 : index
    %c0_11 = arith.constant 0 : index
    %13 = vector.load %arg5[%c0_10, %c0_11] : memref<256x128xf32, #tpu.memory_space<vmem>>, vector<256x128xf32>
    %cst_12 = arith.constant dense<0.000000e+00> : vector<1x128xf32>
    %14 = tpu.matmul %12, %13, %cst_12 {dimension_numbers = #tpu.dot_dimension_numbers<[1], [0], [0], [1], [0, 0, 1, 1], [], []>} : vector<1x256xf32>, vector<256x128xf32>, vector<1x128xf32> -> vector<1x128xf32>
    %c0_13 = arith.constant 0 : index
    %c0_14 = arith.constant 0 : index
    %15 = vector.load %arg6[%c0_13, %c0_14] : memref<1x128xf32, #tpu.memory_space<vmem>>, vector<1x128xf32>
    %16 = arith.addf %14, %15 : vector<1x128xf32>
    %17 = vector.shape_cast %16 : vector<1x128xf32> to vector<1x1x128xf32>
    %c0_15 = arith.constant 0 : index
    %c0_16 = arith.constant 0 : index
    %c0_17 = arith.constant 0 : index
    %18 = vector.load %arg7[%c0_15, %c0_16, %c0_17] : memref<1x1x128xf32, #tpu.memory_space<vmem>>, vector<1x1x128xf32>
    tpu.vector_store %arg7[%c0_15, %c0_16, %c0_17], %17 {strides = array<i32>} : memref<1x1x128xf32, #tpu.memory_space<vmem>>, vector<1x1x128xf32>,
    return
  }
  func.func @transform_0(%arg0: i32) -> (i32, i32, i32) {
    %c0_i32 = arith.constant 0 : i32
    %c0_i32_0 = arith.constant 0 : i32
    %c0_i32_1 = arith.constant 0 : i32
    return %arg0, %c0_i32, %c0_i32_0 : i32, i32, i32
  }
  func.func @transform_1(%arg0: i32) -> (i32, i32) {
    %c0_i32 = arith.constant 0 : i32
    %c0_i32_0 = arith.constant 0 : i32
    %c0_i32_1 = arith.constant 0 : i32
    return %c0_i32, %c0_i32_0 : i32, i32
  }
  func.func @transform_2(%arg0: i32) -> (i32, i32) {
    %c0_i32 = arith.constant 0 : i32
    %c0_i32_0 = arith.constant 0 : i32
    %c0_i32_1 = arith.constant 0 : i32
    return %c0_i32, %c0_i32_0 : i32, i32
  }
  func.func @transform_3(%arg0: i32) -> (i32, i32) {
    %c0_i32 = arith.constant 0 : i32
    %c0_i32_0 = arith.constant 0 : i32
    %c0_i32_1 = arith.constant 0 : i32
    return %c0_i32, %c0_i32_0 : i32, i32
  }
  func.func @transform_4(%arg0: i32) -> (i32, i32) {
    %c0_i32 = arith.constant 0 : i32
    %c0_i32_0 = arith.constant 0 : i32
    %c0_i32_1 = arith.constant 0 : i32
    return %c0_i32, %c0_i32_0 : i32, i32
  }
  func.func @transform_5(%arg0: i32) -> (i32, i32) {
    %c0_i32 = arith.constant 0 : i32
    %c0_i32_0 = arith.constant 0 : i32
    %c0_i32_1 = arith.constant 0 : i32
    return %c0_i32, %c0_i32_0 : i32, i32
  }
  func.func @transform_6(%arg0: i32) -> (i32, i32, i32) {
    %c0_i32 = arith.constant 0 : i32
    %c0_i32_0 = arith.constant 0 : i32
    %c0_i32_1 = arith.constant 0 : i32
    return %arg0, %c0_i32, %c0_i32_0 : i32, i32, i32
  }
}

</mosaic_0001>

<llo_original>
// kernel: _lambda_.9
$region0: #{_lambda_.9}
  #allocation0 [shape = 'u32[]', space=smem, size = 0x4, offset = 0x4, fixed_abs, tag = 'smem constant byte address 0x4 - core index']
  #allocation1 [shape = 'u32[144,128]{1,0:T(1,128)}', space=vmem, size = 0x12000, scoped, tag = 'internal scratch']
  %s0 = inlined_call_operand.vmem [shape: f32[256,128], index: 0, kind: input, shape index: {}]
  %s1 = inlined_call_operand.vmem [shape: f32[128,128], index: 1, kind: input, shape index: {}]
  %s2 = inlined_call_operand.vmem [shape: f32[256,128], index: 2, kind: output, shape index: {}]
  %s3 = sld [smem:[#allocation0]]
  $region41: #{_lambda_.9} parent=0
    _
  %s5 = ssub.s32 1, %s3
  %s6 = scalar_select 0, %s5, %s3
  loop: start=0, step=1, limit=4
  $region2: #{_lambda_.9} parent=0 // loop_pre_header
    _
  $region3: #{_lambda_.9} parent=0 // loop_header
    %s8 = sphi 0, %s12
    %p9 = scmp.ge.s32.totalorder %s8, 4
    %s18 = sphi 0, %s20
    %s21 = sphi 0, %s18
    %s22 = sphi 0, %s21
    %s38 = sphi 0, %s22
    %s42 = sphi 0, %s42
    %s44 = sphi 0, %s42
    %s45 = sphi 0, %s44
    %s59 = sphi 0, %s45
    %s65 = sphi 0, %s67
    %s68 = sphi 0, %s65
    %s69 = sphi 0, %s68
    %s85 = sphi 0, %s69
  $region4: #{_lambda_.9} parent=0 // loop_header_branch
    %11 = sbr.rel (%p9) target = $region8
  $region5: #{_lambda_.9} parent=0 // loop_body
    %s13 = ssub.s32 %s8, 1
    %s14 = ssub.s32 %s8, 2
    %s15 = sadd.s32 %s8, 1
    %s16 = ssub.s32 %s8, %s15
    %p17 = scmp.eq.s32.totalorder %s16, 0
    %s19 = sadd.s32 %s18, 1
    %s20 = scalar_select %p17, %s18, %s19
    %p23 = pneg %p17
    %p24 = scmp.eq.s32.totalorder %s8, 1
    %p25 = por %p23, %p24
    %p26 = scmp.ne.s32.totalorder %s18, %s21
    %p27 = scmp.eq.s32.totalorder %s8, 0
    %p28 = por %p26, %p27
    %p29 = scmp.ne.s32.totalorder %s18, %s21
    %p30 = scmp.eq.s32.totalorder %s13, 1
    %p31 = por %p29, %p30
    %p32 = scmp.ne.s32.totalorder %s21, %s22
    %p33 = scmp.eq.s32.totalorder %s13, 0
    %p34 = por %p32, %p33
    %p35 = scmp.ne.s32.totalorder %s21, %s22
    %p36 = scmp.eq.s32.totalorder %s14, 1
    %p37 = por %p35, %p36
    %p39 = scmp.ne.s32.totalorder %s22, %s38
    %p40 = scmp.eq.s32.totalorder %s14, 0
    %p41 = por %p39, %p40
    %s43 = sadd.s32 %s42, 1
    %p46 = scmp.eq.s32.totalorder %s8, 1
    %p47 = scmp.ne.s32.totalorder %s42, %s44
    %p48 = scmp.eq.s32.totalorder %s8, 0
    %p49 = por %p47, %p48
    %p50 = scmp.ne.s32.totalorder %s42, %s44
    %p51 = scmp.eq.s32.totalorder %s13, 1
    %p52 = por %p50, %p51
    %p53 = scmp.ne.s32.totalorder %s44, %s45
    %p54 = scmp.eq.s32.totalorder %s13, 0
    %p55 = por %p53, %p54
    %p56 = scmp.ne.s32.totalorder %s44, %s45
    %p57 = scmp.eq.s32.totalorder %s14, 1
    %p58 = por %p56, %p57
    %p60 = scmp.ne.s32.totalorder %s45, %s59
    %p61 = scmp.eq.s32.totalorder %s14, 0
    %p62 = por %p60, %p61
    %s63 = ssub.s32 %s8, %s15
    %p64 = scmp.eq.s32.totalorder %s63, 0
    %s66 = sadd.s32 %s65, 1
    %s67 = scalar_select %p64, %s65, %s66
    %p70 = pneg %p64
    %p71 = scmp.eq.s32.totalorder %s8, 1
    %p72 = por %p70, %p71
    %p73 = scmp.ne.s32.totalorder %s65, %s68
    %p74 = scmp.eq.s32.totalorder %s8, 0
    %p75 = por %p73, %p74
    %p76 = scmp.ne.s32.totalorder %s65, %s68
    %p77 = scmp.eq.s32.totalorder %s13, 1
    %p78 = por %p76, %p77
    %p79 = scmp.ne.s32.totalorder %s68, %s69
    %p80 = scmp.eq.s32.totalorder %s13, 0
    %p81 = por %p79, %p80
    %p82 = scmp.ne.s32.totalorder %s68, %s69
    %p83 = scmp.eq.s32.totalorder %s14, 1
    %p84 = por %p82, %p83
    %p86 = scmp.ne.s32.totalorder %s69, %s85
    %p87 = scmp.eq.s32.totalorder %s14, 0
    %p88 = por %p86, %p87
    %p89 = scmp.le.s32.totalorder 1, %s8
    %p90 = scmp.lt.s32.totalorder %s8, 3
    %p91 = pnand %p89, %p90
    %p92 = pneg %p91
    // Predicated region
    $region9: #{_lambda_.9} parent=5 // pred_check
      _
    $region10: #{_lambda_.9} parent=5 // pred_check_branch
      %94 = sbr.rel (%p91) target = $region12
    $region11: #{_lambda_.9} parent=5 // pred_region
      %s95 = ssub.s32 %s8, 1
      // Predicated region
      $region13: #{_lambda_.9} parent=11 // pred_check
        %p96 = pneg %p55
      $region14: #{_lambda_.9} parent=11 // pred_check_branch
        %98 = sbr.rel (%p96) target = $region16
      $region15: #{_lambda_.9} parent=11 // pred_region
        _
      $region16: #{_lambda_.9} parent=11 // pred_fallthru
        _
    $region12: #{_lambda_.9} parent=5 // pred_fallthru
      _
    %p99 = scmp.lt.s32.totalorder %s8, 2
    // Predicated region
    $region17: #{_lambda_.9} parent=5 // pred_check
      %p100 = pneg %p99
    $region18: #{_lambda_.9} parent=5 // pred_check_branch
      %102 = sbr.rel (%p100) target = $region20
    $region19: #{_lambda_.9} parent=5 // pred_region
      // Predicated region
      $region21: #{_lambda_.9} parent=19 // pred_check
        %p103 = pneg %p28
      $region22: #{_lambda_.9} parent=19 // pred_check_branch
        %105 = sbr.rel (%p103) target = $region24
      $region23: #{_lambda_.9} parent=19 // pred_region
        %s106 = smul.u32 16, %s8
        %p107 = scmp.lt.s32.totalorder %s106, 31
        %s108 = scalar_select %p107, %s106, 31
        %s109 = smul.addr %s108, 8
        %s110 = scalar_lea.vmem %s0, %s109
        %s111 = smul.u32 16, %s8
      $region24: #{_lambda_.9} parent=19 // pred_fallthru
        _
    $region20: #{_lambda_.9} parent=5 // pred_fallthru
      _
    %p112 = scmp.le.s32.totalorder 1, %s8
    %p113 = scmp.lt.s32.totalorder %s8, 3
    %p114 = pnand %p112, %p113
    %p115 = pneg %p114
    // Predicated region
    $region25: #{_lambda_.9} parent=5 // pred_check
      _
    $region26: #{_lambda_.9} parent=5 // pred_check_branch
      %117 = sbr.rel (%p114) target = $region28
    $region27: #{_lambda_.9} parent=5 // pred_region
      %s118 = ssub.s32 %s8, 1
      %s119 = smul.u32 16, %s13
      %p120 = scmp.lt.s32.totalorder %s119, 31
      %s121 = scalar_select %p120, %s119, 31
      %s122 = smul.addr %s121, 8
      %s123 = scalar_lea.vmem %s0, %s122
      %p124 = pneg %p34
      %p125 = pneg %p31
      %p126 = pneg %p55
      %p127 = pneg %p52
      %p128 = pneg %p81
      %p129 = pneg %p78
      %s130 = smul.u32 16, %s13
      %p131 = scmp.lt.s32.totalorder %s130, 31
      %s132 = scalar_select %p131, %s130, 31
      %s133 = smul.addr %s132, 8
      %s134 = scalar_lea.vmem %s2, %s133
      %s135 = smul.u32 16, %s13
      %p136 = scmp.lt.s32.totalorder %s135, 31
      %s137 = scalar_select %p136, %s135, 31
      %s138 = smul.addr %s137, 8
      %s139 = scalar_lea.vmem %s0, %s138
      %s140 = smul.u32 16, %s13
      %s141 = smul.u32 16, %s13
      %p142 = scmp.lt.s32.totalorder %s141, 31
      %s143 = scalar_select %p142, %s141, 31
      %s144 = smul.addr %s143, 8
      %s145 = scalar_lea.vmem %s2, %s144
      %s146 = smul.u32 16, %s13
      %v147 = vld [vmem:[%s139] sm:$0xff]
      %v148 = vld [vmem:[%s139 + $0x8] sm:$0xff]
      %v149 = vld [vmem:[%s139 + $0x10] sm:$0xff]
      %v150 = vld [vmem:[%s139 + $0x18] sm:$0xff]
      %v151 = vld [vmem:[%s139 + $0x20] sm:$0xff]
      %v152 = vld [vmem:[%s139 + $0x28] sm:$0xff]
      %v153 = vld [vmem:[%s139 + $0x30] sm:$0xff]
      %v154 = vld [vmem:[%s139 + $0x38] sm:$0xff]
      %v155 = vld [vmem:[%s139 + $0x40] sm:$0xff]
      %v156 = vld [vmem:[%s139 + $0x48] sm:$0xff]
      %v157 = vld [vmem:[%s139 + $0x50] sm:$0xff]
      %v158 = vld [vmem:[%s139 + $0x58] sm:$0xff]
      %v159 = vld [vmem:[%s139 + $0x60] sm:$0xff]
      %v160 = vld [vmem:[%s139 + $0x68] sm:$0xff]
      %v161 = vld [vmem:[%s139 + $0x70] sm:$0xff]
      %v162 = vld [vmem:[%s139 + $0x78] sm:$0xff]
      %v163 = vld [vmem:[%s1] sm:$0xff]
      %v164 = vld [vmem:[%s1 + $0x8] sm:$0xff]
      %v165 = vld [vmem:[%s1 + $0x10] sm:$0xff]
      %v166 = vld [vmem:[%s1 + $0x18] sm:$0xff]
      %v167 = vld [vmem:[%s1 + $0x20] sm:$0xff]
      %v168 = vld [vmem:[%s1 + $0x28] sm:$0xff]
      %v169 = vld [vmem:[%s1 + $0x30] sm:$0xff]
      %v170 = vld [vmem:[%s1 + $0x38] sm:$0xff]
      %v171 = vld [vmem:[%s1 + $0x40] sm:$0xff]
      %v172 = vld [vmem:[%s1 + $0x48] sm:$0xff]
      %v173 = vld [vmem:[%s1 + $0x50] sm:$0xff]
      %v174 = vld [vmem:[%s1 + $0x58] sm:$0xff]
      %v175 = vld [vmem:[%s1 + $0x60] sm:$0xff]
      %v176 = vld [vmem:[%s1 + $0x68] sm:$0xff]
      %v177 = vld [vmem:[%s1 + $0x70] sm:$0xff]
      %v178 = vld [vmem:[%s1 + $0x78] sm:$0xff]
      %179 = vmatprep.subr.mxu0 0.0
      %180 = vmatpush1.msra.mxu0 %v178
      %181 = vmatprep.subr.mxu0 0.0
      %182 = vmatpush1.msra.mxu0 %v177
      %183 = vmatprep.subr.mxu0 0.0
      %184 = vmatpush1.msra.mxu0 %v176
      %185 = vmatprep.subr.mxu0 0.0
      %186 = vmatpush1.msra.mxu0 %v175
      %187 = vmatprep.subr.mxu0 0.0
      %188 = vmatpush1.msra.mxu0 %v174
      %189 = vmatprep.subr.mxu0 0.0
      %190 = vmatpush1.msra.mxu0 %v173
      %191 = vmatprep.subr.mxu0 0.0
      %192 = vmatpush1.msra.mxu0 %v172
      %193 = vmatprep.subr.mxu0 0.0
      %194 = vmatpush1.msra.mxu0 %v171
      %195 = vmatprep.subr.mxu0 0.0
      %196 = vmatpush1.msra.mxu0 %v170
      %197 = vmatprep.subr.mxu0 0.0
      %198 = vmatpush1.msra.mxu0 %v169
      %199 = vmatprep.subr.mxu0 0.0
      %200 = vmatpush1.msra.mxu0 %v168
      %201 = vmatprep.subr.mxu0 0.0
      %202 = vmatpush1.msra.mxu0 %v167
      %203 = vmatprep.subr.mxu0 0.0
      %204 = vmatpush1.msra.mxu0 %v166
      %205 = vmatprep.subr.mxu0 0.0
      %206 = vmatpush1.msra.mxu0 %v165
      %207 = vmatprep.subr.mxu0 0.0
      %208 = vmatpush1.msra.mxu0 %v164
      %209 = vmatprep.subr.mxu0 0.0
      %210 = vmatpush1.msra.mxu0 %v163
      %211 = vmatprep.subr.mxu0 0.0
      %212 = vmatpush2.msra.mxu0 0.0
      %213 = vmatprep.subr.mxu0 0.0
      %214 = vmatpush2.msra.mxu0 0.0
      %215 = vmatprep.subr.mxu0 0.0
      %216 = vmatpush2.msra.mxu0 0.0
      %217 = vmatprep.subr.mxu0 0.0
      %218 = vmatpush2.msra.mxu0 0.0
      %219 = vmatprep.subr.mxu0 0.0
      %220 = vmatpush2.msra.mxu0 0.0
      %221 = vmatprep.subr.mxu0 0.0
      %222 = vmatpush2.msra.mxu0 0.0
      %223 = vmatprep.subr.mxu0 0.0
      %224 = vmatpush2.msra.mxu0 0.0
      %225 = vmatprep.subr.mxu0 0.0
      %226 = vmatpush2.msra.mxu0 0.0
      %227 = vmatprep.subr.mxu0 0.0
      %228 = vmatpush2.msra.mxu0 0.0
      %229 = vmatprep.subr.mxu0 0.0
      %230 = vmatpush2.msra.mxu0 0.0
      %231 = vmatprep.subr.mxu0 0.0
      %232 = vmatpush2.msra.mxu0 0.0
      %233 = vmatprep.subr.mxu0 0.0
      %234 = vmatpush2.msra.mxu0 0.0
      %235 = vmatprep.subr.mxu0 0.0
      %236 = vmatpush2.msra.mxu0 0.0
      %237 = vmatprep.subr.mxu0 0.0
      %238 = vmatpush2.msra.mxu0 0.0
      %239 = vmatprep.subr.mxu0 0.0
      %240 = vmatpush2.msra.mxu0 0.0
      %241 = vmatprep.subr.mxu0 0.0
      %242 = vmatpush2.msra.mxu0 0.0
      %243 = vmatprep.mubr.f32.mxu0 0.0
      %244 = vmatmul.mubr.f32.gmra.mxu0 %v147
      %v245 = vpop.f32.mrf.mxu0
      %v246 = vadd.f32 0.0, %v245
      %v247 = vpop.f32.mrf.mxu0
      %248 = vmatprep.mubr.f32.mxu0 0.0
      %249 = vmatmul.mubr.f32.gmra.mxu0 %v148
      %v250 = vpop.f32.mrf.mxu0
      %v251 = vadd.f32 0.0, %v250
      %v252 = vpop.f32.mrf.mxu0
      %253 = vmatprep.mubr.f32.mxu0 0.0
      %254 = vmatmul.mubr.f32.gmra.mxu0 %v149
      %v255 = vpop.f32.mrf.mxu0
      %v256 = vadd.f32 0.0, %v255
      %v257 = vpop.f32.mrf.mxu0
      %258 = vmatprep.mubr.f32.mxu0 0.0
      %259 = vmatmul.mubr.f32.gmra.mxu0 %v150
      %v260 = vpop.f32.mrf.mxu0
      %v261 = vadd.f32 0.0, %v260
      %v262 = vpop.f32.mrf.mxu0
      %263 = vmatprep.mubr.f32.mxu0 0.0
      %264 = vmatmul.mubr.f32.gmra.mxu0 %v151
      %v265 = vpop.f32.mrf.mxu0
      %v266 = vadd.f32 0.0, %v265
      %v267 = vpop.f32.mrf.mxu0
      %268 = vmatprep.mubr.f32.mxu0 0.0
      %269 = vmatmul.mubr.f32.gmra.mxu0 %v152
      %v270 = vpop.f32.mrf.mxu0
      %v271 = vadd.f32 0.0, %v270
      %v272 = vpop.f32.mrf.mxu0
      %273 = vmatprep.mubr.f32.mxu0 0.0
      %274 = vmatmul.mubr.f32.gmra.mxu0 %v153
      %v275 = vpop.f32.mrf.mxu0
      %v276 = vadd.f32 0.0, %v275
      %v277 = vpop.f32.mrf.mxu0
      %278 = vmatprep.mubr.f32.mxu0 0.0
      %279 = vmatmul.mubr.f32.gmra.mxu0 %v154
      %v280 = vpop.f32.mrf.mxu0
      %v281 = vadd.f32 0.0, %v280
      %v282 = vpop.f32.mrf.mxu0
      %283 = vmatprep.mubr.f32.mxu0 0.0
      %284 = vmatmul.mubr.f32.gmra.mxu0 %v155
      %v285 = vpop.f32.mrf.mxu0
      %v286 = vadd.f32 0.0, %v285
      %v287 = vpop.f32.mrf.mxu0
      %288 = vmatprep.mubr.f32.mxu0 0.0
      %289 = vmatmul.mubr.f32.gmra.mxu0 %v156
      %v290 = vpop.f32.mrf.mxu0
      %v291 = vadd.f32 0.0, %v290
      %v292 = vpop.f32.mrf.mxu0
      %293 = vmatprep.mubr.f32.mxu0 0.0
      %294 = vmatmul.mubr.f32.gmra.mxu0 %v157
      %v295 = vpop.f32.mrf.mxu0
      %v296 = vadd.f32 0.0, %v295
      %v297 = vpop.f32.mrf.mxu0
      %298 = vmatprep.mubr.f32.mxu0 0.0
      %299 = vmatmul.mubr.f32.gmra.mxu0 %v158
      %v300 = vpop.f32.mrf.mxu0
      %v301 = vadd.f32 0.0, %v300
      %v302 = vpop.f32.mrf.mxu0
      %303 = vmatprep.mubr.f32.mxu0 0.0
      %304 = vmatmul.mubr.f32.gmra.mxu0 %v159
      %v305 = vpop.f32.mrf.mxu0
      %v306 = vadd.f32 0.0, %v305
      %v307 = vpop.f32.mrf.mxu0
      %308 = vmatprep.mubr.f32.mxu0 0.0
      %309 = vmatmul.mubr.f32.gmra.mxu0 %v160
      %v310 = vpop.f32.mrf.mxu0
      %v311 = vadd.f32 0.0, %v310
      %v312 = vpop.f32.mrf.mxu0
      %313 = vmatprep.mubr.f32.mxu0 0.0
      %314 = vmatmul.mubr.f32.gmra.mxu0 %v161
      %v315 = vpop.f32.mrf.mxu0
      %v316 = vadd.f32 0.0, %v315
      %v317 = vpop.f32.mrf.mxu0
      %318 = vmatprep.mubr.f32.mxu0 0.0
      %319 = vmatmul.mubr.f32.gmra.mxu0 %v162
      %v320 = vpop.f32.mrf.mxu0
      %v321 = vadd.f32 0.0, %v320
      %v322 = vpop.f32.mrf.mxu0
      %323 = vdwg.mxu0
      %324 = vst [vmem:[%s145] sm:$0xff] %v246
      %325 = vst [vmem:[%s145 + $0x8] sm:$0xff] %v251
      %326 = vst [vmem:[%s145 + $0x10] sm:$0xff] %v256
      %327 = vst [vmem:[%s145 + $0x18] sm:$0xff] %v261
      %328 = vst [vmem:[%s145 + $0x20] sm:$0xff] %v266
      %329 = vst [vmem:[%s145 + $0x28] sm:$0xff] %v271
      %330 = vst [vmem:[%s145 + $0x30] sm:$0xff] %v276
      %331 = vst [vmem:[%s145 + $0x38] sm:$0xff] %v281
      %332 = vst [vmem:[%s145 + $0x40] sm:$0xff] %v286
      %333 = vst [vmem:[%s145 + $0x48] sm:$0xff] %v291
      %334 = vst [vmem:[%s145 + $0x50] sm:$0xff] %v296
      %335 = vst [vmem:[%s145 + $0x58] sm:$0xff] %v301
      %336 = vst [vmem:[%s145 + $0x60] sm:$0xff] %v306
      %337 = vst [vmem:[%s145 + $0x68] sm:$0xff] %v311
      %338 = vst [vmem:[%s145 + $0x70] sm:$0xff] %v316
      %339 = vst [vmem:[%s145 + $0x78] sm:$0xff] %v321
      %s340 = smul.u32 16, %s13
      %p341 = scmp.lt.s32.totalorder %s340, 31
      %s342 = scalar_select %p341, %s340, 31
      %s343 = smul.addr %s342, 8
      %s344 = scalar_lea.vmem %s2, %s343
      // Predicated region
      $region29: #{_lambda_.9} parent=27 // pred_check
        %p345 = pneg %p78
      $region30: #{_lambda_.9} parent=27 // pred_check_branch
        %347 = sbr.rel (%p345) target = $region32
      $region31: #{_lambda_.9} parent=27 // pred_region
        %s348 = smul.u32 16, %s13
      $region32: #{_lambda_.9} parent=27 // pred_fallthru
        _
    $region28: #{_lambda_.9} parent=5 // pred_fallthru
      _
    %p349 = scmp.le.s32.totalorder 2, %s8
    // Predicated region
    $region33: #{_lambda_.9} parent=5 // pred_check
      %p350 = pneg %p349
    $region34: #{_lambda_.9} parent=5 // pred_check_branch
      %352 = sbr.rel (%p350) target = $region36
    $region35: #{_lambda_.9} parent=5 // pred_region
      %s353 = ssub.s32 %s8, 2
      // Predicated region
      $region37: #{_lambda_.9} parent=35 // pred_check
        %p354 = pneg %p84
      $region38: #{_lambda_.9} parent=35 // pred_check_branch
        %356 = sbr.rel (%p354) target = $region40
      $region39: #{_lambda_.9} parent=35 // pred_region
        %s357 = smul.u32 16, %s14
        %p358 = scmp.lt.s32.totalorder %s357, 31
        %s359 = scalar_select %p358, %s357, 31
        %s360 = smul.addr %s359, 8
        %s361 = scalar_lea.vmem %s2, %s360
      $region40: #{_lambda_.9} parent=35 // pred_fallthru
        _
    $region36: #{_lambda_.9} parent=5 // pred_fallthru
      _
  $region6: #{_lambda_.9} parent=0 // loop_footer
    %s12 = sadd.s32 1, %s8
  $region7: #{_lambda_.9} parent=0 // loop_footer_branch
    %7 = sbr.rel target = $region3
  $region8: #{_lambda_.9} parent=0 // loop_exit
    _

// kernel: _lambda_.8
$region0: #{_lambda_.8}
  #allocation0 [shape = 'u32[]', space=smem, size = 0x4, offset = 0x4, fixed_abs, tag = 'smem constant byte address 0x4 - core index']
  #allocation1 [shape = 'u32[144,128]{1,0:T(1,128)}', space=vmem, size = 0x12000, scoped, tag = 'internal scratch']
  #allocation2 [shape = 'f32[1,1]{1,0:T(1,128)S(6)}', space=smem, size = 0x200, scoped, tag = 'scoped memory for _lambda_.8']
  #allocation3 [shape = 'f32[1,1]{1,0:T(1,128)S(6)}', space=smem, size = 0x200, scoped, tag = 'scoped memory for _lambda_.8']
  %s0 = inlined_call_operand.vmem [shape: f32[256,128], index: 0, kind: input, shape index: {}]
  %s1 = inlined_call_operand.vmem [shape: f32[8,256], index: 1, kind: input, shape index: {}]
  %s2 = inlined_call_operand.vmem [shape: f32[8,1], index: 2, kind: input, shape index: {}]
  %s3 = inlined_call_operand.<no memory space> [shape: f32[1,1], index: 3, kind: input, shape index: {}]
  %s4 = inlined_call_operand.<no memory space> [shape: f32[1,1], index: 4, kind: input, shape index: {}]
  %s5 = inlined_call_operand.vmem [shape: f32[256,128], index: 5, kind: output, shape index: {}]
  %s6 = sld [smem:[#allocation0]]
  $region30: #{_lambda_.8} parent=0
    _
  %s8 = ssub.s32 1, %s6
  %s9 = scalar_select 0, %s8, %s6
  %10 = sst [smem:[#allocation2]] %s3
  %11 = sst [smem:[#allocation3]] %s4
  // Predicated region
  $region2: #{_lambda_.8} parent=0 // pred_check
    _
  $region3: #{_lambda_.8} parent=0 // pred_check_branch
    %13 = sbr.rel (0) target = $region5
  $region4: #{_lambda_.8} parent=0 // pred_region
    _
  $region5: #{_lambda_.8} parent=0 // pred_fallthru
    _
  // Predicated region
  $region6: #{_lambda_.8} parent=0 // pred_check
    _
  $region7: #{_lambda_.8} parent=0 // pred_check_branch
    %15 = sbr.rel (0) target = $region9
  $region8: #{_lambda_.8} parent=0 // pred_region
    _
  $region9: #{_lambda_.8} parent=0 // pred_fallthru
    _
  // Predicated region
  $region10: #{_lambda_.8} parent=0 // pred_check
    _
  $region11: #{_lambda_.8} parent=0 // pred_check_branch
    %17 = sbr.rel (0) target = $region13
  $region12: #{_lambda_.8} parent=0 // pred_region
    _
  $region13: #{_lambda_.8} parent=0 // pred_fallthru
    _
  // Predicated region
  $region14: #{_lambda_.8} parent=0 // pred_check
    _
  $region15: #{_lambda_.8} parent=0 // pred_check_branch
    %19 = sbr.rel (0) target = $region17
  $region16: #{_lambda_.8} parent=0 // pred_region
    _
  $region17: #{_lambda_.8} parent=0 // pred_fallthru
    _
  // Predicated region
  $region18: #{_lambda_.8} parent=0 // pred_check
    _
  $region19: #{_lambda_.8} parent=0 // pred_check_branch
    %21 = sbr.rel (0) target = $region21
  $region20: #{_lambda_.8} parent=0 // pred_region
    _
  $region21: #{_lambda_.8} parent=0 // pred_fallthru
    _
  %v22 = vld [vmem:[%s0] sm:$0xff]
  %v23 = vld [vmem:[%s0 + $0x8] sm:$0xff]
  %v24 = vld [vmem:[%s0 + $0x10] sm:$0xff]
  %v25 = vld [vmem:[%s0 + $0x18] sm:$0xff]
  %v26 = vld [vmem:[%s0 + $0x20] sm:$0xff]
  %v27 = vld [vmem:[%s0 + $0x28] sm:$0xff]
  %v28 = vld [vmem:[%s0 + $0x30] sm:$0xff]
  %v29 = vld [vmem:[%s0 + $0x38] sm:$0xff]
  %v30 = vld [vmem:[%s0 + $0x40] sm:$0xff]
  %v31 = vld [vmem:[%s0 + $0x48] sm:$0xff]
  %v32 = vld [vmem:[%s0 + $0x50] sm:$0xff]
  %v33 = vld [vmem:[%s0 + $0x58] sm:$0xff]
  %v34 = vld [vmem:[%s0 + $0x60] sm:$0xff]
  %v35 = vld [vmem:[%s0 + $0x68] sm:$0xff]
  %v36 = vld [vmem:[%s0 + $0x70] sm:$0xff]
  %v37 = vld [vmem:[%s0 + $0x78] sm:$0xff]
  %v38 = vld [vmem:[%s0 + $0x80] sm:$0xff]
  %v39 = vld [vmem:[%s0 + $0x88] sm:$0xff]
  %v40 = vld [vmem:[%s0 + $0x90] sm:$0xff]
  %v41 = vld [vmem:[%s0 + $0x98] sm:$0xff]
  %v42 = vld [vmem:[%s0 + $0xa0] sm:$0xff]
  %v43 = vld [vmem:[%s0 + $0xa8] sm:$0xff]
  %v44 = vld [vmem:[%s0 + $0xb0] sm:$0xff]
  %v45 = vld [vmem:[%s0 + $0xb8] sm:$0xff]
  %v46 = vld [vmem:[%s0 + $0xc0] sm:$0xff]
  %v47 = vld [vmem:[%s0 + $0xc8] sm:$0xff]
  %v48 = vld [vmem:[%s0 + $0xd0] sm:$0xff]
  %v49 = vld [vmem:[%s0 + $0xd8] sm:$0xff]
  %v50 = vld [vmem:[%s0 + $0xe0] sm:$0xff]
  %v51 = vld [vmem:[%s0 + $0xe8] sm:$0xff]
  %v52 = vld [vmem:[%s0 + $0xf0] sm:$0xff]
  %v53 = vld [vmem:[%s0 + $0xf8] sm:$0xff]
  %v54 = vld [vmem:[%s1] sm:$0xff]
  %v55 = vld [vmem:[%s1 + $0x8] sm:$0xff]
  %v56 = vld [vmem:[%s2] sm:$0xff]
  %v57 = vrcp.pop %v56
  %v58 = vmul.f32 1.0, %v57
  %59 = vmatprep.subr.mxu0 0.0
  %60 = vmatpush1.msra.mxu0 %v37
  %61 = vmatprep.subr.mxu0 0.0
  %62 = vmatpush1.msra.mxu0 %v36
  %63 = vmatprep.subr.mxu0 0.0
  %64 = vmatpush1.msra.mxu0 %v35
  %65 = vmatprep.subr.mxu0 0.0
  %66 = vmatpush1.msra.mxu0 %v34
  %67 = vmatprep.subr.mxu0 0.0
  %68 = vmatpush1.msra.mxu0 %v33
  %69 = vmatprep.subr.mxu0 0.0
  %70 = vmatpush1.msra.mxu0 %v32
  %71 = vmatprep.subr.mxu0 0.0
  %72 = vmatpush1.msra.mxu0 %v31
  %73 = vmatprep.subr.mxu0 0.0
  %74 = vmatpush1.msra.mxu0 %v30
  %75 = vmatprep.subr.mxu0 0.0
  %76 = vmatpush1.msra.mxu0 %v29
  %77 = vmatprep.subr.mxu0 0.0
  %78 = vmatpush1.msra.mxu0 %v28
  %79 = vmatprep.subr.mxu0 0.0
  %80 = vmatpush1.msra.mxu0 %v27
  %81 = vmatprep.subr.mxu0 0.0
  %82 = vmatpush1.msra.mxu0 %v26
  %83 = vmatprep.subr.mxu0 0.0
  %84 = vmatpush1.msra.mxu0 %v25
  %85 = vmatprep.subr.mxu0 0.0
  %86 = vmatpush1.msra.mxu0 %v24
  %87 = vmatprep.subr.mxu0 0.0
  %88 = vmatpush1.msra.mxu0 %v23
  %89 = vmatprep.subr.mxu0 0.0
  %90 = vmatpush1.msra.mxu0 %v22
  %91 = vmatprep.subr.mxu0 0.0
  %92 = vmatpush2.msra.mxu0 %v53
  %93 = vmatprep.subr.mxu0 0.0
  %94 = vmatpush2.msra.mxu0 %v52
  %95 = vmatprep.subr.mxu0 0.0
  %96 = vmatpush2.msra.mxu0 %v51
  %97 = vmatprep.subr.mxu0 0.0
  %98 = vmatpush2.msra.mxu0 %v50
  %99 = vmatprep.subr.mxu0 0.0
  %100 = vmatpush2.msra.mxu0 %v49
  %101 = vmatprep.subr.mxu0 0.0
  %102 = vmatpush2.msra.mxu0 %v48
  %103 = vmatprep.subr.mxu0 0.0
  %104 = vmatpush2.msra.mxu0 %v47
  %105 = vmatprep.subr.mxu0 0.0
  %106 = vmatpush2.msra.mxu0 %v46
  %107 = vmatprep.subr.mxu0 0.0
  %108 = vmatpush2.msra.mxu0 %v45
  %109 = vmatprep.subr.mxu0 0.0
  %110 = vmatpush2.msra.mxu0 %v44
  %111 = vmatprep.subr.mxu0 0.0
  %112 = vmatpush2.msra.mxu0 %v43
  %113 = vmatprep.subr.mxu0 0.0
  %114 = vmatpush2.msra.mxu0 %v42
  %115 = vmatprep.subr.mxu0 0.0
  %116 = vmatpush2.msra.mxu0 %v41
  %117 = vmatprep.subr.mxu0 0.0
  %118 = vmatpush2.msra.mxu0 %v40
  %119 = vmatprep.subr.mxu0 0.0
  %120 = vmatpush2.msra.mxu0 %v39
  %121 = vmatprep.subr.mxu0 0.0
  %122 = vmatpush2.msra.mxu0 %v38
  %123 = vmatprep.mubr.f32.mxu0 %v55
  %124 = vmatmul.mubr.f32.gmra.mxu0 %v54
  %v125 = vpop.f32.mrf.mxu0
  %v126 = vadd.f32 0.0, %v125
  %v127 = vpop.f32.mrf.mxu0
  %128 = vdwg.mxu0
  %130 = vset.pattern.permute.xlu0 0
  %131 = vperm.xlu0 %130, %v58
  %v132 = vpop.permute.xlu0 %131
  %v134 = vmul.f32 %v126, %v132
  %135 = vxpose.xlu0.b32.start [1/16] %v54, 128
  %136 = vxpose.xlu0.b32.cont [2/16] 0.0, 128
  %137 = vxpose.xlu0.b32.cont [3/16] 0.0, 128
  %138 = vxpose.xlu0.b32.cont [4/16] 0.0, 128
  %139 = vxpose.xlu0.b32.cont [5/16] 0.0, 128
  %140 = vxpose.xlu0.b32.cont [6/16] 0.0, 128
  %141 = vxpose.xlu0.b32.cont [7/16] 0.0, 128
  %142 = vxpose.xlu0.b32.cont [8/16] 0.0, 128
  %143 = vxpose.xlu0.b32.cont [9/16] 0.0, 128
  %144 = vxpose.xlu0.b32.cont [10/16] 0.0, 128
  %145 = vxpose.xlu0.b32.cont [11/16] 0.0, 128
  %146 = vxpose.xlu0.b32.cont [12/16] 0.0, 128
  %147 = vxpose.xlu0.b32.cont [13/16] 0.0, 128
  %148 = vxpose.xlu0.b32.cont [14/16] 0.0, 128
  %149 = vxpose.xlu0.b32.cont [15/16] 0.0, 128
  %150 = vxpose.xlu0.b32.end [16/16] 0.0, 128
  %v151 = vpop.trf.xlu0
  %v152 = vpop.trf.xlu0
  %v153 = vpop.trf.xlu0
  %v154 = vpop.trf.xlu0
  %v155 = vpop.trf.xlu0
  %v156 = vpop.trf.xlu0
  %v157 = vpop.trf.xlu0
  %v158 = vpop.trf.xlu0
  %v159 = vpop.trf.xlu0
  %v160 = vpop.trf.xlu0
  %v161 = vpop.trf.xlu0
  %v162 = vpop.trf.xlu0
  %v163 = vpop.trf.xlu0
  %v164 = vpop.trf.xlu0
  %v165 = vpop.trf.xlu0
  %v166 = vpop.trf.xlu0
  %167 = vxpose.xlu0.b32.start [1/16] %v55, 128
  %168 = vxpose.xlu0.b32.cont [2/16] 0.0, 128
  %169 = vxpose.xlu0.b32.cont [3/16] 0.0, 128
  %170 = vxpose.xlu0.b32.cont [4/16] 0.0, 128
  %171 = vxpose.xlu0.b32.cont [5/16] 0.0, 128
  %172 = vxpose.xlu0.b32.cont [6/16] 0.0, 128
  %173 = vxpose.xlu0.b32.cont [7/16] 0.0, 128
  %174 = vxpose.xlu0.b32.cont [8/16] 0.0, 128
  %175 = vxpose.xlu0.b32.cont [9/16] 0.0, 128
  %176 = vxpose.xlu0.b32.cont [10/16] 0.0, 128
  %177 = vxpose.xlu0.b32.cont [11/16] 0.0, 128
  %178 = vxpose.xlu0.b32.cont [12/16] 0.0, 128
  %179 = vxpose.xlu0.b32.cont [13/16] 0.0, 128
  %180 = vxpose.xlu0.b32.cont [14/16] 0.0, 128
  %181 = vxpose.xlu0.b32.cont [15/16] 0.0, 128
  %182 = vxpose.xlu0.b32.end [16/16] 0.0, 128
  %v183 = vpop.trf.xlu0
  %v184 = vpop.trf.xlu0
  %v185 = vpop.trf.xlu0
  %v186 = vpop.trf.xlu0
  %v187 = vpop.trf.xlu0
  %v188 = vpop.trf.xlu0
  %v189 = vpop.trf.xlu0
  %v190 = vpop.trf.xlu0
  %v191 = vpop.trf.xlu0
  %v192 = vpop.trf.xlu0
  %v193 = vpop.trf.xlu0
  %v194 = vpop.trf.xlu0
  %v195 = vpop.trf.xlu0
  %v196 = vpop.trf.xlu0
  %v197 = vpop.trf.xlu0
  %v198 = vpop.trf.xlu0
  %vm199 = vcmask 64512
  %v201 = vsel %vm199, %v151, 0
  %v204 = vsel %vm199, %v152, 0
  %v207 = vsel %vm199, %v153, 0
  %v210 = vsel %vm199, %v154, 0
  %v213 = vsel %vm199, %v155, 0
  %v216 = vsel %vm199, %v156, 0
  %v219 = vsel %vm199, %v157, 0
  %v222 = vsel %vm199, %v158, 0
  %v225 = vsel %vm199, %v159, 0
  %v228 = vsel %vm199, %v160, 0
  %v231 = vsel %vm199, %v161, 0
  %v234 = vsel %vm199, %v162, 0
  %v237 = vsel %vm199, %v163, 0
  %v240 = vsel %vm199, %v164, 0
  %v243 = vsel %vm199, %v165, 0
  %v246 = vsel %vm199, %v166, 0
  %v249 = vsel %vm199, %v183, 0
  %v252 = vsel %vm199, %v184, 0
  %v255 = vsel %vm199, %v185, 0
  %v258 = vsel %vm199, %v186, 0
  %v261 = vsel %vm199, %v187, 0
  %v264 = vsel %vm199, %v188, 0
  %v267 = vsel %vm199, %v189, 0
  %v270 = vsel %vm199, %v190, 0
  %v273 = vsel %vm199, %v191, 0
  %v276 = vsel %vm199, %v192, 0
  %v279 = vsel %vm199, %v193, 0
  %v282 = vsel %vm199, %v194, 0
  %v285 = vsel %vm199, %v195, 0
  %v288 = vsel %vm199, %v196, 0
  %v291 = vsel %vm199, %v197, 0
  %v294 = vsel %vm199, %v198, 0
  %296 = vmatprep.subr.mxu0 0.0
  %297 = vmatpush1.msra.mxu0 0.0
  %298 = vmatprep.subr.mxu0 0.0
  %299 = vmatpush1.msra.mxu0 0.0
  %300 = vmatprep.subr.mxu0 0.0
  %301 = vmatpush1.msra.mxu0 0.0
  %302 = vmatprep.subr.mxu0 0.0
  %303 = vmatpush1.msra.mxu0 0.0
  %304 = vmatprep.subr.mxu0 0.0
  %305 = vmatpush1.msra.mxu0 0.0
  %306 = vmatprep.subr.mxu0 0.0
  %307 = vmatpush1.msra.mxu0 0.0
  %308 = vmatprep.subr.mxu0 0.0
  %309 = vmatpush1.msra.mxu0 0.0
  %310 = vmatprep.subr.mxu0 0.0
  %311 = vmatpush1.msra.mxu0 0.0
  %312 = vmatprep.subr.mxu0 0.0
  %313 = vmatpush1.msra.mxu0 0.0
  %314 = vmatprep.subr.mxu0 0.0
  %315 = vmatpush1.msra.mxu0 0.0
  %316 = vmatprep.subr.mxu0 0.0
  %317 = vmatpush1.msra.mxu0 0.0
  %318 = vmatprep.subr.mxu0 0.0
  %319 = vmatpush1.msra.mxu0 0.0
  %320 = vmatprep.subr.mxu0 0.0
  %321 = vmatpush1.msra.mxu0 0.0
  %322 = vmatprep.subr.mxu0 0.0
  %323 = vmatpush1.msra.mxu0 0.0
  %324 = vmatprep.subr.mxu0 0.0
  %325 = vmatpush1.msra.mxu0 0.0
  %326 = vmatprep.subr.mxu0 0.0
  %327 = vmatpush1.msra.mxu0 %v134
  %328 = vmatprep.subr.mxu0 0.0
  %329 = vmatpush2.msra.mxu0 0.0
  %330 = vmatprep.subr.mxu0 0.0
  %331 = vmatpush2.msra.mxu0 0.0
  %332 = vmatprep.subr.mxu0 0.0
  %333 = vmatpush2.msra.mxu0 0.0
  %334 = vmatprep.subr.mxu0 0.0
  %335 = vmatpush2.msra.mxu0 0.0
  %336 = vmatprep.subr.mxu0 0.0
  %337 = vmatpush2.msra.mxu0 0.0
  %338 = vmatprep.subr.mxu0 0.0
  %339 = vmatpush2.msra.mxu0 0.0
  %340 = vmatprep.subr.mxu0 0.0
  %341 = vmatpush2.msra.mxu0 0.0
  %342 = vmatprep.subr.mxu0 0.0
  %343 = vmatpush2.msra.mxu0 0.0
  %344 = vmatprep.subr.mxu0 0.0
  %345 = vmatpush2.msra.mxu0 0.0
  %346 = vmatprep.subr.mxu0 0.0
  %347 = vmatpush2.msra.mxu0 0.0
  %348 = vmatprep.subr.mxu0 0.0
  %349 = vmatpush2.msra.mxu0 0.0
  %350 = vmatprep.subr.mxu0 0.0
  %351 = vmatpush2.msra.mxu0 0.0
  %352 = vmatprep.subr.mxu0 0.0
  %353 = vmatpush2.msra.mxu0 0.0
  %354 = vmatprep.subr.mxu0 0.0
  %355 = vmatpush2.msra.mxu0 0.0
  %356 = vmatprep.subr.mxu0 0.0
  %357 = vmatpush2.msra.mxu0 0.0
  %358 = vmatprep.subr.mxu0 0.0
  %359 = vmatpush2.msra.mxu0 0.0
  %360 = vmatprep.mubr.f32.mxu0 0.0
  %361 = vmatmul.mubr.f32.gmra.mxu0 %v201
  %v362 = vpop.f32.mrf.mxu0
  %v363 = vadd.f32 0.0, %v362
  %v364 = vpop.f32.mrf.mxu0
  %365 = vmatprep.mubr.f32.mxu0 0.0
  %366 = vmatmul.mubr.f32.gmra.mxu0 %v204
  %v367 = vpop.f32.mrf.mxu0
  %v368 = vadd.f32 0.0, %v367
  %v369 = vpop.f32.mrf.mxu0
  %370 = vmatprep.mubr.f32.mxu0 0.0
  %371 = vmatmul.mubr.f32.gmra.mxu0 %v207
  %v372 = vpop.f32.mrf.mxu0
  %v373 = vadd.f32 0.0, %v372
  %v374 = vpop.f32.mrf.mxu0
  %375 = vmatprep.mubr.f32.mxu0 0.0
  %376 = vmatmul.mubr.f32.gmra.mxu0 %v210
  %v377 = vpop.f32.mrf.mxu0
  %v378 = vadd.f32 0.0, %v377
  %v379 = vpop.f32.mrf.mxu0
  %380 = vmatprep.mubr.f32.mxu0 0.0
  %381 = vmatmul.mubr.f32.gmra.mxu0 %v213
  %v382 = vpop.f32.mrf.mxu0
  %v383 = vadd.f32 0.0, %v382
  %v384 = vpop.f32.mrf.mxu0
  %385 = vmatprep.mubr.f32.mxu0 0.0
  %386 = vmatmul.mubr.f32.gmra.mxu0 %v216
  %v387 = vpop.f32.mrf.mxu0
  %v388 = vadd.f32 0.0, %v387
  %v389 = vpop.f32.mrf.mxu0
  %390 = vmatprep.mubr.f32.mxu0 0.0
  %391 = vmatmul.mubr.f32.gmra.mxu0 %v219
  %v392 = vpop.f32.mrf.mxu0
  %v393 = vadd.f32 0.0, %v392
  %v394 = vpop.f32.mrf.mxu0
  %395 = vmatprep.mubr.f32.mxu0 0.0
  %396 = vmatmul.mubr.f32.gmra.mxu0 %v222
  %v397 = vpop.f32.mrf.mxu0
  %v398 = vadd.f32 0.0, %v397
  %v399 = vpop.f32.mrf.mxu0
  %400 = vmatprep.mubr.f32.mxu0 0.0
  %401 = vmatmul.mubr.f32.gmra.mxu0 %v225
  %v402 = vpop.f32.mrf.mxu0
  %v403 = vadd.f32 0.0, %v402
  %v404 = vpop.f32.mrf.mxu0
  %405 = vmatprep.mubr.f32.mxu0 0.0
  %406 = vmatmul.mubr.f32.gmra.mxu0 %v228
  %v407 = vpop.f32.mrf.mxu0
  %v408 = vadd.f32 0.0, %v407
  %v409 = vpop.f32.mrf.mxu0
  %410 = vmatprep.mubr.f32.mxu0 0.0
  %411 = vmatmul.mubr.f32.gmra.mxu0 %v231
  %v412 = vpop.f32.mrf.mxu0
  %v413 = vadd.f32 0.0, %v412
  %v414 = vpop.f32.mrf.mxu0
  %415 = vmatprep.mubr.f32.mxu0 0.0
  %416 = vmatmul.mubr.f32.gmra.mxu0 %v234
  %v417 = vpop.f32.mrf.mxu0
  %v418 = vadd.f32 0.0, %v417
  %v419 = vpop.f32.mrf.mxu0
  %420 = vmatprep.mubr.f32.mxu0 0.0
  %421 = vmatmul.mubr.f32.gmra.mxu0 %v237
  %v422 = vpop.f32.mrf.mxu0
  %v423 = vadd.f32 0.0, %v422
  %v424 = vpop.f32.mrf.mxu0
  %425 = vmatprep.mubr.f32.mxu0 0.0
  %426 = vmatmul.mubr.f32.gmra.mxu0 %v240
  %v427 = vpop.f32.mrf.mxu0
  %v428 = vadd.f32 0.0, %v427
  %v429 = vpop.f32.mrf.mxu0
  %430 = vmatprep.mubr.f32.mxu0 0.0
  %431 = vmatmul.mubr.f32.gmra.mxu0 %v243
  %v432 = vpop.f32.mrf.mxu0
  %v433 = vadd.f32 0.0, %v432
  %v434 = vpop.f32.mrf.mxu0
  %435 = vmatprep.mubr.f32.mxu0 0.0
  %436 = vmatmul.mubr.f32.gmra.mxu0 %v246
  %v437 = vpop.f32.mrf.mxu0
  %v438 = vadd.f32 0.0, %v437
  %v439 = vpop.f32.mrf.mxu0
  %440 = vmatprep.mubr.f32.mxu0 0.0
  %441 = vmatmul.mubr.f32.gmra.mxu0 %v249
  %v442 = vpop.f32.mrf.mxu0
  %v443 = vadd.f32 0.0, %v442
  %v444 = vpop.f32.mrf.mxu0
  %445 = vmatprep.mubr.f32.mxu0 0.0
  %446 = vmatmul.mubr.f32.gmra.mxu0 %v252
  %v447 = vpop.f32.mrf.mxu0
  %v448 = vadd.f32 0.0, %v447
  %v449 = vpop.f32.mrf.mxu0
  %450 = vmatprep.mubr.f32.mxu0 0.0
  %451 = vmatmul.mubr.f32.gmra.mxu0 %v255
  %v452 = vpop.f32.mrf.mxu0
  %v453 = vadd.f32 0.0, %v452
  %v454 = vpop.f32.mrf.mxu0
  %455 = vmatprep.mubr.f32.mxu0 0.0
  %456 = vmatmul.mubr.f32.gmra.mxu0 %v258
  %v457 = vpop.f32.mrf.mxu0
  %v458 = vadd.f32 0.0, %v457
  %v459 = vpop.f32.mrf.mxu0
  %460 = vmatprep.mubr.f32.mxu0 0.0
  %461 = vmatmul.mubr.f32.gmra.mxu0 %v261
  %v462 = vpop.f32.mrf.mxu0
  %v463 = vadd.f32 0.0, %v462
  %v464 = vpop.f32.mrf.mxu0
  %465 = vmatprep.mubr.f32.mxu0 0.0
  %466 = vmatmul.mubr.f32.gmra.mxu0 %v264
  %v467 = vpop.f32.mrf.mxu0
  %v468 = vadd.f32 0.0, %v467
  %v469 = vpop.f32.mrf.mxu0
  %470 = vmatprep.mubr.f32.mxu0 0.0
  %471 = vmatmul.mubr.f32.gmra.mxu0 %v267
  %v472 = vpop.f32.mrf.mxu0
  %v473 = vadd.f32 0.0, %v472
  %v474 = vpop.f32.mrf.mxu0
  %475 = vmatprep.mubr.f32.mxu0 0.0
  %476 = vmatmul.mubr.f32.gmra.mxu0 %v270
  %v477 = vpop.f32.mrf.mxu0
  %v478 = vadd.f32 0.0, %v477
  %v479 = vpop.f32.mrf.mxu0
  %480 = vmatprep.mubr.f32.mxu0 0.0
  %481 = vmatmul.mubr.f32.gmra.mxu0 %v273
  %v482 = vpop.f32.mrf.mxu0
  %v483 = vadd.f32 0.0, %v482
  %v484 = vpop.f32.mrf.mxu0
  %485 = vmatprep.mubr.f32.mxu0 0.0
  %486 = vmatmul.mubr.f32.gmra.mxu0 %v276
  %v487 = vpop.f32.mrf.mxu0
  %v488 = vadd.f32 0.0, %v487
  %v489 = vpop.f32.mrf.mxu0
  %490 = vmatprep.mubr.f32.mxu0 0.0
  %491 = vmatmul.mubr.f32.gmra.mxu0 %v279
  %v492 = vpop.f32.mrf.mxu0
  %v493 = vadd.f32 0.0, %v492
  %v494 = vpop.f32.mrf.mxu0
  %495 = vmatprep.mubr.f32.mxu0 0.0
  %496 = vmatmul.mubr.f32.gmra.mxu0 %v282
  %v497 = vpop.f32.mrf.mxu0
  %v498 = vadd.f32 0.0, %v497
  %v499 = vpop.f32.mrf.mxu0
  %500 = vmatprep.mubr.f32.mxu0 0.0
  %501 = vmatmul.mubr.f32.gmra.mxu0 %v285
  %v502 = vpop.f32.mrf.mxu0
  %v503 = vadd.f32 0.0, %v502
  %v504 = vpop.f32.mrf.mxu0
  %505 = vmatprep.mubr.f32.mxu0 0.0
  %506 = vmatmul.mubr.f32.gmra.mxu0 %v288
  %v507 = vpop.f32.mrf.mxu0
  %v508 = vadd.f32 0.0, %v507
  %v509 = vpop.f32.mrf.mxu0
  %510 = vmatprep.mubr.f32.mxu0 0.0
  %511 = vmatmul.mubr.f32.gmra.mxu0 %v291
  %v512 = vpop.f32.mrf.mxu0
  %v513 = vadd.f32 0.0, %v512
  %v514 = vpop.f32.mrf.mxu0
  %515 = vmatprep.mubr.f32.mxu0 0.0
  %516 = vmatmul.mubr.f32.gmra.mxu0 %v294
  %v517 = vpop.f32.mrf.mxu0
  %v518 = vadd.f32 0.0, %v517
  %v519 = vpop.f32.mrf.mxu0
  %520 = vdwg.mxu0
  %v521 = vsub.f32 %v22, %v363
  %v522 = vsub.f32 %v23, %v368
  %v523 = vsub.f32 %v24, %v373
  %v524 = vsub.f32 %v25, %v378
  %v525 = vsub.f32 %v26, %v383
  %v526 = vsub.f32 %v27, %v388
  %v527 = vsub.f32 %v28, %v393
  %v528 = vsub.f32 %v29, %v398
  %v529 = vsub.f32 %v30, %v403
  %v530 = vsub.f32 %v31, %v408
  %v531 = vsub.f32 %v32, %v413
  %v532 = vsub.f32 %v33, %v418
  %v533 = vsub.f32 %v34, %v423
  %v534 = vsub.f32 %v35, %v428
  %v535 = vsub.f32 %v36, %v433
  %v536 = vsub.f32 %v37, %v438
  %v537 = vsub.f32 %v38, %v443
  %v538 = vsub.f32 %v39, %v448
  %v539 = vsub.f32 %v40, %v453
  %v540 = vsub.f32 %v41, %v458
  %v541 = vsub.f32 %v42, %v463
  %v542 = vsub.f32 %v43, %v468
  %v543 = vsub.f32 %v44, %v473
  %v544 = vsub.f32 %v45, %v478
  %v545 = vsub.f32 %v46, %v483
  %v546 = vsub.f32 %v47, %v488
  %v547 = vsub.f32 %v48, %v493
  %v548 = vsub.f32 %v49, %v498
  %v549 = vsub.f32 %v50, %v503
  %v550 = vsub.f32 %v51, %v508
  %v551 = vsub.f32 %v52, %v513
  %v552 = vsub.f32 %v53, %v518
  %v553 = vmul.f32 %v521, %v521
  %v554 = vmul.f32 %v522, %v522
  %v555 = vmul.f32 %v523, %v523
  %v556 = vmul.f32 %v524, %v524
  %v557 = vmul.f32 %v525, %v525
  %v558 = vmul.f32 %v526, %v526
  %v559 = vmul.f32 %v527, %v527
  %v560 = vmul.f32 %v528, %v528
  %v561 = vmul.f32 %v529, %v529
  %v562 = vmul.f32 %v530, %v530
  %v563 = vmul.f32 %v531, %v531
  %v564 = vmul.f32 %v532, %v532
  %v565 = vmul.f32 %v533, %v533
  %v566 = vmul.f32 %v534, %v534
  %v567 = vmul.f32 %v535, %v535
  %v568 = vmul.f32 %v536, %v536
  %v569 = vmul.f32 %v537, %v537
  %v570 = vmul.f32 %v538, %v538
  %v571 = vmul.f32 %v539, %v539
  %v572 = vmul.f32 %v540, %v540
  %v573 = vmul.f32 %v541, %v541
  %v574 = vmul.f32 %v542, %v542
  %v575 = vmul.f32 %v543, %v543
  %v576 = vmul.f32 %v544, %v544
  %v577 = vmul.f32 %v545, %v545
  %v578 = vmul.f32 %v546, %v546
  %v579 = vmul.f32 %v547, %v547
  %v580 = vmul.f32 %v548, %v548
  %v581 = vmul.f32 %v549, %v549
  %v582 = vmul.f32 %v550, %v550
  %v583 = vmul.f32 %v551, %v551
  %v584 = vmul.f32 %v552, %v552
  %585 = vmatprep.subr.mxu0 0.0
  %586 = vmatpush1.msra.mxu0 %v568
  %587 = vmatprep.subr.mxu0 0.0
  %588 = vmatpush1.msra.mxu0 %v567
  %589 = vmatprep.subr.mxu0 0.0
  %590 = vmatpush1.msra.mxu0 %v566
  %591 = vmatprep.subr.mxu0 0.0
  %592 = vmatpush1.msra.mxu0 %v565
  %593 = vmatprep.subr.mxu0 0.0
  %594 = vmatpush1.msra.mxu0 %v564
  %595 = vmatprep.subr.mxu0 0.0
  %596 = vmatpush1.msra.mxu0 %v563
  %597 = vmatprep.subr.mxu0 0.0
  %598 = vmatpush1.msra.mxu0 %v562
  %599 = vmatprep.subr.mxu0 0.0
  %600 = vmatpush1.msra.mxu0 %v561
  %601 = vmatprep.subr.mxu0 0.0
  %602 = vmatpush1.msra.mxu0 %v560
  %603 = vmatprep.subr.mxu0 0.0
  %604 = vmatpush1.msra.mxu0 %v559
  %605 = vmatprep.subr.mxu0 0.0
  %606 = vmatpush1.msra.mxu0 %v558
  %607 = vmatprep.subr.mxu0 0.0
  %608 = vmatpush1.msra.mxu0 %v557
  %609 = vmatprep.subr.mxu0 0.0
  %610 = vmatpush1.msra.mxu0 %v556
  %611 = vmatprep.subr.mxu0 0.0
  %612 = vmatpush1.msra.mxu0 %v555
  %613 = vmatprep.subr.mxu0 0.0
  %614 = vmatpush1.msra.mxu0 %v554
  %615 = vmatprep.subr.mxu0 0.0
  %616 = vmatpush1.msra.mxu0 %v553
  %617 = vmatprep.subr.mxu0 0.0
  %618 = vmatpush2.msra.mxu0 %v584
  %619 = vmatprep.subr.mxu0 0.0
  %620 = vmatpush2.msra.mxu0 %v583
  %621 = vmatprep.subr.mxu0 0.0
  %622 = vmatpush2.msra.mxu0 %v582
  %623 = vmatprep.subr.mxu0 0.0
  %624 = vmatpush2.msra.mxu0 %v581
  %625 = vmatprep.subr.mxu0 0.0
  %626 = vmatpush2.msra.mxu0 %v580
  %627 = vmatprep.subr.mxu0 0.0
  %628 = vmatpush2.msra.mxu0 %v579
  %629 = vmatprep.subr.mxu0 0.0
  %630 = vmatpush2.msra.mxu0 %v578
  %631 = vmatprep.subr.mxu0 0.0
  %632 = vmatpush2.msra.mxu0 %v577
  %633 = vmatprep.subr.mxu0 0.0
  %634 = vmatpush2.msra.mxu0 %v576
  %635 = vmatprep.subr.mxu0 0.0
  %636 = vmatpush2.msra.mxu0 %v575
  %637 = vmatprep.subr.mxu0 0.0
  %638 = vmatpush2.msra.mxu0 %v574
  %639 = vmatprep.subr.mxu0 0.0
  %640 = vmatpush2.msra.mxu0 %v573
  %641 = vmatprep.subr.mxu0 0.0
  %642 = vmatpush2.msra.mxu0 %v572
  %643 = vmatprep.subr.mxu0 0.0
  %644 = vmatpush2.msra.mxu0 %v571
  %645 = vmatprep.subr.mxu0 0.0
  %646 = vmatpush2.msra.mxu0 %v570
  %647 = vmatprep.subr.mxu0 0.0
  %648 = vmatpush2.msra.mxu0 %v569
  %649 = vmatprep.mubr.f32.mxu0 %v55
  %650 = vmatmul.mubr.f32.gmra.mxu0 %v54
  %v651 = vpop.f32.mrf.mxu0
  %v652 = vadd.f32 0.0, %v651
  %v653 = vpop.f32.mrf.mxu0
  %654 = vdwg.mxu0
  %v655 = vmul.f32 %v652, %v132
  %656 = vmatprep.subr.mxu0 0.0
  %657 = vmatpush1.msra.mxu0 0.0
  %658 = vmatprep.subr.mxu0 0.0
  %659 = vmatpush1.msra.mxu0 0.0
  %660 = vmatprep.subr.mxu0 0.0
  %661 = vmatpush1.msra.mxu0 0.0
  %662 = vmatprep.subr.mxu0 0.0
  %663 = vmatpush1.msra.mxu0 0.0
  %664 = vmatprep.subr.mxu0 0.0
  %665 = vmatpush1.msra.mxu0 0.0
  %666 = vmatprep.subr.mxu0 0.0
  %667 = vmatpush1.msra.mxu0 0.0
  %668 = vmatprep.subr.mxu0 0.0
  %669 = vmatpush1.msra.mxu0 0.0
  %670 = vmatprep.subr.mxu0 0.0
  %671 = vmatpush1.msra.mxu0 0.0
  %672 = vmatprep.subr.mxu0 0.0
  %673 = vmatpush1.msra.mxu0 0.0
  %674 = vmatprep.subr.mxu0 0.0
  %675 = vmatpush1.msra.mxu0 0.0
  %676 = vmatprep.subr.mxu0 0.0
  %677 = vmatpush1.msra.mxu0 0.0
  %678 = vmatprep.subr.mxu0 0.0
  %679 = vmatpush1.msra.mxu0 0.0
  %680 = vmatprep.subr.mxu0 0.0
  %681 = vmatpush1.msra.mxu0 0.0
  %682 = vmatprep.subr.mxu0 0.0
  %683 = vmatpush1.msra.mxu0 0.0
  %684 = vmatprep.subr.mxu0 0.0
  %685 = vmatpush1.msra.mxu0 0.0
  %686 = vmatprep.subr.mxu0 0.0
  %687 = vmatpush1.msra.mxu0 %v655
  %688 = vmatprep.subr.mxu0 0.0
  %689 = vmatpush2.msra.mxu0 0.0
  %690 = vmatprep.subr.mxu0 0.0
  %691 = vmatpush2.msra.mxu0 0.0
  %692 = vmatprep.subr.mxu0 0.0
  %693 = vmatpush2.msra.mxu0 0.0
  %694 = vmatprep.subr.mxu0 0.0
  %695 = vmatpush2.msra.mxu0 0.0
  %696 = vmatprep.subr.mxu0 0.0
  %697 = vmatpush2.msra.mxu0 0.0
  %698 = vmatprep.subr.mxu0 0.0
  %699 = vmatpush2.msra.mxu0 0.0
  %700 = vmatprep.subr.mxu0 0.0
  %701 = vmatpush2.msra.mxu0 0.0
  %702 = vmatprep.subr.mxu0 0.0
  %703 = vmatpush2.msra.mxu0 0.0
  %704 = vmatprep.subr.mxu0 0.0
  %705 = vmatpush2.msra.mxu0 0.0
  %706 = vmatprep.subr.mxu0 0.0
  %707 = vmatpush2.msra.mxu0 0.0
  %708 = vmatprep.subr.mxu0 0.0
  %709 = vmatpush2.msra.mxu0 0.0
  %710 = vmatprep.subr.mxu0 0.0
  %711 = vmatpush2.msra.mxu0 0.0
  %712 = vmatprep.subr.mxu0 0.0
  %713 = vmatpush2.msra.mxu0 0.0
  %714 = vmatprep.subr.mxu0 0.0
  %715 = vmatpush2.msra.mxu0 0.0
  %716 = vmatprep.subr.mxu0 0.0
  %717 = vmatpush2.msra.mxu0 0.0
  %718 = vmatprep.subr.mxu0 0.0
  %719 = vmatpush2.msra.mxu0 0.0
  %720 = vmatprep.mubr.f32.mxu0 0.0
  %721 = vmatmul.mubr.f32.gmra.mxu0 %v201
  %v722 = vpop.f32.mrf.mxu0
  %v723 = vadd.f32 1e-05, %v722
  %v724 = vpop.f32.mrf.mxu0
  %725 = vmatprep.mubr.f32.mxu0 0.0
  %726 = vmatmul.mubr.f32.gmra.mxu0 %v204
  %v727 = vpop.f32.mrf.mxu0
  %v728 = vadd.f32 1e-05, %v727
  %v729 = vpop.f32.mrf.mxu0
  %730 = vmatprep.mubr.f32.mxu0 0.0
  %731 = vmatmul.mubr.f32.gmra.mxu0 %v207
  %v732 = vpop.f32.mrf.mxu0
  %v733 = vadd.f32 1e-05, %v732
  %v734 = vpop.f32.mrf.mxu0
  %735 = vmatprep.mubr.f32.mxu0 0.0
  %736 = vmatmul.mubr.f32.gmra.mxu0 %v210
  %v737 = vpop.f32.mrf.mxu0
  %v738 = vadd.f32 1e-05, %v737
  %v739 = vpop.f32.mrf.mxu0
  %740 = vmatprep.mubr.f32.mxu0 0.0
  %741 = vmatmul.mubr.f32.gmra.mxu0 %v213
  %v742 = vpop.f32.mrf.mxu0
  %v743 = vadd.f32 1e-05, %v742
  %v744 = vpop.f32.mrf.mxu0
  %745 = vmatprep.mubr.f32.mxu0 0.0
  %746 = vmatmul.mubr.f32.gmra.mxu0 %v216
  %v747 = vpop.f32.mrf.mxu0
  %v748 = vadd.f32 1e-05, %v747
  %v749 = vpop.f32.mrf.mxu0
  %750 = vmatprep.mubr.f32.mxu0 0.0
  %751 = vmatmul.mubr.f32.gmra.mxu0 %v219
  %v752 = vpop.f32.mrf.mxu0
  %v753 = vadd.f32 1e-05, %v752
  %v754 = vpop.f32.mrf.mxu0
  %755 = vmatprep.mubr.f32.mxu0 0.0
  %756 = vmatmul.mubr.f32.gmra.mxu0 %v222
  %v757 = vpop.f32.mrf.mxu0
  %v758 = vadd.f32 1e-05, %v757
  %v759 = vpop.f32.mrf.mxu0
  %760 = vmatprep.mubr.f32.mxu0 0.0
  %761 = vmatmul.mubr.f32.gmra.mxu0 %v225
  %v762 = vpop.f32.mrf.mxu0
  %v763 = vadd.f32 1e-05, %v762
  %v764 = vpop.f32.mrf.mxu0
  %765 = vmatprep.mubr.f32.mxu0 0.0
  %766 = vmatmul.mubr.f32.gmra.mxu0 %v228
  %v767 = vpop.f32.mrf.mxu0
  %v768 = vadd.f32 1e-05, %v767
  %v769 = vpop.f32.mrf.mxu0
  %770 = vmatprep.mubr.f32.mxu0 0.0
  %771 = vmatmul.mubr.f32.gmra.mxu0 %v231
  %v772 = vpop.f32.mrf.mxu0
  %v773 = vadd.f32 1e-05, %v772
  %v774 = vpop.f32.mrf.mxu0
  %775 = vmatprep.mubr.f32.mxu0 0.0
  %776 = vmatmul.mubr.f32.gmra.mxu0 %v234
  %v777 = vpop.f32.mrf.mxu0
  %v778 = vadd.f32 1e-05, %v777
  %v779 = vpop.f32.mrf.mxu0
  %780 = vmatprep.mubr.f32.mxu0 0.0
  %781 = vmatmul.mubr.f32.gmra.mxu0 %v237
  %v782 = vpop.f32.mrf.mxu0
  %v783 = vadd.f32 1e-05, %v782
  %v784 = vpop.f32.mrf.mxu0
  %785 = vmatprep.mubr.f32.mxu0 0.0
  %786 = vmatmul.mubr.f32.gmra.mxu0 %v240
  %v787 = vpop.f32.mrf.mxu0
  %v788 = vadd.f32 1e-05, %v787
  %v789 = vpop.f32.mrf.mxu0
  %790 = vmatprep.mubr.f32.mxu0 0.0
  %791 = vmatmul.mubr.f32.gmra.mxu0 %v243
  %v792 = vpop.f32.mrf.mxu0
  %v793 = vadd.f32 1e-05, %v792
  %v794 = vpop.f32.mrf.mxu0
  %795 = vmatprep.mubr.f32.mxu0 0.0
  %796 = vmatmul.mubr.f32.gmra.mxu0 %v246
  %v797 = vpop.f32.mrf.mxu0
  %v798 = vadd.f32 1e-05, %v797
  %v799 = vpop.f32.mrf.mxu0
  %800 = vmatprep.mubr.f32.mxu0 0.0
  %801 = vmatmul.mubr.f32.gmra.mxu0 %v249
  %v802 = vpop.f32.mrf.mxu0
  %v803 = vadd.f32 1e-05, %v802
  %v804 = vpop.f32.mrf.mxu0
  %805 = vmatprep.mubr.f32.mxu0 0.0
  %806 = vmatmul.mubr.f32.gmra.mxu0 %v252
  %v807 = vpop.f32.mrf.mxu0
  %v808 = vadd.f32 1e-05, %v807
  %v809 = vpop.f32.mrf.mxu0
  %810 = vmatprep.mubr.f32.mxu0 0.0
  %811 = vmatmul.mubr.f32.gmra.mxu0 %v255
  %v812 = vpop.f32.mrf.mxu0
  %v813 = vadd.f32 1e-05, %v812
  %v814 = vpop.f32.mrf.mxu0
  %815 = vmatprep.mubr.f32.mxu0 0.0
  %816 = vmatmul.mubr.f32.gmra.mxu0 %v258
  %v817 = vpop.f32.mrf.mxu0
  %v818 = vadd.f32 1e-05, %v817
  %v819 = vpop.f32.mrf.mxu0
  %820 = vmatprep.mubr.f32.mxu0 0.0
  %821 = vmatmul.mubr.f32.gmra.mxu0 %v261
  %v822 = vpop.f32.mrf.mxu0
  %v823 = vadd.f32 1e-05, %v822
  %v824 = vpop.f32.mrf.mxu0
  %825 = vmatprep.mubr.f32.mxu0 0.0
  %826 = vmatmul.mubr.f32.gmra.mxu0 %v264
  %v827 = vpop.f32.mrf.mxu0
  %v828 = vadd.f32 1e-05, %v827
  %v829 = vpop.f32.mrf.mxu0
  %830 = vmatprep.mubr.f32.mxu0 0.0
  %831 = vmatmul.mubr.f32.gmra.mxu0 %v267
  %v832 = vpop.f32.mrf.mxu0
  %v833 = vadd.f32 1e-05, %v832
  %v834 = vpop.f32.mrf.mxu0
  %835 = vmatprep.mubr.f32.mxu0 0.0
  %836 = vmatmul.mubr.f32.gmra.mxu0 %v270
  %v837 = vpop.f32.mrf.mxu0
  %v838 = vadd.f32 1e-05, %v837
  %v839 = vpop.f32.mrf.mxu0
  %840 = vmatprep.mubr.f32.mxu0 0.0
  %841 = vmatmul.mubr.f32.gmra.mxu0 %v273
  %v842 = vpop.f32.mrf.mxu0
  %v843 = vadd.f32 1e-05, %v842
  %v844 = vpop.f32.mrf.mxu0
  %845 = vmatprep.mubr.f32.mxu0 0.0
  %846 = vmatmul.mubr.f32.gmra.mxu0 %v276
  %v847 = vpop.f32.mrf.mxu0
  %v848 = vadd.f32 1e-05, %v847
  %v849 = vpop.f32.mrf.mxu0
  %850 = vmatprep.mubr.f32.mxu0 0.0
  %851 = vmatmul.mubr.f32.gmra.mxu0 %v279
  %v852 = vpop.f32.mrf.mxu0
  %v853 = vadd.f32 1e-05, %v852
  %v854 = vpop.f32.mrf.mxu0
  %855 = vmatprep.mubr.f32.mxu0 0.0
  %856 = vmatmul.mubr.f32.gmra.mxu0 %v282
  %v857 = vpop.f32.mrf.mxu0
  %v858 = vadd.f32 1e-05, %v857
  %v859 = vpop.f32.mrf.mxu0
  %860 = vmatprep.mubr.f32.mxu0 0.0
  %861 = vmatmul.mubr.f32.gmra.mxu0 %v285
  %v862 = vpop.f32.mrf.mxu0
  %v863 = vadd.f32 1e-05, %v862
  %v864 = vpop.f32.mrf.mxu0
  %865 = vmatprep.mubr.f32.mxu0 0.0
  %866 = vmatmul.mubr.f32.gmra.mxu0 %v288
  %v867 = vpop.f32.mrf.mxu0
  %v868 = vadd.f32 1e-05, %v867
  %v869 = vpop.f32.mrf.mxu0
  %870 = vmatprep.mubr.f32.mxu0 0.0
  %871 = vmatmul.mubr.f32.gmra.mxu0 %v291
  %v872 = vpop.f32.mrf.mxu0
  %v873 = vadd.f32 1e-05, %v872
  %v874 = vpop.f32.mrf.mxu0
  %875 = vmatprep.mubr.f32.mxu0 0.0
  %876 = vmatmul.mubr.f32.gmra.mxu0 %v294
  %v877 = vpop.f32.mrf.mxu0
  %v878 = vadd.f32 1e-05, %v877
  %v879 = vpop.f32.mrf.mxu0
  %880 = vdwg.mxu0
  %v881 = vrsqrt.pop %v723
  %v882 = vrsqrt.pop %v728
  %v883 = vrsqrt.pop %v733
  %v884 = vrsqrt.pop %v738
  %v885 = vrsqrt.pop %v743
  %v886 = vrsqrt.pop %v748
  %v887 = vrsqrt.pop %v753
  %v888 = vrsqrt.pop %v758
  %v889 = vrsqrt.pop %v763
  %v890 = vrsqrt.pop %v768
  %v891 = vrsqrt.pop %v773
  %v892 = vrsqrt.pop %v778
  %v893 = vrsqrt.pop %v783
  %v894 = vrsqrt.pop %v788
  %v895 = vrsqrt.pop %v793
  %v896 = vrsqrt.pop %v798
  %v897 = vrsqrt.pop %v803
  %v898 = vrsqrt.pop %v808
  %v899 = vrsqrt.pop %v813
  %v900 = vrsqrt.pop %v818
  %v901 = vrsqrt.pop %v823
  %v902 = vrsqrt.pop %v828
  %v903 = vrsqrt.pop %v833
  %v904 = vrsqrt.pop %v838
  %v905 = vrsqrt.pop %v843
  %v906 = vrsqrt.pop %v848
  %v907 = vrsqrt.pop %v853
  %v908 = vrsqrt.pop %v858
  %v909 = vrsqrt.pop %v863
  %v910 = vrsqrt.pop %v868
  %v911 = vrsqrt.pop %v873
  %v912 = vrsqrt.pop %v878
  %v913 = vmul.f32 %v521, %v881
  %v914 = vmul.f32 %v522, %v882
  %v915 = vmul.f32 %v523, %v883
  %v916 = vmul.f32 %v524, %v884
  %v917 = vmul.f32 %v525, %v885
  %v918 = vmul.f32 %v526, %v886
  %v919 = vmul.f32 %v527, %v887
  %v920 = vmul.f32 %v528, %v888
  %v921 = vmul.f32 %v529, %v889
  %v922 = vmul.f32 %v530, %v890
  %v923 = vmul.f32 %v531, %v891
  %v924 = vmul.f32 %v532, %v892
  %v925 = vmul.f32 %v533, %v893
  %v926 = vmul.f32 %v534, %v894
  %v927 = vmul.f32 %v535, %v895
  %v928 = vmul.f32 %v536, %v896
  %v929 = vmul.f32 %v537, %v897
  %v930 = vmul.f32 %v538, %v898
  %v931 = vmul.f32 %v539, %v899
  %v932 = vmul.f32 %v540, %v900
  %v933 = vmul.f32 %v541, %v901
  %v934 = vmul.f32 %v542, %v902
  %v935 = vmul.f32 %v543, %v903
  %v936 = vmul.f32 %v544, %v904
  %v937 = vmul.f32 %v545, %v905
  %v938 = vmul.f32 %v546, %v906
  %v939 = vmul.f32 %v547, %v907
  %v940 = vmul.f32 %v548, %v908
  %v941 = vmul.f32 %v549, %v909
  %v942 = vmul.f32 %v550, %v910
  %v943 = vmul.f32 %v551, %v911
  %v944 = vmul.f32 %v552, %v912
  %s945 = sld [smem:[#allocation2]]
  %v946 = vstv %s945
  %v947 = vmul.f32 %v913, %v946
  %v948 = vmul.f32 %v914, %v946
  %v949 = vmul.f32 %v915, %v946
  %v950 = vmul.f32 %v916, %v946
  %v951 = vmul.f32 %v917, %v946
  %v952 = vmul.f32 %v918, %v946
  %v953 = vmul.f32 %v919, %v946
  %v954 = vmul.f32 %v920, %v946
  %v955 = vmul.f32 %v921, %v946
  %v956 = vmul.f32 %v922, %v946
  %v957 = vmul.f32 %v923, %v946
  %v958 = vmul.f32 %v924, %v946
  %v959 = vmul.f32 %v925, %v946
  %v960 = vmul.f32 %v926, %v946
  %v961 = vmul.f32 %v927, %v946
  %v962 = vmul.f32 %v928, %v946
  %v963 = vmul.f32 %v929, %v946
  %v964 = vmul.f32 %v930, %v946
  %v965 = vmul.f32 %v931, %v946
  %v966 = vmul.f32 %v932, %v946
  %v967 = vmul.f32 %v933, %v946
  %v968 = vmul.f32 %v934, %v946
  %v969 = vmul.f32 %v935, %v946
  %v970 = vmul.f32 %v936, %v946
  %v971 = vmul.f32 %v937, %v946
  %v972 = vmul.f32 %v938, %v946
  %v973 = vmul.f32 %v939, %v946
  %v974 = vmul.f32 %v940, %v946
  %v975 = vmul.f32 %v941, %v946
  %v976 = vmul.f32 %v942, %v946
  %v977 = vmul.f32 %v943, %v946
  %v978 = vmul.f32 %v944, %v946
  %s979 = sld [smem:[#allocation3]]
  %v980 = vstv %s979
  %v981 = vadd.f32 %v947, %v980
  %v982 = vadd.f32 %v948, %v980
  %v983 = vadd.f32 %v949, %v980
  %v984 = vadd.f32 %v950, %v980
  %v985 = vadd.f32 %v951, %v980
  %v986 = vadd.f32 %v952, %v980
  %v987 = vadd.f32 %v953, %v980
  %v988 = vadd.f32 %v954, %v980
  %v989 = vadd.f32 %v955, %v980
  %v990 = vadd.f32 %v956, %v980
  %v991 = vadd.f32 %v957, %v980
  %v992 = vadd.f32 %v958, %v980
  %v993 = vadd.f32 %v959, %v980
  %v994 = vadd.f32 %v960, %v980
  %v995 = vadd.f32 %v961, %v980
  %v996 = vadd.f32 %v962, %v980
  %v997 = vadd.f32 %v963, %v980
  %v998 = vadd.f32 %v964, %v980
  %v999 = vadd.f32 %v965, %v980
  %v1000 = vadd.f32 %v966, %v980
  %v1001 = vadd.f32 %v967, %v980
  %v1002 = vadd.f32 %v968, %v980
  %v1003 = vadd.f32 %v969, %v980
  %v1004 = vadd.f32 %v970, %v980
  %v1005 = vadd.f32 %v971, %v980
  %v1006 = vadd.f32 %v972, %v980
  %v1007 = vadd.f32 %v973, %v980
  %v1008 = vadd.f32 %v974, %v980
  %v1009 = vadd.f32 %v975, %v980
  %v1010 = vadd.f32 %v976, %v980
  %v1011 = vadd.f32 %v977, %v980
  %v1012 = vadd.f32 %v978, %v980
  %1013 = vst [vmem:[%s5] sm:$0xff] %v981
  %1014 = vst [vmem:[%s5 + $0x8] sm:$0xff] %v982
  %1015 = vst [vmem:[%s5 + $0x10] sm:$0xff] %v983
  %1016 = vst [vmem:[%s5 + $0x18] sm:$0xff] %v984
  %1017 = vst [vmem:[%s5 + $0x20] sm:$0xff] %v985
  %1018 = vst [vmem:[%s5 + $0x28] sm:$0xff] %v986
  %1019 = vst [vmem:[%s5 + $0x30] sm:$0xff] %v987
  %1020 = vst [vmem:[%s5 + $0x38] sm:$0xff] %v988
  %1021 = vst [vmem:[%s5 + $0x40] sm:$0xff] %v989
  %1022 = vst [vmem:[%s5 + $0x48] sm:$0xff] %v990
  %1023 = vst [vmem:[%s5 + $0x50] sm:$0xff] %v991
  %1024 = vst [vmem:[%s5 + $0x58] sm:$0xff] %v992
  %1025 = vst [vmem:[%s5 + $0x60] sm:$0xff] %v993
  %1026 = vst [vmem:[%s5 + $0x68] sm:$0xff] %v994
  %1027 = vst [vmem:[%s5 + $0x70] sm:$0xff] %v995
  %1028 = vst [vmem:[%s5 + $0x78] sm:$0xff] %v996
  %1029 = vst [vmem:[%s5 + $0x80] sm:$0xff] %v997
  %1030 = vst [vmem:[%s5 + $0x88] sm:$0xff] %v998
  %1031 = vst [vmem:[%s5 + $0x90] sm:$0xff] %v999
  %1032 = vst [vmem:[%s5 + $0x98] sm:$0xff] %v1000
  %1033 = vst [vmem:[%s5 + $0xa0] sm:$0xff] %v1001
  %1034 = vst [vmem:[%s5 + $0xa8] sm:$0xff] %v1002
  %1035 = vst [vmem:[%s5 + $0xb0] sm:$0xff] %v1003
  %1036 = vst [vmem:[%s5 + $0xb8] sm:$0xff] %v1004
  %1037 = vst [vmem:[%s5 + $0xc0] sm:$0xff] %v1005
  %1038 = vst [vmem:[%s5 + $0xc8] sm:$0xff] %v1006
  %1039 = vst [vmem:[%s5 + $0xd0] sm:$0xff] %v1007
  %1040 = vst [vmem:[%s5 + $0xd8] sm:$0xff] %v1008
  %1041 = vst [vmem:[%s5 + $0xe0] sm:$0xff] %v1009
  %1042 = vst [vmem:[%s5 + $0xe8] sm:$0xff] %v1010
  %1043 = vst [vmem:[%s5 + $0xf0] sm:$0xff] %v1011
  %1044 = vst [vmem:[%s5 + $0xf8] sm:$0xff] %v1012
  // Predicated region
  $region22: #{_lambda_.8} parent=0 // pred_check
    _
  $region23: #{_lambda_.8} parent=0 // pred_check_branch
    %1046 = sbr.rel (0) target = $region25
  $region24: #{_lambda_.8} parent=0 // pred_region
    _
  $region25: #{_lambda_.8} parent=0 // pred_fallthru
    _
  // Predicated region
  $region26: #{_lambda_.8} parent=0 // pred_check
    _
  $region27: #{_lambda_.8} parent=0 // pred_check_branch
    %1048 = sbr.rel (0) target = $region29
  $region28: #{_lambda_.8} parent=0 // pred_region
    _
  $region29: #{_lambda_.8} parent=0 // pred_fallthru
    _

// kernel: _lambda_.10
$region0: #{_lambda_.10}
  #allocation0 [shape = 'u32[]', space=smem, size = 0x4, offset = 0x4, fixed_abs, tag = 'smem constant byte address 0x4 - core index']
  #allocation1 [shape = 'u32[144,128]{1,0:T(1,128)}', space=vmem, size = 0x12000, scoped, tag = 'internal scratch']
  #allocation2 [shape = 'f32[128,128]{1,0:T(8,128)}', space=vmem, size = 0x10000, scoped, tag = 'scratch operand']
  %s0 = inlined_call_operand.vmem [shape: f32[256,256], index: 0, kind: input, shape index: {}]
  %s1 = inlined_call_operand.vmem [shape: f32[256,128], index: 1, kind: input, shape index: {}]
  %s2 = inlined_call_operand.vmem [shape: f32[1,128], index: 2, kind: input, shape index: {}]
  %s3 = inlined_call_operand.vmem [shape: f32[256,128], index: 3, kind: output, shape index: {}]
  %s4 = sld [smem:[#allocation0]]
  $region91: #{_lambda_.10} parent=0
    _
  %s6 = ssub.s32 1, %s4
  %s7 = scalar_select 0, %s6, %s4
  $region1: #{_lambda_.10} parent=0
    #allocation3 [shape = 'u8[131072]{0}', space=vmem, size = 0x20000, scoped, tag = 'input window, operand 0']
    loop: start=0, step=1, limit=6
    $region2: #{_lambda_.10} parent=1 // loop_pre_header
      _
    $region3: #{_lambda_.10} parent=1 // loop_header
      %s9 = sphi 0, %s13
      %p10 = scmp.ge.s32.totalorder %s9, 6
      %s16 = sphi 0, %s28
      %s17 = sphi 0, %s24
      %s18 = sphi 0, %s16
      %s19 = sphi 0, %s17
      %s20 = sphi 0, %s18
      %s21 = sphi 0, %s19
      %s33 = sphi 0, %s35
      %s36 = sphi 0, %s33
      %s37 = sphi 0, %s36
      %s53 = sphi 0, %s37
      %s59 = sphi 0, %s61
      %s62 = sphi 0, %s59
      %s63 = sphi 0, %s62
      %s79 = sphi 0, %s63
      %s83 = sphi 0, %s83
      %s85 = sphi 0, %s83
      %s86 = sphi 0, %s85
      %s100 = sphi 0, %s86
      %s106 = sphi 0, %s108
      %s109 = sphi 0, %s106
      %s110 = sphi 0, %s109
      %s126 = sphi 0, %s110
    $region4: #{_lambda_.10} parent=1 // loop_header_branch
      %12 = sbr.rel (%p10) target = $region8
    $region5: #{_lambda_.10} parent=1 // loop_body
      %s14 = ssub.s32 %s9, 1
      %s15 = ssub.s32 %s9, 2
      %s22 = sadd.s32 1, %s17
      %p23 = scmp.ge.s32.totalorder %s22, 2
      %s24 = scalar_select %p23, 0, %s22
      %s25 = sadd.s32 1, %s16
      %s26 = scalar_select %p23, %s25, %s16
      %p27 = scmp.ge.s32.totalorder %s26, 2
      %s28 = scalar_select %p27, 0, %s26
      %s29 = ssub.s32 %s16, %s28
      %s30 = ssub.s32 %s17, %s24
      %s31 = sor.u32 %s29, %s30
      %p32 = scmp.eq.s32.totalorder %s31, 0
      %s34 = sadd.s32 %s33, 1
      %s35 = scalar_select %p32, %s33, %s34
      %p38 = pneg %p32
      %p39 = scmp.eq.s32.totalorder %s9, 3
      %p40 = por %p38, %p39
      %p41 = scmp.ne.s32.totalorder %s33, %s36
      %p42 = scmp.eq.s32.totalorder %s9, 0
      %p43 = por %p41, %p42
      %p44 = scmp.ne.s32.totalorder %s33, %s36
      %p45 = scmp.eq.s32.totalorder %s14, 3
      %p46 = por %p44, %p45
      %p47 = scmp.ne.s32.totalorder %s36, %s37
      %p48 = scmp.eq.s32.totalorder %s14, 0
      %p49 = por %p47, %p48
      %p50 = scmp.ne.s32.totalorder %s36, %s37
      %p51 = scmp.eq.s32.totalorder %s15, 3
      %p52 = por %p50, %p51
      %p54 = scmp.ne.s32.totalorder %s37, %s53
      %p55 = scmp.eq.s32.totalorder %s15, 0
      %p56 = por %p54, %p55
      %s57 = ssub.s32 %s17, %s24
      %p58 = scmp.eq.s32.totalorder %s57, 0
      %s60 = sadd.s32 %s59, 1
      %s61 = scalar_select %p58, %s59, %s60
      %p64 = pneg %p58
      %p65 = scmp.eq.s32.totalorder %s9, 3
      %p66 = por %p64, %p65
      %p67 = scmp.ne.s32.totalorder %s59, %s62
      %p68 = scmp.eq.s32.totalorder %s9, 0
      %p69 = por %p67, %p68
      %p70 = scmp.ne.s32.totalorder %s59, %s62
      %p71 = scmp.eq.s32.totalorder %s14, 3
      %p72 = por %p70, %p71
      %p73 = scmp.ne.s32.totalorder %s62, %s63
      %p74 = scmp.eq.s32.totalorder %s14, 0
      %p75 = por %p73, %p74
      %p76 = scmp.ne.s32.totalorder %s62, %s63
      %p77 = scmp.eq.s32.totalorder %s15, 3
      %p78 = por %p76, %p77
      %p80 = scmp.ne.s32.totalorder %s63, %s79
      %p81 = scmp.eq.s32.totalorder %s15, 0
      %p82 = por %p80, %p81
      %s84 = sadd.s32 %s83, 1
      %p87 = scmp.eq.s32.totalorder %s9, 3
      %p88 = scmp.ne.s32.totalorder %s83, %s85
      %p89 = scmp.eq.s32.totalorder %s9, 0
      %p90 = por %p88, %p89
      %p91 = scmp.ne.s32.totalorder %s83, %s85
      %p92 = scmp.eq.s32.totalorder %s14, 3
      %p93 = por %p91, %p92
      %p94 = scmp.ne.s32.totalorder %s85, %s86
      %p95 = scmp.eq.s32.totalorder %s14, 0
      %p96 = por %p94, %p95
      %p97 = scmp.ne.s32.totalorder %s85, %s86
      %p98 = scmp.eq.s32.totalorder %s15, 3
      %p99 = por %p97, %p98
      %p101 = scmp.ne.s32.totalorder %s86, %s100
      %p102 = scmp.eq.s32.totalorder %s15, 0
      %p103 = por %p101, %p102
      %s104 = ssub.s32 %s16, %s28
      %p105 = scmp.eq.s32.totalorder %s104, 0
      %s107 = sadd.s32 %s106, 1
      %s108 = scalar_select %p105, %s106, %s107
      %p111 = pneg %p105
      %p112 = scmp.eq.s32.totalorder %s9, 3
      %p113 = por %p111, %p112
      %p114 = scmp.ne.s32.totalorder %s106, %s109
      %p115 = scmp.eq.s32.totalorder %s9, 0
      %p116 = por %p114, %p115
      %p117 = scmp.ne.s32.totalorder %s106, %s109
      %p118 = scmp.eq.s32.totalorder %s14, 3
      %p119 = por %p117, %p118
      %p120 = scmp.ne.s32.totalorder %s109, %s110
      %p121 = scmp.eq.s32.totalorder %s14, 0
      %p122 = por %p120, %p121
      %p123 = scmp.ne.s32.totalorder %s109, %s110
      %p124 = scmp.eq.s32.totalorder %s15, 3
      %p125 = por %p123, %p124
      %p127 = scmp.ne.s32.totalorder %s110, %s126
      %p128 = scmp.eq.s32.totalorder %s15, 0
      %p129 = por %p127, %p128
      %p130 = scmp.le.s32.totalorder 1, %s9
      %p131 = scmp.lt.s32.totalorder %s9, 5
      %p132 = pnand %p130, %p131
      %p133 = pneg %p132
      // Predicated region
      $region9: #{_lambda_.10} parent=5 // pred_check
        _
      $region10: #{_lambda_.10} parent=5 // pred_check_branch
        %135 = sbr.rel (%p132) target = $region12
      $region11: #{_lambda_.10} parent=5 // pred_region
        %s136 = ssub.s32 %s9, 1
        // Predicated region
        $region13: #{_lambda_.10} parent=11 // pred_check
          %p137 = pneg %p96
        $region14: #{_lambda_.10} parent=11 // pred_check_branch
          %139 = sbr.rel (%p137) target = $region16
        $region15: #{_lambda_.10} parent=11 // pred_region
          _
        $region16: #{_lambda_.10} parent=11 // pred_fallthru
          _
      $region12: #{_lambda_.10} parent=5 // pred_fallthru
        _
      %p140 = scmp.lt.s32.totalorder %s9, 4
      // Predicated region
      $region17: #{_lambda_.10} parent=5 // pred_check
        %p141 = pneg %p140
      $region18: #{_lambda_.10} parent=5 // pred_check_branch
        %143 = sbr.rel (%p141) target = $region20
      $region19: #{_lambda_.10} parent=5 // pred_region
        // Predicated region
        $region21: #{_lambda_.10} parent=19 // pred_check
          %p144 = pneg %p43
        $region22: #{_lambda_.10} parent=19 // pred_check_branch
          %146 = sbr.rel (%p144) target = $region24
        $region23: #{_lambda_.10} parent=19 // pred_region
          %s147 = sand.u32 %s33, 1
          %s148 = sand.u32 %s33, 1
          %s149 = smul.addr %s148, 128
          %s150 = scalar_lea.vmem [#allocation3], %s149
          %s151 = smul.u32 16, %s16
          %s152 = smul.addr %s151, 2
          %s153 = sadd.s32 %s17, %s152
          %s154 = smul.addr %s153, 8
          %s155 = scalar_lea.vmem %s0, %s154
          // Predicated region
          $region25: #{_lambda_.10} parent=23 // pred_check
            _
          $region26: #{_lambda_.10} parent=23 // pred_check_branch
            %157 = sbr.rel (0) target = $region28
          $region27: #{_lambda_.10} parent=23 // pred_region
            // Predicated region
            $region29: #{_lambda_.10} parent=27 // pred_check
              _
            $region30: #{_lambda_.10} parent=27 // pred_check_branch
              %159 = sbr.rel (0) target = $region32
            $region31: #{_lambda_.10} parent=27 // pred_region
              // Predicated region
              $region44: #{_lambda_.10} parent=31 // pred_check
                _
              $region45: #{_lambda_.10} parent=31 // pred_check_branch
                %205 = sbr.rel (0) target = $region47
              $region46: #{_lambda_.10} parent=31 // pred_region
                loop: start=0, step=1, limit=1
                $region48: #{_lambda_.10} parent=46 // loop_pre_header
                  _
                $region49: #{_lambda_.10} parent=46 // loop_header
                  %s207 = sphi 0, %s211
                  %p208 = scmp.ge.s32.totalorder %s207, 1
                  %s212 = sphi %s155, %s155
                  %s213 = sphi %s150, %s150
                $region50: #{_lambda_.10} parent=46 // loop_header_branch
                  %210 = sbr.rel (%p208) target = $region54
                $region51: #{_lambda_.10} parent=46 // loop_body
                  %v214 = vld [vmem:[%s212] sm:$0xff]
                  %215 = vst [vmem:[%s213] sm:$0xff] %v214
                  %v216 = vld [vmem:[%s212 + $0x10] sm:$0xff]
                  %217 = vst [vmem:[%s213 + $0x8] sm:$0xff] %v216
                  %v218 = vld [vmem:[%s212 + $0x20] sm:$0xff]
                  %219 = vst [vmem:[%s213 + $0x10] sm:$0xff] %v218
                  %v220 = vld [vmem:[%s212 + $0x30] sm:$0xff]
                  %221 = vst [vmem:[%s213 + $0x18] sm:$0xff] %v220
                  %v222 = vld [vmem:[%s212 + $0x40] sm:$0xff]
                  %223 = vst [vmem:[%s213 + $0x20] sm:$0xff] %v222
                  %v224 = vld [vmem:[%s212 + $0x50] sm:$0xff]
                  %225 = vst [vmem:[%s213 + $0x28] sm:$0xff] %v224
                  %v226 = vld [vmem:[%s212 + $0x60] sm:$0xff]
                  %227 = vst [vmem:[%s213 + $0x30] sm:$0xff] %v226
                  %v228 = vld [vmem:[%s212 + $0x70] sm:$0xff]
                  %229 = vst [vmem:[%s213 + $0x38] sm:$0xff] %v228
                  %v230 = vld [vmem:[%s212 + $0x80] sm:$0xff]
                  %231 = vst [vmem:[%s213 + $0x40] sm:$0xff] %v230
                  %v232 = vld [vmem:[%s212 + $0x90] sm:$0xff]
                  %233 = vst [vmem:[%s213 + $0x48] sm:$0xff] %v232
                  %v234 = vld [vmem:[%s212 + $0xa0] sm:$0xff]
                  %235 = vst [vmem:[%s213 + $0x50] sm:$0xff] %v234
                  %v236 = vld [vmem:[%s212 + $0xb0] sm:$0xff]
                  %237 = vst [vmem:[%s213 + $0x58] sm:$0xff] %v236
                  %v238 = vld [vmem:[%s212 + $0xc0] sm:$0xff]
                  %239 = vst [vmem:[%s213 + $0x60] sm:$0xff] %v238
                  %v240 = vld [vmem:[%s212 + $0xd0] sm:$0xff]
                  %241 = vst [vmem:[%s213 + $0x68] sm:$0xff] %v240
                  %v242 = vld [vmem:[%s212 + $0xe0] sm:$0xff]
                  %243 = vst [vmem:[%s213 + $0x70] sm:$0xff] %v242
                  %v244 = vld [vmem:[%s212 + $0xf0] sm:$0xff]
                  %245 = vst [vmem:[%s213 + $0x78] sm:$0xff] %v244
                $region52: #{_lambda_.10} parent=46 // loop_footer
                  %s211 = sadd.s32 1, %s207
                $region53: #{_lambda_.10} parent=46 // loop_footer_branch
                  %206 = sbr.rel target = $region49
                $region54: #{_lambda_.10} parent=46 // loop_exit
                  _
              $region47: #{_lambda_.10} parent=31 // pred_fallthru
                _
              // Predicated region
              $region55: #{_lambda_.10} parent=31 // pred_check
                _
              $region56: #{_lambda_.10} parent=31 // pred_check_branch
                %247 = sbr.rel target = $region58
              $region57: #{_lambda_.10} parent=31 // pred_region
                _
              $region58: #{_lambda_.10} parent=31 // pred_fallthru
                _
            $region32: #{_lambda_.10} parent=27 // pred_fallthru
              _
            // Predicated region
            $region33: #{_lambda_.10} parent=27 // pred_check
              _
            $region34: #{_lambda_.10} parent=27 // pred_check_branch
              %161 = sbr.rel target = $region36
            $region35: #{_lambda_.10} parent=27 // pred_region
              %s163 = ssub.s32 256, 1
              loop: start=0, step=1, limit=1
              $region37: #{_lambda_.10} parent=35 // loop_pre_header
                _
              $region38: #{_lambda_.10} parent=35 // loop_header
                %s165 = sphi 0, %s169
                %p166 = scmp.ge.s32.totalorder %s165, 1
                %s170 = sphi %s155, %s155
                %s171 = sphi %s150, %s150
              $region39: #{_lambda_.10} parent=35 // loop_header_branch
                %168 = sbr.rel (%p166) target = $region43
              $region40: #{_lambda_.10} parent=35 // loop_body
                %v172 = vld [vmem:[%s170] sm:%s163]
                %173 = vst [vmem:[%s171] sm:%s163] %v172
                %v174 = vld [vmem:[%s170 + $0x10] sm:%s163]
                %175 = vst [vmem:[%s171 + $0x8] sm:%s163] %v174
                %v176 = vld [vmem:[%s170 + $0x20] sm:%s163]
                %177 = vst [vmem:[%s171 + $0x10] sm:%s163] %v176
                %v178 = vld [vmem:[%s170 + $0x30] sm:%s163]
                %179 = vst [vmem:[%s171 + $0x18] sm:%s163] %v178
                %v180 = vld [vmem:[%s170 + $0x40] sm:%s163]
                %181 = vst [vmem:[%s171 + $0x20] sm:%s163] %v180
                %v182 = vld [vmem:[%s170 + $0x50] sm:%s163]
                %183 = vst [vmem:[%s171 + $0x28] sm:%s163] %v182
                %v184 = vld [vmem:[%s170 + $0x60] sm:%s163]
                %185 = vst [vmem:[%s171 + $0x30] sm:%s163] %v184
                %v186 = vld [vmem:[%s170 + $0x70] sm:%s163]
                %187 = vst [vmem:[%s171 + $0x38] sm:%s163] %v186
                %v188 = vld [vmem:[%s170 + $0x80] sm:%s163]
                %189 = vst [vmem:[%s171 + $0x40] sm:%s163] %v188
                %v190 = vld [vmem:[%s170 + $0x90] sm:%s163]
                %191 = vst [vmem:[%s171 + $0x48] sm:%s163] %v190
                %v192 = vld [vmem:[%s170 + $0xa0] sm:%s163]
                %193 = vst [vmem:[%s171 + $0x50] sm:%s163] %v192
                %v194 = vld [vmem:[%s170 + $0xb0] sm:%s163]
                %195 = vst [vmem:[%s171 + $0x58] sm:%s163] %v194
                %v196 = vld [vmem:[%s170 + $0xc0] sm:%s163]
                %197 = vst [vmem:[%s171 + $0x60] sm:%s163] %v196
                %v198 = vld [vmem:[%s170 + $0xd0] sm:%s163]
                %199 = vst [vmem:[%s171 + $0x68] sm:%s163] %v198
                %v200 = vld [vmem:[%s170 + $0xe0] sm:%s163]
                %201 = vst [vmem:[%s171 + $0x70] sm:%s163] %v200
                %v202 = vld [vmem:[%s170 + $0xf0] sm:%s163]
                %203 = vst [vmem:[%s171 + $0x78] sm:%s163] %v202
              $region41: #{_lambda_.10} parent=35 // loop_footer
                %s169 = sadd.s32 1, %s165
              $region42: #{_lambda_.10} parent=35 // loop_footer_branch
                %164 = sbr.rel target = $region38
              $region43: #{_lambda_.10} parent=35 // loop_exit
                _
            $region36: #{_lambda_.10} parent=27 // pred_fallthru
              _
          $region28: #{_lambda_.10} parent=23 // pred_fallthru
            _
          %248 = vnop
        $region24: #{_lambda_.10} parent=19 // pred_fallthru
          _
        // Predicated region
        $region59: #{_lambda_.10} parent=19 // pred_check
          %p249 = pneg %p69
        $region60: #{_lambda_.10} parent=19 // pred_check_branch
          %251 = sbr.rel (%p249) target = $region62
        $region61: #{_lambda_.10} parent=19 // pred_region
          %s252 = smul.u32 16, %s17
          %p253 = scmp.lt.s32.totalorder %s252, 31
          %s254 = scalar_select %p253, %s252, 31
          %s255 = smul.addr %s254, 8
          %s256 = scalar_lea.vmem %s1, %s255
          %s257 = smul.u32 16, %s17
        $region62: #{_lambda_.10} parent=19 // pred_fallthru
          _
      $region20: #{_lambda_.10} parent=5 // pred_fallthru
        _
      %p258 = scmp.le.s32.totalorder 1, %s9
      %p259 = scmp.lt.s32.totalorder %s9, 5
      %p260 = pnand %p258, %p259
      %p261 = pneg %p260
      // Predicated region
      $region63: #{_lambda_.10} parent=5 // pred_check
        _
      $region64: #{_lambda_.10} parent=5 // pred_check_branch
        %263 = sbr.rel (%p260) target = $region66
      $region65: #{_lambda_.10} parent=5 // pred_region
        %s264 = ssub.s32 %s9, 1
        %s265 = sand.u32 %s36, 1
        %s266 = sand.u32 %s36, 1
        %s267 = smul.addr %s266, 128
        %s268 = scalar_lea.vmem [#allocation3], %s267
        // Predicated region
        $region67: #{_lambda_.10} parent=65 // pred_check
          %p269 = pneg %p49
        $region68: #{_lambda_.10} parent=65 // pred_check_branch
          %271 = sbr.rel (%p269) target = $region70
        $region69: #{_lambda_.10} parent=65 // pred_region
          _
        $region70: #{_lambda_.10} parent=65 // pred_fallthru
          _
        %s272 = sand.u32 %s36, 1
        %s273 = sand.u32 %s36, 1
        %s274 = smul.addr %s273, 128
        %s275 = scalar_lea.vmem [#allocation3], %s274
        %p276 = pneg %p49
        %p277 = pneg %p46
        %s278 = smul.u32 16, %s19
        %p279 = scmp.lt.s32.totalorder %s278, 31
        %s280 = scalar_select %p279, %s278, 31
        %s281 = smul.addr %s280, 8
        %s282 = scalar_lea.vmem %s1, %s281
        %p283 = pneg %p75
        %p284 = pneg %p72
        %p285 = pneg %p96
        %p286 = pneg %p93
        %p287 = pneg %p122
        %p288 = pneg %p119
        %s289 = smul.u32 16, %s18
        %p290 = scmp.lt.s32.totalorder %s289, 31
        %s291 = scalar_select %p290, %s289, 31
        %s292 = smul.addr %s291, 8
        %s293 = scalar_lea.vmem %s3, %s292
        %s294 = smul.u32 16, %s18
        %s295 = smul.u32 16, %s19
        %p296 = scmp.lt.s32.totalorder %s295, 31
        %s297 = scalar_select %p296, %s295, 31
        %s298 = smul.addr %s297, 8
        %s299 = scalar_lea.vmem %s1, %s298
        %s300 = smul.u32 16, %s19
        %s301 = smul.u32 16, %s18
        %p302 = scmp.lt.s32.totalorder %s301, 31
        %s303 = scalar_select %p302, %s301, 31
        %s304 = smul.addr %s303, 8
        %s305 = scalar_lea.vmem %s3, %s304
        %s306 = smul.u32 16, %s18
        %p307 = scmp.eq.s32.totalorder %s19, 0
        // Predicated region
        $region71: #{_lambda_.10} parent=65 // pred_check
          %p308 = pneg %p307
        $region72: #{_lambda_.10} parent=65 // pred_check_branch
          %310 = sbr.rel (%p308) target = $region74
        $region73: #{_lambda_.10} parent=65 // pred_region
          %311 = vst [vmem:[#allocation2] sm:$0xff] 0.0
          %312 = vst [vmem:[#allocation2 + $0x8] sm:$0xff] 0.0
          %313 = vst [vmem:[#allocation2 + $0x10] sm:$0xff] 0.0
          %314 = vst [vmem:[#allocation2 + $0x18] sm:$0xff] 0.0
          %315 = vst [vmem:[#allocation2 + $0x20] sm:$0xff] 0.0
          %316 = vst [vmem:[#allocation2 + $0x28] sm:$0xff] 0.0
          %317 = vst [vmem:[#allocation2 + $0x30] sm:$0xff] 0.0
          %318 = vst [vmem:[#allocation2 + $0x38] sm:$0xff] 0.0
          %319 = vst [vmem:[#allocation2 + $0x40] sm:$0xff] 0.0
          %320 = vst [vmem:[#allocation2 + $0x48] sm:$0xff] 0.0
          %321 = vst [vmem:[#allocation2 + $0x50] sm:$0xff] 0.0
          %322 = vst [vmem:[#allocation2 + $0x58] sm:$0xff] 0.0
          %323 = vst [vmem:[#allocation2 + $0x60] sm:$0xff] 0.0
          %324 = vst [vmem:[#allocation2 + $0x68] sm:$0xff] 0.0
          %325 = vst [vmem:[#allocation2 + $0x70] sm:$0xff] 0.0
          %326 = vst [vmem:[#allocation2 + $0x78] sm:$0xff] 0.0
        $region74: #{_lambda_.10} parent=65 // pred_fallthru
          _
        %v327 = vld [vmem:[#allocation2] sm:$0xff]
        %v328 = vld [vmem:[#allocation2 + $0x8] sm:$0xff]
        %v329 = vld [vmem:[#allocation2 + $0x10] sm:$0xff]
        %v330 = vld [vmem:[#allocation2 + $0x18] sm:$0xff]
        %v331 = vld [vmem:[#allocation2 + $0x20] sm:$0xff]
        %v332 = vld [vmem:[#allocation2 + $0x28] sm:$0xff]
        %v333 = vld [vmem:[#allocation2 + $0x30] sm:$0xff]
        %v334 = vld [vmem:[#allocation2 + $0x38] sm:$0xff]
        %v335 = vld [vmem:[#allocation2 + $0x40] sm:$0xff]
        %v336 = vld [vmem:[#allocation2 + $0x48] sm:$0xff]
        %v337 = vld [vmem:[#allocation2 + $0x50] sm:$0xff]
        %v338 = vld [vmem:[#allocation2 + $0x58] sm:$0xff]
        %v339 = vld [vmem:[#allocation2 + $0x60] sm:$0xff]
        %v340 = vld [vmem:[#allocation2 + $0x68] sm:$0xff]
        %v341 = vld [vmem:[#allocation2 + $0x70] sm:$0xff]
        %v342 = vld [vmem:[#allocation2 + $0x78] sm:$0xff]
        %v343 = vld [vmem:[%s268] sm:$0xff]
        %v344 = vld [vmem:[%s268 + $0x8] sm:$0xff]
        %v345 = vld [vmem:[%s268 + $0x10] sm:$0xff]
        %v346 = vld [vmem:[%s268 + $0x18] sm:$0xff]
        %v347 = vld [vmem:[%s268 + $0x20] sm:$0xff]
        %v348 = vld [vmem:[%s268 + $0x28] sm:$0xff]
        %v349 = vld [vmem:[%s268 + $0x30] sm:$0xff]
        %v350 = vld [vmem:[%s268 + $0x38] sm:$0xff]
        %v351 = vld [vmem:[%s268 + $0x40] sm:$0xff]
        %v352 = vld [vmem:[%s268 + $0x48] sm:$0xff]
        %v353 = vld [vmem:[%s268 + $0x50] sm:$0xff]
        %v354 = vld [vmem:[%s268 + $0x58] sm:$0xff]
        %v355 = vld [vmem:[%s268 + $0x60] sm:$0xff]
        %v356 = vld [vmem:[%s268 + $0x68] sm:$0xff]
        %v357 = vld [vmem:[%s268 + $0x70] sm:$0xff]
        %v358 = vld [vmem:[%s268 + $0x78] sm:$0xff]
        %v359 = vld [vmem:[%s299] sm:$0xff]
        %v360 = vld [vmem:[%s299 + $0x8] sm:$0xff]
        %v361 = vld [vmem:[%s299 + $0x10] sm:$0xff]
        %v362 = vld [vmem:[%s299 + $0x18] sm:$0xff]
        %v363 = vld [vmem:[%s299 + $0x20] sm:$0xff]
        %v364 = vld [vmem:[%s299 + $0x28] sm:$0xff]
        %v365 = vld [vmem:[%s299 + $0x30] sm:$0xff]
        %v366 = vld [vmem:[%s299 + $0x38] sm:$0xff]
        %v367 = vld [vmem:[%s299 + $0x40] sm:$0xff]
        %v368 = vld [vmem:[%s299 + $0x48] sm:$0xff]
        %v369 = vld [vmem:[%s299 + $0x50] sm:$0xff]
        %v370 = vld [vmem:[%s299 + $0x58] sm:$0xff]
        %v371 = vld [vmem:[%s299 + $0x60] sm:$0xff]
        %v372 = vld [vmem:[%s299 + $0x68] sm:$0xff]
        %v373 = vld [vmem:[%s299 + $0x70] sm:$0xff]
        %v374 = vld [vmem:[%s299 + $0x78] sm:$0xff]
        %375 = vmatprep.subr.mxu0 0.0
        %376 = vmatpush1.msra.mxu0 %v374
        %377 = vmatprep.subr.mxu0 0.0
        %378 = vmatpush1.msra.mxu0 %v373
        %379 = vmatprep.subr.mxu0 0.0
        %380 = vmatpush1.msra.mxu0 %v372
        %381 = vmatprep.subr.mxu0 0.0
        %382 = vmatpush1.msra.mxu0 %v371
        %383 = vmatprep.subr.mxu0 0.0
        %384 = vmatpush1.msra.mxu0 %v370
        %385 = vmatprep.subr.mxu0 0.0
        %386 = vmatpush1.msra.mxu0 %v369
        %387 = vmatprep.subr.mxu0 0.0
        %388 = vmatpush1.msra.mxu0 %v368
        %389 = vmatprep.subr.mxu0 0.0
        %390 = vmatpush1.msra.mxu0 %v367
        %391 = vmatprep.subr.mxu0 0.0
        %392 = vmatpush1.msra.mxu0 %v366
        %393 = vmatprep.subr.mxu0 0.0
        %394 = vmatpush1.msra.mxu0 %v365
        %395 = vmatprep.subr.mxu0 0.0
        %396 = vmatpush1.msra.mxu0 %v364
        %397 = vmatprep.subr.mxu0 0.0
        %398 = vmatpush1.msra.mxu0 %v363
        %399 = vmatprep.subr.mxu0 0.0
        %400 = vmatpush1.msra.mxu0 %v362
        %401 = vmatprep.subr.mxu0 0.0
        %402 = vmatpush1.msra.mxu0 %v361
        %403 = vmatprep.subr.mxu0 0.0
        %404 = vmatpush1.msra.mxu0 %v360
        %405 = vmatprep.subr.mxu0 0.0
        %406 = vmatpush1.msra.mxu0 %v359
        %407 = vmatprep.subr.mxu0 0.0
        %408 = vmatpush2.msra.mxu0 0.0
        %409 = vmatprep.subr.mxu0 0.0
        %410 = vmatpush2.msra.mxu0 0.0
        %411 = vmatprep.subr.mxu0 0.0
        %412 = vmatpush2.msra.mxu0 0.0
        %413 = vmatprep.subr.mxu0 0.0
        %414 = vmatpush2.msra.mxu0 0.0
        %415 = vmatprep.subr.mxu0 0.0
        %416 = vmatpush2.msra.mxu0 0.0
        %417 = vmatprep.subr.mxu0 0.0
        %418 = vmatpush2.msra.mxu0 0.0
        %419 = vmatprep.subr.mxu0 0.0
        %420 = vmatpush2.msra.mxu0 0.0
        %421 = vmatprep.subr.mxu0 0.0
        %422 = vmatpush2.msra.mxu0 0.0
        %423 = vmatprep.subr.mxu0 0.0
        %424 = vmatpush2.msra.mxu0 0.0
        %425 = vmatprep.subr.mxu0 0.0
        %426 = vmatpush2.msra.mxu0 0.0
        %427 = vmatprep.subr.mxu0 0.0
        %428 = vmatpush2.msra.mxu0 0.0
        %429 = vmatprep.subr.mxu0 0.0
        %430 = vmatpush2.msra.mxu0 0.0
        %431 = vmatprep.subr.mxu0 0.0
        %432 = vmatpush2.msra.mxu0 0.0
        %433 = vmatprep.subr.mxu0 0.0
        %434 = vmatpush2.msra.mxu0 0.0
        %435 = vmatprep.subr.mxu0 0.0
        %436 = vmatpush2.msra.mxu0 0.0
        %437 = vmatprep.subr.mxu0 0.0
        %438 = vmatpush2.msra.mxu0 0.0
        %439 = vmatprep.mubr.f32.mxu0 0.0
        %440 = vmatmul.mubr.f32.gmra.mxu0 %v343
        %v441 = vpop.f32.mrf.mxu0
        %v442 = vadd.f32 0.0, %v441
        %v443 = vpop.f32.mrf.mxu0
        %444 = vmatprep.mubr.f32.mxu0 0.0
        %445 = vmatmul.mubr.f32.gmra.mxu0 %v344
        %v446 = vpop.f32.mrf.mxu0
        %v447 = vadd.f32 0.0, %v446
        %v448 = vpop.f32.mrf.mxu0
        %449 = vmatprep.mubr.f32.mxu0 0.0
        %450 = vmatmul.mubr.f32.gmra.mxu0 %v345
        %v451 = vpop.f32.mrf.mxu0
        %v452 = vadd.f32 0.0, %v451
        %v453 = vpop.f32.mrf.mxu0
        %454 = vmatprep.mubr.f32.mxu0 0.0
        %455 = vmatmul.mubr.f32.gmra.mxu0 %v346
        %v456 = vpop.f32.mrf.mxu0
        %v457 = vadd.f32 0.0, %v456
        %v458 = vpop.f32.mrf.mxu0
        %459 = vmatprep.mubr.f32.mxu0 0.0
        %460 = vmatmul.mubr.f32.gmra.mxu0 %v347
        %v461 = vpop.f32.mrf.mxu0
        %v462 = vadd.f32 0.0, %v461
        %v463 = vpop.f32.mrf.mxu0
        %464 = vmatprep.mubr.f32.mxu0 0.0
        %465 = vmatmul.mubr.f32.gmra.mxu0 %v348
        %v466 = vpop.f32.mrf.mxu0
        %v467 = vadd.f32 0.0, %v466
        %v468 = vpop.f32.mrf.mxu0
        %469 = vmatprep.mubr.f32.mxu0 0.0
        %470 = vmatmul.mubr.f32.gmra.mxu0 %v349
        %v471 = vpop.f32.mrf.mxu0
        %v472 = vadd.f32 0.0, %v471
        %v473 = vpop.f32.mrf.mxu0
        %474 = vmatprep.mubr.f32.mxu0 0.0
        %475 = vmatmul.mubr.f32.gmra.mxu0 %v350
        %v476 = vpop.f32.mrf.mxu0
        %v477 = vadd.f32 0.0, %v476
        %v478 = vpop.f32.mrf.mxu0
        %479 = vmatprep.mubr.f32.mxu0 0.0
        %480 = vmatmul.mubr.f32.gmra.mxu0 %v351
        %v481 = vpop.f32.mrf.mxu0
        %v482 = vadd.f32 0.0, %v481
        %v483 = vpop.f32.mrf.mxu0
        %484 = vmatprep.mubr.f32.mxu0 0.0
        %485 = vmatmul.mubr.f32.gmra.mxu0 %v352
        %v486 = vpop.f32.mrf.mxu0
        %v487 = vadd.f32 0.0, %v486
        %v488 = vpop.f32.mrf.mxu0
        %489 = vmatprep.mubr.f32.mxu0 0.0
        %490 = vmatmul.mubr.f32.gmra.mxu0 %v353
        %v491 = vpop.f32.mrf.mxu0
        %v492 = vadd.f32 0.0, %v491
        %v493 = vpop.f32.mrf.mxu0
        %494 = vmatprep.mubr.f32.mxu0 0.0
        %495 = vmatmul.mubr.f32.gmra.mxu0 %v354
        %v496 = vpop.f32.mrf.mxu0
        %v497 = vadd.f32 0.0, %v496
        %v498 = vpop.f32.mrf.mxu0
        %499 = vmatprep.mubr.f32.mxu0 0.0
        %500 = vmatmul.mubr.f32.gmra.mxu0 %v355
        %v501 = vpop.f32.mrf.mxu0
        %v502 = vadd.f32 0.0, %v501
        %v503 = vpop.f32.mrf.mxu0
        %504 = vmatprep.mubr.f32.mxu0 0.0
        %505 = vmatmul.mubr.f32.gmra.mxu0 %v356
        %v506 = vpop.f32.mrf.mxu0
        %v507 = vadd.f32 0.0, %v506
        %v508 = vpop.f32.mrf.mxu0
        %509 = vmatprep.mubr.f32.mxu0 0.0
        %510 = vmatmul.mubr.f32.gmra.mxu0 %v357
        %v511 = vpop.f32.mrf.mxu0
        %v512 = vadd.f32 0.0, %v511
        %v513 = vpop.f32.mrf.mxu0
        %514 = vmatprep.mubr.f32.mxu0 0.0
        %515 = vmatmul.mubr.f32.gmra.mxu0 %v358
        %v516 = vpop.f32.mrf.mxu0
        %v517 = vadd.f32 0.0, %v516
        %v518 = vpop.f32.mrf.mxu0
        %519 = vdwg.mxu0
        %v520 = vadd.f32 %v327, %v442
        %v521 = vadd.f32 %v328, %v447
        %v522 = vadd.f32 %v329, %v452
        %v523 = vadd.f32 %v330, %v457
        %v524 = vadd.f32 %v331, %v462
        %v525 = vadd.f32 %v332, %v467
        %v526 = vadd.f32 %v333, %v472
        %v527 = vadd.f32 %v334, %v477
        %v528 = vadd.f32 %v335, %v482
        %v529 = vadd.f32 %v336, %v487
        %v530 = vadd.f32 %v337, %v492
        %v531 = vadd.f32 %v338, %v497
        %v532 = vadd.f32 %v339, %v502
        %v533 = vadd.f32 %v340, %v507
        %v534 = vadd.f32 %v341, %v512
        %v535 = vadd.f32 %v342, %v517
        %536 = vst [vmem:[#allocation2] sm:$0xff] %v520
        %537 = vst [vmem:[#allocation2 + $0x8] sm:$0xff] %v521
        %538 = vst [vmem:[#allocation2 + $0x10] sm:$0xff] %v522
        %539 = vst [vmem:[#allocation2 + $0x18] sm:$0xff] %v523
        %540 = vst [vmem:[#allocation2 + $0x20] sm:$0xff] %v524
        %541 = vst [vmem:[#allocation2 + $0x28] sm:$0xff] %v525
        %542 = vst [vmem:[#allocation2 + $0x30] sm:$0xff] %v526
        %543 = vst [vmem:[#allocation2 + $0x38] sm:$0xff] %v527
        %544 = vst [vmem:[#allocation2 + $0x40] sm:$0xff] %v528
        %545 = vst [vmem:[#allocation2 + $0x48] sm:$0xff] %v529
        %546 = vst [vmem:[#allocation2 + $0x50] sm:$0xff] %v530
        %547 = vst [vmem:[#allocation2 + $0x58] sm:$0xff] %v531
        %548 = vst [vmem:[#allocation2 + $0x60] sm:$0xff] %v532
        %549 = vst [vmem:[#allocation2 + $0x68] sm:$0xff] %v533
        %550 = vst [vmem:[#allocation2 + $0x70] sm:$0xff] %v534
        %551 = vst [vmem:[#allocation2 + $0x78] sm:$0xff] %v535
        %p552 = scmp.eq.s32.totalorder %s19, 1
        // Predicated region
        $region75: #{_lambda_.10} parent=65 // pred_check
          %p553 = pneg %p552
        $region76: #{_lambda_.10} parent=65 // pred_check_branch
          %555 = sbr.rel (%p553) target = $region78
        $region77: #{_lambda_.10} parent=65 // pred_region
          %v556 = vld [vmem:[#allocation2] sm:$0xff]
          %v557 = vld [vmem:[#allocation2 + $0x8] sm:$0xff]
          %v558 = vld [vmem:[#allocation2 + $0x10] sm:$0xff]
          %v559 = vld [vmem:[#allocation2 + $0x18] sm:$0xff]
          %v560 = vld [vmem:[#allocation2 + $0x20] sm:$0xff]
          %v561 = vld [vmem:[#allocation2 + $0x28] sm:$0xff]
          %v562 = vld [vmem:[#allocation2 + $0x30] sm:$0xff]
          %v563 = vld [vmem:[#allocation2 + $0x38] sm:$0xff]
          %v564 = vld [vmem:[#allocation2 + $0x40] sm:$0xff]
          %v565 = vld [vmem:[#allocation2 + $0x48] sm:$0xff]
          %v566 = vld [vmem:[#allocation2 + $0x50] sm:$0xff]
          %v567 = vld [vmem:[#allocation2 + $0x58] sm:$0xff]
          %v568 = vld [vmem:[#allocation2 + $0x60] sm:$0xff]
          %v569 = vld [vmem:[#allocation2 + $0x68] sm:$0xff]
          %v570 = vld [vmem:[#allocation2 + $0x70] sm:$0xff]
          %v571 = vld [vmem:[#allocation2 + $0x78] sm:$0xff]
          %v572 = vld [vmem:[%s2] sm:$0x1]
          %v574 = vlaneseq
          %v575 = vshrl.u32 %v574, 7
          %v576 = vsub.s32 0, %v575
          %v577 = vrot.slane %v572, %v576
          %v579 = vadd.f32 %v556, %v577
          %v580 = vadd.f32 %v557, %v577
          %v581 = vadd.f32 %v558, %v577
          %v582 = vadd.f32 %v559, %v577
          %v583 = vadd.f32 %v560, %v577
          %v584 = vadd.f32 %v561, %v577
          %v585 = vadd.f32 %v562, %v577
          %v586 = vadd.f32 %v563, %v577
          %v587 = vadd.f32 %v564, %v577
          %v588 = vadd.f32 %v565, %v577
          %v589 = vadd.f32 %v566, %v577
          %v590 = vadd.f32 %v567, %v577
          %v591 = vadd.f32 %v568, %v577
          %v592 = vadd.f32 %v569, %v577
          %v593 = vadd.f32 %v570, %v577
          %v594 = vadd.f32 %v571, %v577
          %v595 = vmax.f32 %v579, 0.0
          %v596 = vmax.f32 %v580, 0.0
          %v597 = vmax.f32 %v581, 0.0
          %v598 = vmax.f32 %v582, 0.0
          %v599 = vmax.f32 %v583, 0.0
          %v600 = vmax.f32 %v584, 0.0
          %v601 = vmax.f32 %v585, 0.0
          %v602 = vmax.f32 %v586, 0.0
          %v603 = vmax.f32 %v587, 0.0
          %v604 = vmax.f32 %v588, 0.0
          %v605 = vmax.f32 %v589, 0.0
          %v606 = vmax.f32 %v590, 0.0
          %v607 = vmax.f32 %v591, 0.0
          %v608 = vmax.f32 %v592, 0.0
          %v609 = vmax.f32 %v593, 0.0
          %v610 = vmax.f32 %v594, 0.0
          %611 = vst [vmem:[%s305] sm:$0xff] %v595
          %612 = vst [vmem:[%s305 + $0x8] sm:$0xff] %v596
          %613 = vst [vmem:[%s305 + $0x10] sm:$0xff] %v597
          %614 = vst [vmem:[%s305 + $0x18] sm:$0xff] %v598
          %615 = vst [vmem:[%s305 + $0x20] sm:$0xff] %v599
          %616 = vst [vmem:[%s305 + $0x28] sm:$0xff] %v600
          %617 = vst [vmem:[%s305 + $0x30] sm:$0xff] %v601
          %618 = vst [vmem:[%s305 + $0x38] sm:$0xff] %v602
          %619 = vst [vmem:[%s305 + $0x40] sm:$0xff] %v603
          %620 = vst [vmem:[%s305 + $0x48] sm:$0xff] %v604
          %621 = vst [vmem:[%s305 + $0x50] sm:$0xff] %v605
          %622 = vst [vmem:[%s305 + $0x58] sm:$0xff] %v606
          %623 = vst [vmem:[%s305 + $0x60] sm:$0xff] %v607
          %624 = vst [vmem:[%s305 + $0x68] sm:$0xff] %v608
          %625 = vst [vmem:[%s305 + $0x70] sm:$0xff] %v609
          %626 = vst [vmem:[%s305 + $0x78] sm:$0xff] %v610
        $region78: #{_lambda_.10} parent=65 // pred_fallthru
          _
        %s627 = smul.u32 16, %s18
        %p628 = scmp.lt.s32.totalorder %s627, 31
        %s629 = scalar_select %p628, %s627, 31
        %s630 = smul.addr %s629, 8
        %s631 = scalar_lea.vmem %s3, %s630
        // Predicated region
        $region79: #{_lambda_.10} parent=65 // pred_check
          %p632 = pneg %p119
        $region80: #{_lambda_.10} parent=65 // pred_check_branch
          %634 = sbr.rel (%p632) target = $region82
        $region81: #{_lambda_.10} parent=65 // pred_region
          %s635 = smul.u32 16, %s18
        $region82: #{_lambda_.10} parent=65 // pred_fallthru
          _
      $region66: #{_lambda_.10} parent=5 // pred_fallthru
        _
      %p636 = scmp.le.s32.totalorder 2, %s9
      // Predicated region
      $region83: #{_lambda_.10} parent=5 // pred_check
        %p637 = pneg %p636
      $region84: #{_lambda_.10} parent=5 // pred_check_branch
        %639 = sbr.rel (%p637) target = $region86
      $region85: #{_lambda_.10} parent=5 // pred_region
        %s640 = ssub.s32 %s9, 2
        // Predicated region
        $region87: #{_lambda_.10} parent=85 // pred_check
          %p641 = pneg %p125
        $region88: #{_lambda_.10} parent=85 // pred_check_branch
          %643 = sbr.rel (%p641) target = $region90
        $region89: #{_lambda_.10} parent=85 // pred_region
          %s644 = smul.u32 16, %s20
          %p645 = scmp.lt.s32.totalorder %s644, 31
          %s646 = scalar_select %p645, %s644, 31
          %s647 = smul.addr %s646, 8
          %s648 = scalar_lea.vmem %s3, %s647
        $region90: #{_lambda_.10} parent=85 // pred_fallthru
          _
      $region86: #{_lambda_.10} parent=5 // pred_fallthru
        _
    $region6: #{_lambda_.10} parent=1 // loop_footer
      %s13 = sadd.s32 1, %s9
    $region7: #{_lambda_.10} parent=1 // loop_footer_branch
      %8 = sbr.rel target = $region3
    $region8: #{_lambda_.10} parent=1 // loop_exit
      _

// kernel: _lambda_.15
$region0: #{_lambda_.15}
  #allocation0 [shape = 'u32[]', space=smem, size = 0x4, offset = 0x4, fixed_abs, tag = 'smem constant byte address 0x4 - core index']
  #allocation1 [shape = 'u32[144,128]{1,0:T(1,128)}', space=vmem, size = 0x12000, scoped, tag = 'internal scratch']
  %s0 = inlined_call_operand.vmem [shape: f32[2,256,1], index: 0, kind: input, shape index: {}]
  %s1 = inlined_call_operand.vmem [shape: f32[256,128], index: 1, kind: input, shape index: {}]
  %s2 = inlined_call_operand.vmem [shape: f32[128,256], index: 2, kind: input, shape index: {}]
  %s3 = inlined_call_operand.vmem [shape: f32[1,256], index: 3, kind: input, shape index: {}]
  %s4 = inlined_call_operand.vmem [shape: f32[256,128], index: 4, kind: input, shape index: {}]
  %s5 = inlined_call_operand.vmem [shape: f32[1,128], index: 5, kind: input, shape index: {}]
  %s6 = inlined_call_operand.hbm [shape: f32[2,1,128], index: 6, kind: output, shape index: {}]
  %s7 = sld [smem:[#allocation0]]
  $region57: #{_lambda_.15} parent=0
    _
  %s9 = ssub.s32 1, %s7
  %s10 = scalar_select 0, %s9, %s7
  $region1: #{_lambda_.15} parent=0
    #allocation2 [shape = 'u8[1024]{0}', space=vmem, size = 0x400, scoped, tag = 'output window, operand 0']
    #allocation3 [shape = 's32[2]{0}', space=sflag, size = 0x8, scoped, tag = 'scoped memory for _lambda_.15']
    %11 = vsyncpa [#allocation3], 0
    %s12 = scalar_lea.sflag [#allocation3], 1
    %13 = vsyncpa %s12, 0
    loop: start=0, step=1, limit=4
    $region2: #{_lambda_.15} parent=1 // loop_pre_header
      _
    $region3: #{_lambda_.15} parent=1 // loop_header
      %s15 = sphi 0, %s19
      %p16 = scmp.ge.s32.totalorder %s15, 4
      %s25 = sphi 0, %s27
      %s28 = sphi 0, %s25
      %s29 = sphi 0, %s28
      %s45 = sphi 0, %s29
      %s49 = sphi 0, %s49
      %s51 = sphi 0, %s49
      %s52 = sphi 0, %s51
      %s66 = sphi 0, %s52
      %s70 = sphi 0, %s70
      %s72 = sphi 0, %s70
      %s73 = sphi 0, %s72
      %s87 = sphi 0, %s73
      %s91 = sphi 0, %s91
      %s93 = sphi 0, %s91
      %s94 = sphi 0, %s93
      %s108 = sphi 0, %s94
      %s112 = sphi 0, %s112
      %s114 = sphi 0, %s112
      %s115 = sphi 0, %s114
      %s129 = sphi 0, %s115
      %s133 = sphi 0, %s133
      %s135 = sphi 0, %s133
      %s136 = sphi 0, %s135
      %s150 = sphi 0, %s136
      %s156 = sphi 0, %s158
      %s159 = sphi 0, %s156
      %s160 = sphi 0, %s159
      %s176 = sphi 0, %s160
    $region4: #{_lambda_.15} parent=1 // loop_header_branch
      %18 = sbr.rel (%p16) target = $region8
    $region5: #{_lambda_.15} parent=1 // loop_body
      %s20 = ssub.s32 %s15, 1
      %s21 = ssub.s32 %s15, 2
      %s22 = sadd.s32 %s15, 1
      %s23 = ssub.s32 %s15, %s22
      %p24 = scmp.eq.s32.totalorder %s23, 0
      %s26 = sadd.s32 %s25, 1
      %s27 = scalar_select %p24, %s25, %s26
      %p30 = pneg %p24
      %p31 = scmp.eq.s32.totalorder %s15, 1
      %p32 = por %p30, %p31
      %p33 = scmp.ne.s32.totalorder %s25, %s28
      %p34 = scmp.eq.s32.totalorder %s15, 0
      %p35 = por %p33, %p34
      %p36 = scmp.ne.s32.totalorder %s25, %s28
      %p37 = scmp.eq.s32.totalorder %s20, 1
      %p38 = por %p36, %p37
      %p39 = scmp.ne.s32.totalorder %s28, %s29
      %p40 = scmp.eq.s32.totalorder %s20, 0
      %p41 = por %p39, %p40
      %p42 = scmp.ne.s32.totalorder %s28, %s29
      %p43 = scmp.eq.s32.totalorder %s21, 1
      %p44 = por %p42, %p43
      %p46 = scmp.ne.s32.totalorder %s29, %s45
      %p47 = scmp.eq.s32.totalorder %s21, 0
      %p48 = por %p46, %p47
      %s50 = sadd.s32 %s49, 1
      %p53 = scmp.eq.s32.totalorder %s15, 1
      %p54 = scmp.ne.s32.totalorder %s49, %s51
      %p55 = scmp.eq.s32.totalorder %s15, 0
      %p56 = por %p54, %p55
      %p57 = scmp.ne.s32.totalorder %s49, %s51
      %p58 = scmp.eq.s32.totalorder %s20, 1
      %p59 = por %p57, %p58
      %p60 = scmp.ne.s32.totalorder %s51, %s52
      %p61 = scmp.eq.s32.totalorder %s20, 0
      %p62 = por %p60, %p61
      %p63 = scmp.ne.s32.totalorder %s51, %s52
      %p64 = scmp.eq.s32.totalorder %s21, 1
      %p65 = por %p63, %p64
      %p67 = scmp.ne.s32.totalorder %s52, %s66
      %p68 = scmp.eq.s32.totalorder %s21, 0
      %p69 = por %p67, %p68
      %s71 = sadd.s32 %s70, 1
      %p74 = scmp.eq.s32.totalorder %s15, 1
      %p75 = scmp.ne.s32.totalorder %s70, %s72
      %p76 = scmp.eq.s32.totalorder %s15, 0
      %p77 = por %p75, %p76
      %p78 = scmp.ne.s32.totalorder %s70, %s72
      %p79 = scmp.eq.s32.totalorder %s20, 1
      %p80 = por %p78, %p79
      %p81 = scmp.ne.s32.totalorder %s72, %s73
      %p82 = scmp.eq.s32.totalorder %s20, 0
      %p83 = por %p81, %p82
      %p84 = scmp.ne.s32.totalorder %s72, %s73
      %p85 = scmp.eq.s32.totalorder %s21, 1
      %p86 = por %p84, %p85
      %p88 = scmp.ne.s32.totalorder %s73, %s87
      %p89 = scmp.eq.s32.totalorder %s21, 0
      %p90 = por %p88, %p89
      %s92 = sadd.s32 %s91, 1
      %p95 = scmp.eq.s32.totalorder %s15, 1
      %p96 = scmp.ne.s32.totalorder %s91, %s93
      %p97 = scmp.eq.s32.totalorder %s15, 0
      %p98 = por %p96, %p97
      %p99 = scmp.ne.s32.totalorder %s91, %s93
      %p100 = scmp.eq.s32.totalorder %s20, 1
      %p101 = por %p99, %p100
      %p102 = scmp.ne.s32.totalorder %s93, %s94
      %p103 = scmp.eq.s32.totalorder %s20, 0
      %p104 = por %p102, %p103
      %p105 = scmp.ne.s32.totalorder %s93, %s94
      %p106 = scmp.eq.s32.totalorder %s21, 1
      %p107 = por %p105, %p106
      %p109 = scmp.ne.s32.totalorder %s94, %s108
      %p110 = scmp.eq.s32.totalorder %s21, 0
      %p111 = por %p109, %p110
      %s113 = sadd.s32 %s112, 1
      %p116 = scmp.eq.s32.totalorder %s15, 1
      %p117 = scmp.ne.s32.totalorder %s112, %s114
      %p118 = scmp.eq.s32.totalorder %s15, 0
      %p119 = por %p117, %p118
      %p120 = scmp.ne.s32.totalorder %s112, %s114
      %p121 = scmp.eq.s32.totalorder %s20, 1
      %p122 = por %p120, %p121
      %p123 = scmp.ne.s32.totalorder %s114, %s115
      %p124 = scmp.eq.s32.totalorder %s20, 0
      %p125 = por %p123, %p124
      %p126 = scmp.ne.s32.totalorder %s114, %s115
      %p127 = scmp.eq.s32.totalorder %s21, 1
      %p128 = por %p126, %p127
      %p130 = scmp.ne.s32.totalorder %s115, %s129
      %p131 = scmp.eq.s32.totalorder %s21, 0
      %p132 = por %p130, %p131
      %s134 = sadd.s32 %s133, 1
      %p137 = scmp.eq.s32.totalorder %s15, 1
      %p138 = scmp.ne.s32.totalorder %s133, %s135
      %p139 = scmp.eq.s32.totalorder %s15, 0
      %p140 = por %p138, %p139
      %p141 = scmp.ne.s32.totalorder %s133, %s135
      %p142 = scmp.eq.s32.totalorder %s20, 1
      %p143 = por %p141, %p142
      %p144 = scmp.ne.s32.totalorder %s135, %s136
      %p145 = scmp.eq.s32.totalorder %s20, 0
      %p146 = por %p144, %p145
      %p147 = scmp.ne.s32.totalorder %s135, %s136
      %p148 = scmp.eq.s32.totalorder %s21, 1
      %p149 = por %p147, %p148
      %p151 = scmp.ne.s32.totalorder %s136, %s150
      %p152 = scmp.eq.s32.totalorder %s21, 0
      %p153 = por %p151, %p152
      %s154 = ssub.s32 %s15, %s22
      %p155 = scmp.eq.s32.totalorder %s154, 0
      %s157 = sadd.s32 %s156, 1
      %s158 = scalar_select %p155, %s156, %s157
      %p161 = pneg %p155
      %p162 = scmp.eq.s32.totalorder %s15, 1
      %p163 = por %p161, %p162
      %p164 = scmp.ne.s32.totalorder %s156, %s159
      %p165 = scmp.eq.s32.totalorder %s15, 0
      %p166 = por %p164, %p165
      %p167 = scmp.ne.s32.totalorder %s156, %s159
      %p168 = scmp.eq.s32.totalorder %s20, 1
      %p169 = por %p167, %p168
      %p170 = scmp.ne.s32.totalorder %s159, %s160
      %p171 = scmp.eq.s32.totalorder %s20, 0
      %p172 = por %p170, %p171
      %p173 = scmp.ne.s32.totalorder %s159, %s160
      %p174 = scmp.eq.s32.totalorder %s21, 1
      %p175 = por %p173, %p174
      %p177 = scmp.ne.s32.totalorder %s160, %s176
      %p178 = scmp.eq.s32.totalorder %s21, 0
      %p179 = por %p177, %p178
      %p180 = scmp.le.s32.totalorder 1, %s15
      %p181 = scmp.lt.s32.totalorder %s15, 3
      %p182 = pnand %p180, %p181
      %p183 = pneg %p182
      // Predicated region
      $region9: #{_lambda_.15} parent=5 // pred_check
        _
      $region10: #{_lambda_.15} parent=5 // pred_check_branch
        %185 = sbr.rel (%p182) target = $region12
      $region11: #{_lambda_.15} parent=5 // pred_region
        %s186 = ssub.s32 %s15, 1
        // Predicated region
        $region13: #{_lambda_.15} parent=11 // pred_check
          %p187 = pneg %p62
        $region14: #{_lambda_.15} parent=11 // pred_check_branch
          %189 = sbr.rel (%p187) target = $region16
        $region15: #{_lambda_.15} parent=11 // pred_region
          _
        $region16: #{_lambda_.15} parent=11 // pred_fallthru
          _
        // Predicated region
        $region17: #{_lambda_.15} parent=11 // pred_check
          %p190 = pneg %p83
        $region18: #{_lambda_.15} parent=11 // pred_check_branch
          %192 = sbr.rel (%p190) target = $region20
        $region19: #{_lambda_.15} parent=11 // pred_region
          _
        $region20: #{_lambda_.15} parent=11 // pred_fallthru
          _
        // Predicated region
        $region21: #{_lambda_.15} parent=11 // pred_check
          %p193 = pneg %p104
        $region22: #{_lambda_.15} parent=11 // pred_check_branch
          %195 = sbr.rel (%p193) target = $region24
        $region23: #{_lambda_.15} parent=11 // pred_region
          _
        $region24: #{_lambda_.15} parent=11 // pred_fallthru
          _
        // Predicated region
        $region25: #{_lambda_.15} parent=11 // pred_check
          %p196 = pneg %p125
        $region26: #{_lambda_.15} parent=11 // pred_check_branch
          %198 = sbr.rel (%p196) target = $region28
        $region27: #{_lambda_.15} parent=11 // pred_region
          _
        $region28: #{_lambda_.15} parent=11 // pred_fallthru
          _
        // Predicated region
        $region29: #{_lambda_.15} parent=11 // pred_check
          %p199 = pneg %p146
        $region30: #{_lambda_.15} parent=11 // pred_check_branch
          %201 = sbr.rel (%p199) target = $region32
        $region31: #{_lambda_.15} parent=11 // pred_region
          _
        $region32: #{_lambda_.15} parent=11 // pred_fallthru
          _
      $region12: #{_lambda_.15} parent=5 // pred_fallthru
        _
      %p202 = scmp.lt.s32.totalorder %s15, 2
      // Predicated region
      $region33: #{_lambda_.15} parent=5 // pred_check
        %p203 = pneg %p202
      $region34: #{_lambda_.15} parent=5 // pred_check_branch
        %205 = sbr.rel (%p203) target = $region36
      $region35: #{_lambda_.15} parent=5 // pred_region
        // Predicated region
        $region37: #{_lambda_.15} parent=35 // pred_check
          %p206 = pneg %p35
        $region38: #{_lambda_.15} parent=35 // pred_check_branch
          %208 = sbr.rel (%p206) target = $region40
        $region39: #{_lambda_.15} parent=35 // pred_region
          %p209 = scmp.lt.s32.totalorder %s15, 1
          %s210 = scalar_select %p209, %s15, 1
          %s211 = smul.addr %s210, 32
          %s212 = smul.addr %s211, 8
          %s213 = scalar_lea.vmem %s0, %s212
        $region40: #{_lambda_.15} parent=35 // pred_fallthru
          _
      $region36: #{_lambda_.15} parent=5 // pred_fallthru
        _
      %p214 = scmp.le.s32.totalorder 1, %s15
      %p215 = scmp.lt.s32.totalorder %s15, 3
      %p216 = pnand %p214, %p215
      %p217 = pneg %p216
      // Predicated region
      $region41: #{_lambda_.15} parent=5 // pred_check
        _
      $region42: #{_lambda_.15} parent=5 // pred_check_branch
        %219 = sbr.rel (%p216) target = $region44
      $region43: #{_lambda_.15} parent=5 // pred_region
        %s220 = ssub.s32 %s15, 1
        %p221 = scmp.lt.s32.totalorder %s20, 1
        %s222 = scalar_select %p221, %s20, 1
        %s223 = smul.addr %s222, 32
        %s224 = smul.addr %s223, 8
        %s225 = scalar_lea.vmem %s0, %s224
        %p226 = pneg %p41
        %p227 = pneg %p38
        %p228 = pneg %p62
        %p229 = pneg %p59
        %p230 = pneg %p83
        %p231 = pneg %p80
        %p232 = pneg %p104
        %p233 = pneg %p101
        %p234 = pneg %p125
        %p235 = pneg %p122
        %p236 = pneg %p146
        %p237 = pneg %p143
        %p238 = pneg %p172
        %p239 = pneg %p169
        %s240 = sand.u32 %s159, 1
        %s241 = scalar_lea.sflag [#allocation3], %s240
        %s242 = sand.u32 %s159, 1
        %s243 = scalar_lea.vmem [#allocation2], %s242
        %p244 = scmp.lt.s32.totalorder %s20, 1
        %s245 = scalar_select %p244, %s20, 1
        %s246 = smul.addr %s245, 32
        %s247 = smul.addr %s246, 8
        %s248 = scalar_lea.vmem %s0, %s247
        %v249 = vld [vmem:[%s248] sm:$0xff]
        %v250 = vld [vmem:[%s248 + $0x8] sm:$0xff]
        %v251 = vld [vmem:[%s248 + $0x10] sm:$0xff]
        %v252 = vld [vmem:[%s248 + $0x18] sm:$0xff]
        %v253 = vld [vmem:[%s248 + $0x20] sm:$0xff]
        %v254 = vld [vmem:[%s248 + $0x28] sm:$0xff]
        %v255 = vld [vmem:[%s248 + $0x30] sm:$0xff]
        %v256 = vld [vmem:[%s248 + $0x38] sm:$0xff]
        %v257 = vld [vmem:[%s248 + $0x40] sm:$0xff]
        %v258 = vld [vmem:[%s248 + $0x48] sm:$0xff]
        %v259 = vld [vmem:[%s248 + $0x50] sm:$0xff]
        %v260 = vld [vmem:[%s248 + $0x58] sm:$0xff]
        %v261 = vld [vmem:[%s248 + $0x60] sm:$0xff]
        %v262 = vld [vmem:[%s248 + $0x68] sm:$0xff]
        %v263 = vld [vmem:[%s248 + $0x70] sm:$0xff]
        %v264 = vld [vmem:[%s248 + $0x78] sm:$0xff]
        %v265 = vld [vmem:[%s248 + $0x80] sm:$0xff]
        %v266 = vld [vmem:[%s248 + $0x88] sm:$0xff]
        %v267 = vld [vmem:[%s248 + $0x90] sm:$0xff]
        %v268 = vld [vmem:[%s248 + $0x98] sm:$0xff]
        %v269 = vld [vmem:[%s248 + $0xa0] sm:$0xff]
        %v270 = vld [vmem:[%s248 + $0xa8] sm:$0xff]
        %v271 = vld [vmem:[%s248 + $0xb0] sm:$0xff]
        %v272 = vld [vmem:[%s248 + $0xb8] sm:$0xff]
        %v273 = vld [vmem:[%s248 + $0xc0] sm:$0xff]
        %v274 = vld [vmem:[%s248 + $0xc8] sm:$0xff]
        %v275 = vld [vmem:[%s248 + $0xd0] sm:$0xff]
        %v276 = vld [vmem:[%s248 + $0xd8] sm:$0xff]
        %v277 = vld [vmem:[%s248 + $0xe0] sm:$0xff]
        %v278 = vld [vmem:[%s248 + $0xe8] sm:$0xff]
        %v279 = vld [vmem:[%s248 + $0xf0] sm:$0xff]
        %v280 = vld [vmem:[%s248 + $0xf8] sm:$0xff]
        %v281 = vld [vmem:[%s1] sm:$0xff]
        %v282 = vld [vmem:[%s1 + $0x8] sm:$0xff]
        %v283 = vld [vmem:[%s1 + $0x10] sm:$0xff]
        %v284 = vld [vmem:[%s1 + $0x18] sm:$0xff]
        %v285 = vld [vmem:[%s1 + $0x20] sm:$0xff]
        %v286 = vld [vmem:[%s1 + $0x28] sm:$0xff]
        %v287 = vld [vmem:[%s1 + $0x30] sm:$0xff]
        %v288 = vld [vmem:[%s1 + $0x38] sm:$0xff]
        %v289 = vld [vmem:[%s1 + $0x40] sm:$0xff]
        %v290 = vld [vmem:[%s1 + $0x48] sm:$0xff]
        %v291 = vld [vmem:[%s1 + $0x50] sm:$0xff]
        %v292 = vld [vmem:[%s1 + $0x58] sm:$0xff]
        %v293 = vld [vmem:[%s1 + $0x60] sm:$0xff]
        %v294 = vld [vmem:[%s1 + $0x68] sm:$0xff]
        %v295 = vld [vmem:[%s1 + $0x70] sm:$0xff]
        %v296 = vld [vmem:[%s1 + $0x78] sm:$0xff]
        %v297 = vld [vmem:[%s1 + $0x80] sm:$0xff]
        %v298 = vld [vmem:[%s1 + $0x88] sm:$0xff]
        %v299 = vld [vmem:[%s1 + $0x90] sm:$0xff]
        %v300 = vld [vmem:[%s1 + $0x98] sm:$0xff]
        %v301 = vld [vmem:[%s1 + $0xa0] sm:$0xff]
        %v302 = vld [vmem:[%s1 + $0xa8] sm:$0xff]
        %v303 = vld [vmem:[%s1 + $0xb0] sm:$0xff]
        %v304 = vld [vmem:[%s1 + $0xb8] sm:$0xff]
        %v305 = vld [vmem:[%s1 + $0xc0] sm:$0xff]
        %v306 = vld [vmem:[%s1 + $0xc8] sm:$0xff]
        %v307 = vld [vmem:[%s1 + $0xd0] sm:$0xff]
        %v308 = vld [vmem:[%s1 + $0xd8] sm:$0xff]
        %v309 = vld [vmem:[%s1 + $0xe0] sm:$0xff]
        %v310 = vld [vmem:[%s1 + $0xe8] sm:$0xff]
        %v311 = vld [vmem:[%s1 + $0xf0] sm:$0xff]
        %v312 = vld [vmem:[%s1 + $0xf8] sm:$0xff]
        %314 = vset.pattern.permute.xlu0 0
        %315 = vperm.xlu0 %314, %v249
        %v316 = vpop.permute.xlu0 %315
        %319 = vset.pattern.permute.xlu0 0
        %320 = vperm.xlu0 %319, %v250
        %v321 = vpop.permute.xlu0 %320
        %324 = vset.pattern.permute.xlu0 0
        %325 = vperm.xlu0 %324, %v251
        %v326 = vpop.permute.xlu0 %325
        %329 = vset.pattern.permute.xlu0 0
        %330 = vperm.xlu0 %329, %v252
        %v331 = vpop.permute.xlu0 %330
        %334 = vset.pattern.permute.xlu0 0
        %335 = vperm.xlu0 %334, %v253
        %v336 = vpop.permute.xlu0 %335
        %339 = vset.pattern.permute.xlu0 0
        %340 = vperm.xlu0 %339, %v254
        %v341 = vpop.permute.xlu0 %340
        %344 = vset.pattern.permute.xlu0 0
        %345 = vperm.xlu0 %344, %v255
        %v346 = vpop.permute.xlu0 %345
        %349 = vset.pattern.permute.xlu0 0
        %350 = vperm.xlu0 %349, %v256
        %v351 = vpop.permute.xlu0 %350
        %354 = vset.pattern.permute.xlu0 0
        %355 = vperm.xlu0 %354, %v257
        %v356 = vpop.permute.xlu0 %355
        %359 = vset.pattern.permute.xlu0 0
        %360 = vperm.xlu0 %359, %v258
        %v361 = vpop.permute.xlu0 %360
        %364 = vset.pattern.permute.xlu0 0
        %365 = vperm.xlu0 %364, %v259
        %v366 = vpop.permute.xlu0 %365
        %369 = vset.pattern.permute.xlu0 0
        %370 = vperm.xlu0 %369, %v260
        %v371 = vpop.permute.xlu0 %370
        %374 = vset.pattern.permute.xlu0 0
        %375 = vperm.xlu0 %374, %v261
        %v376 = vpop.permute.xlu0 %375
        %379 = vset.pattern.permute.xlu0 0
        %380 = vperm.xlu0 %379, %v262
        %v381 = vpop.permute.xlu0 %380
        %384 = vset.pattern.permute.xlu0 0
        %385 = vperm.xlu0 %384, %v263
        %v386 = vpop.permute.xlu0 %385
        %389 = vset.pattern.permute.xlu0 0
        %390 = vperm.xlu0 %389, %v264
        %v391 = vpop.permute.xlu0 %390
        %394 = vset.pattern.permute.xlu0 0
        %395 = vperm.xlu0 %394, %v265
        %v396 = vpop.permute.xlu0 %395
        %399 = vset.pattern.permute.xlu0 0
        %400 = vperm.xlu0 %399, %v266
        %v401 = vpop.permute.xlu0 %400
        %404 = vset.pattern.permute.xlu0 0
        %405 = vperm.xlu0 %404, %v267
        %v406 = vpop.permute.xlu0 %405
        %409 = vset.pattern.permute.xlu0 0
        %410 = vperm.xlu0 %409, %v268
        %v411 = vpop.permute.xlu0 %410
        %414 = vset.pattern.permute.xlu0 0
        %415 = vperm.xlu0 %414, %v269
        %v416 = vpop.permute.xlu0 %415
        %419 = vset.pattern.permute.xlu0 0
        %420 = vperm.xlu0 %419, %v270
        %v421 = vpop.permute.xlu0 %420
        %424 = vset.pattern.permute.xlu0 0
        %425 = vperm.xlu0 %424, %v271
        %v426 = vpop.permute.xlu0 %425
        %429 = vset.pattern.permute.xlu0 0
        %430 = vperm.xlu0 %429, %v272
        %v431 = vpop.permute.xlu0 %430
        %434 = vset.pattern.permute.xlu0 0
        %435 = vperm.xlu0 %434, %v273
        %v436 = vpop.permute.xlu0 %435
        %439 = vset.pattern.permute.xlu0 0
        %440 = vperm.xlu0 %439, %v274
        %v441 = vpop.permute.xlu0 %440
        %444 = vset.pattern.permute.xlu0 0
        %445 = vperm.xlu0 %444, %v275
        %v446 = vpop.permute.xlu0 %445
        %449 = vset.pattern.permute.xlu0 0
        %450 = vperm.xlu0 %449, %v276
        %v451 = vpop.permute.xlu0 %450
        %454 = vset.pattern.permute.xlu0 0
        %455 = vperm.xlu0 %454, %v277
        %v456 = vpop.permute.xlu0 %455
        %459 = vset.pattern.permute.xlu0 0
        %460 = vperm.xlu0 %459, %v278
        %v461 = vpop.permute.xlu0 %460
        %464 = vset.pattern.permute.xlu0 0
        %465 = vperm.xlu0 %464, %v279
        %v466 = vpop.permute.xlu0 %465
        %469 = vset.pattern.permute.xlu0 0
        %470 = vperm.xlu0 %469, %v280
        %v471 = vpop.permute.xlu0 %470
        %v473 = vadd.f32 %v281, %v316
        %v474 = vadd.f32 %v282, %v321
        %v475 = vadd.f32 %v283, %v326
        %v476 = vadd.f32 %v284, %v331
        %v477 = vadd.f32 %v285, %v336
        %v478 = vadd.f32 %v286, %v341
        %v479 = vadd.f32 %v287, %v346
        %v480 = vadd.f32 %v288, %v351
        %v481 = vadd.f32 %v289, %v356
        %v482 = vadd.f32 %v290, %v361
        %v483 = vadd.f32 %v291, %v366
        %v484 = vadd.f32 %v292, %v371
        %v485 = vadd.f32 %v293, %v376
        %v486 = vadd.f32 %v294, %v381
        %v487 = vadd.f32 %v295, %v386
        %v488 = vadd.f32 %v296, %v391
        %v489 = vadd.f32 %v297, %v396
        %v490 = vadd.f32 %v298, %v401
        %v491 = vadd.f32 %v299, %v406
        %v492 = vadd.f32 %v300, %v411
        %v493 = vadd.f32 %v301, %v416
        %v494 = vadd.f32 %v302, %v421
        %v495 = vadd.f32 %v303, %v426
        %v496 = vadd.f32 %v304, %v431
        %v497 = vadd.f32 %v305, %v436
        %v498 = vadd.f32 %v306, %v441
        %v499 = vadd.f32 %v307, %v446
        %v500 = vadd.f32 %v308, %v451
        %v501 = vadd.f32 %v309, %v456
        %v502 = vadd.f32 %v310, %v461
        %v503 = vadd.f32 %v311, %v466
        %v504 = vadd.f32 %v312, %v471
        %v505 = vmax.f32 %v473, %v477
        %v506 = vmax.f32 %v474, %v478
        %v507 = vmax.f32 %v475, %v479
        %v508 = vmax.f32 %v476, %v480
        %v509 = vmax.f32 %v505, %v481
        %v510 = vmax.f32 %v506, %v482
        %v511 = vmax.f32 %v507, %v483
        %v512 = vmax.f32 %v508, %v484
        %v513 = vmax.f32 %v509, %v485
        %v514 = vmax.f32 %v510, %v486
        %v515 = vmax.f32 %v511, %v487
        %v516 = vmax.f32 %v512, %v488
        %v517 = vmax.f32 %v513, %v489
        %v518 = vmax.f32 %v514, %v490
        %v519 = vmax.f32 %v515, %v491
        %v520 = vmax.f32 %v516, %v492
        %v521 = vmax.f32 %v517, %v493
        %v522 = vmax.f32 %v518, %v494
        %v523 = vmax.f32 %v519, %v495
        %v524 = vmax.f32 %v520, %v496
        %v525 = vmax.f32 %v521, %v497
        %v526 = vmax.f32 %v522, %v498
        %v527 = vmax.f32 %v523, %v499
        %v528 = vmax.f32 %v524, %v500
        %v529 = vmax.f32 %v525, %v501
        %v530 = vmax.f32 %v526, %v502
        %v531 = vmax.f32 %v527, %v503
        %v532 = vmax.f32 %v528, %v504
        %v533 = vmax.f32 %v529, %v530
        %v534 = vmax.f32 %v531, %v532
        %v535 = vmax.f32 %v533, %v534
        %v536 = vrot.slane %v535, 4
        %v537 = vmax.f32 %v535, %v536
        %v538 = vrot.slane %v537, 2
        %v539 = vmax.f32 %v537, %v538
        %v540 = vrot.slane %v539, 1
        %v541 = vmax.f32 %v539, %v540
        %v542 = vld [vmem:[%s2] sm:$0xff]
        %v543 = vld [vmem:[%s2 + $0x8] sm:$0xff]
        %v544 = vld [vmem:[%s2 + $0x10] sm:$0xff]
        %v545 = vld [vmem:[%s2 + $0x18] sm:$0xff]
        %v546 = vld [vmem:[%s2 + $0x20] sm:$0xff]
        %v547 = vld [vmem:[%s2 + $0x28] sm:$0xff]
        %v548 = vld [vmem:[%s2 + $0x30] sm:$0xff]
        %v549 = vld [vmem:[%s2 + $0x38] sm:$0xff]
        %v550 = vld [vmem:[%s2 + $0x40] sm:$0xff]
        %v551 = vld [vmem:[%s2 + $0x48] sm:$0xff]
        %v552 = vld [vmem:[%s2 + $0x50] sm:$0xff]
        %v553 = vld [vmem:[%s2 + $0x58] sm:$0xff]
        %v554 = vld [vmem:[%s2 + $0x60] sm:$0xff]
        %v555 = vld [vmem:[%s2 + $0x68] sm:$0xff]
        %v556 = vld [vmem:[%s2 + $0x70] sm:$0xff]
        %v557 = vld [vmem:[%s2 + $0x78] sm:$0xff]
        %v558 = vld [vmem:[%s2 + $0x80] sm:$0xff]
        %v559 = vld [vmem:[%s2 + $0x88] sm:$0xff]
        %v560 = vld [vmem:[%s2 + $0x90] sm:$0xff]
        %v561 = vld [vmem:[%s2 + $0x98] sm:$0xff]
        %v562 = vld [vmem:[%s2 + $0xa0] sm:$0xff]
        %v563 = vld [vmem:[%s2 + $0xa8] sm:$0xff]
        %v564 = vld [vmem:[%s2 + $0xb0] sm:$0xff]
        %v565 = vld [vmem:[%s2 + $0xb8] sm:$0xff]
        %v566 = vld [vmem:[%s2 + $0xc0] sm:$0xff]
        %v567 = vld [vmem:[%s2 + $0xc8] sm:$0xff]
        %v568 = vld [vmem:[%s2 + $0xd0] sm:$0xff]
        %v569 = vld [vmem:[%s2 + $0xd8] sm:$0xff]
        %v570 = vld [vmem:[%s2 + $0xe0] sm:$0xff]
        %v571 = vld [vmem:[%s2 + $0xe8] sm:$0xff]
        %v572 = vld [vmem:[%s2 + $0xf0] sm:$0xff]
        %v573 = vld [vmem:[%s2 + $0xf8] sm:$0xff]
        %v574 = vld [vmem:[%s3] sm:$0x3]
        %v576 = vlaneseq
        %v577 = vshrl.u32 %v576, 7
        %v578 = vsub.s32 0, %v577
        %v579 = vrot.slane %v574, %v578
        %v580 = vlaneseq
        %v581 = vshrl.u32 %v580, 7
        %v582 = vsub.s32 1, %v581
        %v583 = vrot.slane %v574, %v582
        %586 = vmatprep.subr.mxu0 %v573
        %587 = vmatpush1.msra.mxu0 %v572
        %588 = vmatprep.subr.mxu0 %v571
        %589 = vmatpush1.msra.mxu0 %v570
        %590 = vmatprep.subr.mxu0 %v569
        %591 = vmatpush1.msra.mxu0 %v568
        %592 = vmatprep.subr.mxu0 %v567
        %593 = vmatpush1.msra.mxu0 %v566
        %594 = vmatprep.subr.mxu0 %v565
        %595 = vmatpush1.msra.mxu0 %v564
        %596 = vmatprep.subr.mxu0 %v563
        %597 = vmatpush1.msra.mxu0 %v562
        %598 = vmatprep.subr.mxu0 %v561
        %599 = vmatpush1.msra.mxu0 %v560
        %600 = vmatprep.subr.mxu0 %v559
        %601 = vmatpush1.msra.mxu0 %v558
        %602 = vmatprep.subr.mxu0 %v557
        %603 = vmatpush1.msra.mxu0 %v556
        %604 = vmatprep.subr.mxu0 %v555
        %605 = vmatpush1.msra.mxu0 %v554
        %606 = vmatprep.subr.mxu0 %v553
        %607 = vmatpush1.msra.mxu0 %v552
        %608 = vmatprep.subr.mxu0 %v551
        %609 = vmatpush1.msra.mxu0 %v550
        %610 = vmatprep.subr.mxu0 %v549
        %611 = vmatpush1.msra.mxu0 %v548
        %612 = vmatprep.subr.mxu0 %v547
        %613 = vmatpush1.msra.mxu0 %v546
        %614 = vmatprep.subr.mxu0 %v545
        %615 = vmatpush1.msra.mxu0 %v544
        %616 = vmatprep.subr.mxu0 %v543
        %617 = vmatpush1.msra.mxu0 %v542
        %618 = vmatprep.subr.mxu0 0.0
        %619 = vmatpush2.msra.mxu0 0.0
        %620 = vmatprep.subr.mxu0 0.0
        %621 = vmatpush2.msra.mxu0 0.0
        %622 = vmatprep.subr.mxu0 0.0
        %623 = vmatpush2.msra.mxu0 0.0
        %624 = vmatprep.subr.mxu0 0.0
        %625 = vmatpush2.msra.mxu0 0.0
        %626 = vmatprep.subr.mxu0 0.0
        %627 = vmatpush2.msra.mxu0 0.0
        %628 = vmatprep.subr.mxu0 0.0
        %629 = vmatpush2.msra.mxu0 0.0
        %630 = vmatprep.subr.mxu0 0.0
        %631 = vmatpush2.msra.mxu0 0.0
        %632 = vmatprep.subr.mxu0 0.0
        %633 = vmatpush2.msra.mxu0 0.0
        %634 = vmatprep.subr.mxu0 0.0
        %635 = vmatpush2.msra.mxu0 0.0
        %636 = vmatprep.subr.mxu0 0.0
        %637 = vmatpush2.msra.mxu0 0.0
        %638 = vmatprep.subr.mxu0 0.0
        %639 = vmatpush2.msra.mxu0 0.0
        %640 = vmatprep.subr.mxu0 0.0
        %641 = vmatpush2.msra.mxu0 0.0
        %642 = vmatprep.subr.mxu0 0.0
        %643 = vmatpush2.msra.mxu0 0.0
        %644 = vmatprep.subr.mxu0 0.0
        %645 = vmatpush2.msra.mxu0 0.0
        %646 = vmatprep.subr.mxu0 0.0
        %647 = vmatpush2.msra.mxu0 0.0
        %648 = vmatprep.subr.mxu0 0.0
        %649 = vmatpush2.msra.mxu0 0.0
        %650 = vmatprep.mubr.f32.mxu0 0.0
        %651 = vmatmul.mubr.f32.gmra.mxu0 %v541
        %v652 = vpop.f32.mrf.mxu0
        %v653 = vadd.f32 %v579, %v652
        %v654 = vpop.f32.mrf.mxu0
        %v655 = vadd.f32 %v583, %v654
        %656 = vdwg.mxu0
        %v657 = vmax.f32 %v653, 0.0
        %v658 = vmax.f32 %v655, 0.0
        %v659 = vld [vmem:[%s4] sm:$0xff]
        %v660 = vld [vmem:[%s4 + $0x8] sm:$0xff]
        %v661 = vld [vmem:[%s4 + $0x10] sm:$0xff]
        %v662 = vld [vmem:[%s4 + $0x18] sm:$0xff]
        %v663 = vld [vmem:[%s4 + $0x20] sm:$0xff]
        %v664 = vld [vmem:[%s4 + $0x28] sm:$0xff]
        %v665 = vld [vmem:[%s4 + $0x30] sm:$0xff]
        %v666 = vld [vmem:[%s4 + $0x38] sm:$0xff]
        %v667 = vld [vmem:[%s4 + $0x40] sm:$0xff]
        %v668 = vld [vmem:[%s4 + $0x48] sm:$0xff]
        %v669 = vld [vmem:[%s4 + $0x50] sm:$0xff]
        %v670 = vld [vmem:[%s4 + $0x58] sm:$0xff]
        %v671 = vld [vmem:[%s4 + $0x60] sm:$0xff]
        %v672 = vld [vmem:[%s4 + $0x68] sm:$0xff]
        %v673 = vld [vmem:[%s4 + $0x70] sm:$0xff]
        %v674 = vld [vmem:[%s4 + $0x78] sm:$0xff]
        %v675 = vld [vmem:[%s4 + $0x80] sm:$0xff]
        %v676 = vld [vmem:[%s4 + $0x88] sm:$0xff]
        %v677 = vld [vmem:[%s4 + $0x90] sm:$0xff]
        %v678 = vld [vmem:[%s4 + $0x98] sm:$0xff]
        %v679 = vld [vmem:[%s4 + $0xa0] sm:$0xff]
        %v680 = vld [vmem:[%s4 + $0xa8] sm:$0xff]
        %v681 = vld [vmem:[%s4 + $0xb0] sm:$0xff]
        %v682 = vld [vmem:[%s4 + $0xb8] sm:$0xff]
        %v683 = vld [vmem:[%s4 + $0xc0] sm:$0xff]
        %v684 = vld [vmem:[%s4 + $0xc8] sm:$0xff]
        %v685 = vld [vmem:[%s4 + $0xd0] sm:$0xff]
        %v686 = vld [vmem:[%s4 + $0xd8] sm:$0xff]
        %v687 = vld [vmem:[%s4 + $0xe0] sm:$0xff]
        %v688 = vld [vmem:[%s4 + $0xe8] sm:$0xff]
        %v689 = vld [vmem:[%s4 + $0xf0] sm:$0xff]
        %v690 = vld [vmem:[%s4 + $0xf8] sm:$0xff]
        %v691 = vld [vmem:[%s5] sm:$0x1]
        %692 = vmatprep.subr.mxu0 0.0
        %693 = vmatpush1.msra.mxu0 %v674
        %694 = vmatprep.subr.mxu0 0.0
        %695 = vmatpush1.msra.mxu0 %v673
        %696 = vmatprep.subr.mxu0 0.0
        %697 = vmatpush1.msra.mxu0 %v672
        %698 = vmatprep.subr.mxu0 0.0
        %699 = vmatpush1.msra.mxu0 %v671
        %700 = vmatprep.subr.mxu0 0.0
        %701 = vmatpush1.msra.mxu0 %v670
        %702 = vmatprep.subr.mxu0 0.0
        %703 = vmatpush1.msra.mxu0 %v669
        %704 = vmatprep.subr.mxu0 0.0
        %705 = vmatpush1.msra.mxu0 %v668
        %706 = vmatprep.subr.mxu0 0.0
        %707 = vmatpush1.msra.mxu0 %v667
        %708 = vmatprep.subr.mxu0 0.0
        %709 = vmatpush1.msra.mxu0 %v666
        %710 = vmatprep.subr.mxu0 0.0
        %711 = vmatpush1.msra.mxu0 %v665
        %712 = vmatprep.subr.mxu0 0.0
        %713 = vmatpush1.msra.mxu0 %v664
        %714 = vmatprep.subr.mxu0 0.0
        %715 = vmatpush1.msra.mxu0 %v663
        %716 = vmatprep.subr.mxu0 0.0
        %717 = vmatpush1.msra.mxu0 %v662
        %718 = vmatprep.subr.mxu0 0.0
        %719 = vmatpush1.msra.mxu0 %v661
        %720 = vmatprep.subr.mxu0 0.0
        %721 = vmatpush1.msra.mxu0 %v660
        %722 = vmatprep.subr.mxu0 0.0
        %723 = vmatpush1.msra.mxu0 %v659
        %724 = vmatprep.subr.mxu0 0.0
        %725 = vmatpush2.msra.mxu0 %v690
        %726 = vmatprep.subr.mxu0 0.0
        %727 = vmatpush2.msra.mxu0 %v689
        %728 = vmatprep.subr.mxu0 0.0
        %729 = vmatpush2.msra.mxu0 %v688
        %730 = vmatprep.subr.mxu0 0.0
        %731 = vmatpush2.msra.mxu0 %v687
        %732 = vmatprep.subr.mxu0 0.0
        %733 = vmatpush2.msra.mxu0 %v686
        %734 = vmatprep.subr.mxu0 0.0
        %735 = vmatpush2.msra.mxu0 %v685
        %736 = vmatprep.subr.mxu0 0.0
        %737 = vmatpush2.msra.mxu0 %v684
        %738 = vmatprep.subr.mxu0 0.0
        %739 = vmatpush2.msra.mxu0 %v683
        %740 = vmatprep.subr.mxu0 0.0
        %741 = vmatpush2.msra.mxu0 %v682
        %742 = vmatprep.subr.mxu0 0.0
        %743 = vmatpush2.msra.mxu0 %v681
        %744 = vmatprep.subr.mxu0 0.0
        %745 = vmatpush2.msra.mxu0 %v680
        %746 = vmatprep.subr.mxu0 0.0
        %747 = vmatpush2.msra.mxu0 %v679
        %748 = vmatprep.subr.mxu0 0.0
        %749 = vmatpush2.msra.mxu0 %v678
        %750 = vmatprep.subr.mxu0 0.0
        %751 = vmatpush2.msra.mxu0 %v677
        %752 = vmatprep.subr.mxu0 0.0
        %753 = vmatpush2.msra.mxu0 %v676
        %754 = vmatprep.subr.mxu0 0.0
        %755 = vmatpush2.msra.mxu0 %v675
        %756 = vmatprep.mubr.f32.mxu0 %v658
        %757 = vmatmul.mubr.f32.gmra.mxu0 %v657
        %v758 = vpop.f32.mrf.mxu0
        %v759 = vadd.f32 %v691, %v758
        %v760 = vpop.f32.mrf.mxu0
        %761 = vdwg.mxu0
        %762 = vst [vmem:[%s243] sm:$0x1] %v759
        %s763 = sand.u32 %s159, 1
        %s764 = scalar_lea.sflag [#allocation3], %s763
        %s765 = sand.u32 %s159, 1
        %s766 = scalar_lea.vmem [#allocation2], %s765
        // Predicated region
        $region45: #{_lambda_.15} parent=43 // pred_check
          %p767 = pneg %p169
        $region46: #{_lambda_.15} parent=43 // pred_check_branch
          %769 = sbr.rel (%p767) target = $region48
        $region47: #{_lambda_.15} parent=43 // pred_region
          %s771 = ssub.s32 16, 16
          %772 = vsyncadd %s764, %s771
          %s773 = smul.addr %s20, 16
          %s774 = scalar_lea.hbm %s6, %s773
          %s776 = sshll.u32 %s766, 4
          %s777 = int_to_ptr.vmem [resolvable:$true] %s776
          %779 = dma.vmem_to_hbm [thread:$0]  %s777, 16, %s774, %s764
        $region48: #{_lambda_.15} parent=43 // pred_fallthru
          _
      $region44: #{_lambda_.15} parent=5 // pred_fallthru
        _
      %p780 = scmp.le.s32.totalorder 2, %s15
      // Predicated region
      $region49: #{_lambda_.15} parent=5 // pred_check
        %p781 = pneg %p780
      $region50: #{_lambda_.15} parent=5 // pred_check_branch
        %783 = sbr.rel (%p781) target = $region52
      $region51: #{_lambda_.15} parent=5 // pred_region
        %s784 = ssub.s32 %s15, 2
        // Predicated region
        $region53: #{_lambda_.15} parent=51 // pred_check
          %p785 = pneg %p175
        $region54: #{_lambda_.15} parent=51 // pred_check_branch
          %787 = sbr.rel (%p785) target = $region56
        $region55: #{_lambda_.15} parent=51 // pred_region
          %s788 = sand.u32 %s160, 1
          %s789 = scalar_lea.sflag [#allocation3], %s788
          %s790 = sand.u32 %s160, 1
          %s791 = scalar_lea.vmem [#allocation2], %s790
          %792 = dma.done %s789, 16
        $region56: #{_lambda_.15} parent=51 // pred_fallthru
          _
      $region52: #{_lambda_.15} parent=5 // pred_fallthru
        _
    $region6: #{_lambda_.15} parent=1 // loop_footer
      %s19 = sadd.s32 1, %s15
    $region7: #{_lambda_.15} parent=1 // loop_footer_branch
      %14 = sbr.rel target = $region3
    $region8: #{_lambda_.15} parent=1 // loop_exit
      _
    %793 = vsyncpa [#allocation3], 1
    %s794 = scalar_lea.sflag [#allocation3], 1
    %795 = vsyncpa %s794, 1

</llo_original>
